<compile_context>
chip_gen: v6e
topology: v6e:2x2x1
jax: 0.10.0
libtpu: 0.0.40
codegen_flags: <defaults>
</compile_context>

<pallas_src>
from functools import partial

import numpy as np
import jax
import jax.numpy as jnp
from jax import lax
from jax.experimental import pallas as pl
from jax.experimental.pallas import tpu as pltpu


# ----------------------------------------------------------------------------
# In-kernel helpers
# ----------------------------------------------------------------------------
def _pool_2d(v, s, mode):
    """Pool a (H, W, C) value with kernel == stride == s (max or avg).

    Row pooling is a leading-axis reduce (free layout-wise); column pooling
    splits the sublane axis and reduces the size-s second-minor axis.
    """
    H, W, C = v.shape
    Ho, Wo = H // s, W // s
    if (Ho * s, Wo * s) != (H, W):          # kernel==stride, no padding: drop remainder
        v = v[:Ho * s, :Wo * s, :]
    red = jnp.max if mode == "max" else jnp.sum
    v = red(v.reshape(Ho, s, Wo * s, C), axis=1)    # pool rows
    v = red(v.reshape(Ho, Wo, s, C), axis=2)        # pool cols
    if mode == "avg":
        v = v * (1.0 / float(s * s))
    return v


def _store_reflect_padded(o_ref, y, pa, pb):
    """Store y (Ho, Wo, C) into o_ref block (1, Ho+pa+pb, Wo+pa+pb, C) with a
    fused ReflectionPad2d((pa, pb, pa, pb)) border (pa/pb of the *next* conv)."""
    Ho, Wo, _ = y.shape
    if pa == 0 and pb == 0:
        o_ref[0] = y
        return
    # center
    o_ref[0, pa:pa + Ho, pa:pa + Wo, :] = y
    # top / bottom reflected rows (edge excluded, like torch ReflectionPad2d)
    for r in range(pa):
        o_ref[0, r:r + 1, pa:pa + Wo, :] = y[pa - r:pa - r + 1]
    for r in range(pb):
        o_ref[0, pa + Ho + r:pa + Ho + r + 1, pa:pa + Wo, :] = y[Ho - 2 - r:Ho - 1 - r]
    # left / right reflected columns over the full padded height; corners fall
    # out of the separability of the reflection (copy already-written columns).
    for c in range(pa):
        o_ref[0, :, c:c + 1, :] = o_ref[0, :, 2 * pa - c:2 * pa - c + 1, :]
    for c in range(pb):
        o_ref[0, :, pa + Wo + c:pa + Wo + c + 1, :] = \
            o_ref[0, :, pa + Wo - 2 - c:pa + Wo - 2 - c + 1, :]


# ----------------------------------------------------------------------------
# Fused conv + (folded) BN kernel
# ----------------------------------------------------------------------------
def _conv_bn_pool_kernel(x_ref, w_ref, b_ref, *rest,
                         KH, KW, Cin, Cout, Hc, Wc,
                         relu_in, relu_out, pool_in, pool_out,
                         has_res, res_relu, pad_out):
    """Fused (optional ReLU-in) -> (optional avg-pool) -> KxK conv (im2col, one
    matmul, BN scale pre-folded into w) -> +bias -> (optional ReLU) ->
    (optional max-pool) -> (optional residual add) -> reflect-padded store.

    x_ref : (1, Hin, Win, Cin)  - for KxK convs the input is already padded.
    w_ref : (KH*KW*Cin, Cout)   - BN-scale-folded, im2col-flattened weights.
    b_ref : (1, Cout)           - folded bias (conv bias + BN shift).
    rest  : [res_ref (1,Ho,Wo,Cout)], o_ref (1,Ho+pa+pb,Wo+pa+pb,Cout),
            [patch_ref (Hc*Wc, KH*KW*Cin) VMEM scratch]  (only when KH*KW > 1)
    """
    idx = 0
    res_ref = None
    if has_res:
        res_ref = rest[0]
        idx = 1
    o_ref = rest[idx]
    patch_ref = rest[idx + 1] if len(rest) > idx + 1 else None

    x = x_ref[0].astype(jnp.float32)                 # (Hin, Win, Cin)
    if relu_in:
        x = jnp.maximum(x, 0.0)
    if pool_in:                                      # shortcut path: AvgPool2d(s, s)
        x = _pool_2d(x, pool_in, "avg")              # -> (Hc, Wc, Cin)

    # --- im2col: one (Hc*Wc, KH*KW*Cin) x (KH*KW*Cin, Cout) matmul -----------
    if patch_ref is None:                            # 1x1 conv
        patch = x.reshape(Hc * Wc, Cin)
    else:
        for kh in range(KH):
            for kw in range(KW):
                t = kh * KW + kw
                patch_ref[:, t * Cin:(t + 1) * Cin] = \
                    x[kh:kh + Hc, kw:kw + Wc, :].reshape(Hc * Wc, Cin)
        patch = patch_ref[...]

    y = jnp.dot(patch, w_ref[...], preferred_element_type=jnp.float32)
    y = y + b_ref[...]                               # folded BN/conv bias only
    if relu_out:
        y = jnp.maximum(y, 0.0)
    y = y.reshape(Hc, Wc, Cout)

    if pool_out:                                     # main path: MaxPool2d(s, s)
        y = _pool_2d(y, pool_out, "max")             # -> (Ho, Wo, Cout)

    if has_res:                                      # fused residual add
        r = res_ref[0].astype(jnp.float32)
        if res_relu:
            r = jnp.maximum(r, 0.0)
        y = y + r

    _store_reflect_padded(o_ref, y.astype(o_ref.dtype), pad_out[0], pad_out[1])


# ----------------------------------------------------------------------------
# Wrapper around pallas_call
# ----------------------------------------------------------------------------
def conv_bn(x, w, scale, bias, *, relu_in=False, relu_out=False,
            pool_in=0, pool_out=0, residual=None, res_relu=False,
            pad_out=(0, 0)):
    """x: NHWC (already reflect-padded when w is KxK, K>1). Returns NHWC f32,
    optionally reflect-padded by pad_out for the next conv."""
    N, Hin, Win, Cin = x.shape
    KH, KW, _, Cout = w.shape
    if pool_in:                                      # avg-pool before a 1x1 conv
        assert KH == 1 and KW == 1
        Hc, Wc = Hin // pool_in, Win // pool_in
    else:
        Hc, Wc = Hin - KH + 1, Win - KW + 1
    Ho, Wo = (Hc // pool_out, Wc // pool_out) if pool_out else (Hc, Wc)
    pa, pb = pad_out
    Hp, Wp = Ho + pa + pb, Wo + pa + pb

    # Fold the BN scale into the conv weights (epilogue becomes add-bias only).
    w_flat = (w * scale.reshape(1, 1, 1, -1)).astype(jnp.float32)
    w_flat = w_flat.reshape(KH * KW * Cin, Cout)
    b2 = bias.reshape(1, Cout).astype(jnp.float32)

    kern = partial(_conv_bn_pool_kernel, KH=KH, KW=KW, Cin=Cin, Cout=Cout,
                   Hc=Hc, Wc=Wc, relu_in=relu_in, relu_out=relu_out,
                   pool_in=pool_in, pool_out=pool_out,
                   has_res=residual is not None, res_relu=res_relu,
                   pad_out=(pa, pb))

    in_specs = [
        pl.BlockSpec((1, Hin, Win, Cin), lambda n: (n, 0, 0, 0)),
        pl.BlockSpec((KH * KW * Cin, Cout), lambda n: (0, 0)),
        pl.BlockSpec((1, Cout), lambda n: (0, 0)),
    ]
    args = [x, w_flat, b2]
    if residual is not None:
        in_specs.append(pl.BlockSpec((1, Ho, Wo, Cout), lambda n: (n, 0, 0, 0)))
        args.append(residual)

    scratch = []
    if KH * KW > 1:
        scratch.append(pltpu.VMEM((Hc * Wc, KH * KW * Cin), jnp.float32))

    return pl.pallas_call(
        kern,
        out_shape=jax.ShapeDtypeStruct((N, Hp, Wp, Cout), jnp.float32),
        grid=(N,),
        in_specs=in_specs,
        out_specs=pl.BlockSpec((1, Hp, Wp, Cout), lambda n: (n, 0, 0, 0)),
        scratch_shapes=scratch,
        compiler_params=pltpu.CompilerParams(dimension_semantics=("parallel",)),
    )(*args)


def reflect_pad(x, kernel_size):
    """Conv2dSame's ReflectionPad2d((ka, kb, ka, kb)) in NHWC (wrapper-side;
    only needed when the raw block input feeds a KxK conv directly)."""
    ka = kernel_size // 2
    kb = ka - 1 if kernel_size % 2 == 0 else ka
    if ka == 0 and kb == 0:
        return x
    return jnp.pad(x, ((0, 0), (ka, kb), (ka, kb), (0, 0)), mode="reflect")


# ----------------------------------------------------------------------------
# Resblock forward (inference semantics; dropout == identity)
# ----------------------------------------------------------------------------
def resblock_forward(x, p, *, stride, block_id, preactivated, kernel_size):
    """x: NHWC float32."""
    Cin = x.shape[-1]
    filters = p["w3"].shape[-1]
    ka = kernel_size // 2
    kb = ka - 1 if kernel_size % 2 == 0 else ka
    block_gt1 = block_id > 1                    # pre = relu(x) iff block_id > 1
    identity_relu = block_gt1 and preactivated  # identity tensor = relu(x)?
    same_shape = (stride == 1) and (filters == Cin)

    if stride > 1:
        # pre = relu(bn1(conv1(pre))); output stored reflect-padded for conv2.
        pre_p = conv_bn(x, p["w1"], p["s1"], p["b1"],
                        relu_in=block_gt1, relu_out=True, pad_out=(ka, kb))
        relu_in2 = False
    else:
        # AvgPool/MaxPool are identity; conv2 reads x directly (one wrapper pad).
        pre_p = reflect_pad(x, kernel_size)
        relu_in2 = block_gt1                    # fuse pre = relu(x) into conv2

    # conv2 + bn2 + relu (+ fused 2x2 maxpool when stride>1); padded for conv3.
    net_p = conv_bn(pre_p, p["w2"], p["s2"], p["b2"],
                    relu_in=relu_in2, relu_out=True,
                    pool_out=stride if stride > 1 else 0, pad_out=(ka, kb))
    # dropout: identity in eval mode

    # conv3 + bn3 + relu; identity shortcut fused here when shapes match.
    net = conv_bn(net_p, p["w3"], p["s3"], p["b3"], relu_out=True,
                  residual=x if same_shape else None, res_relu=identity_relu)
    if same_shape:
        return net

    # shortcut: avgpool(stride) -> conv4(1x1) + bn4, fused with the final add.
    return conv_bn(x, p["w4"], p["s4"], p["b4"],
                   relu_in=identity_relu, relu_out=False,
                   pool_in=stride if stride > 1 else 0,
                   residual=net)


# ----------------------------------------------------------------------------
# Deterministic parameter init (synthetic; BN folded into scale/bias)
# ----------------------------------------------------------------------------
def init_params(key, in_channels, filters, kernel_size, eps=1e-5):
    def fold(key, kh, kw, cin, cout):
        k = jax.random.split(key, 7)
        w = 0.2 * jax.random.normal(k[0], (kh, kw, cin, cout), jnp.float32)
        b_conv = 0.1 * jax.random.normal(k[1], (cout,), jnp.float32)
        gamma = 1.0 + 0.1 * jax.random.normal(k[2], (cout,), jnp.float32)
        beta = 0.05 * jax.random.normal(k[3], (cout,), jnp.float32)
        mean = 0.1 * jax.random.normal(k[4], (cout,), jnp.float32)
        var = 0.5 + 0.3 * jnp.abs(jax.random.normal(k[5], (cout,), jnp.float32))
        scale = gamma / jnp.sqrt(var + eps)
        bias = (b_conv - mean) * scale + beta
        return w, scale, bias

    k1, k2, k3, k4 = jax.random.split(key, 4)
    w1, s1, b1 = fold(k1, 1, 1, in_channels, in_channels)
    w2, s2, b2 = fold(k2, kernel_size, kernel_size, in_channels, in_channels)
    w3, s3, b3 = fold(k3, kernel_size, kernel_size, in_channels, filters)
    w4, s4, b4 = fold(k4, 1, 1, in_channels, filters)
    return dict(w1=w1, s1=s1, b1=b1, w2=w2, s2=s2, b2=b2,
                w3=w3, s3=s3, b3=b3, w4=w4, s4=s4, b4=b4)


# ----------------------------------------------------------------------------
# Pure-JAX reference (for validation)
# ----------------------------------------------------------------------------
def _convbn_ref(x_pad, w, s, b):
    y = lax.conv_general_dilated(x_pad, w, (1, 1), "VALID",
                                 dimension_numbers=("NHWC", "HWIO", "NHWC"),
                                 precision=lax.Precision.HIGHEST)
    return y * s.reshape(1, 1, 1, -1) + b.reshape(1, 1, 1, -1)


def resblock_ref(x, p, *, stride, block_id, preactivated, kernel_size):
    pre = jnp.maximum(x, 0.0) if block_id > 1 else x
    xid = pre if preactivated else x
    if stride > 1:
        pre = jnp.maximum(_convbn_ref(reflect_pad(pre, 1),
                                      p["w1"], p["s1"], p["b1"]), 0.0)
    net = jnp.maximum(_convbn_ref(reflect_pad(pre, kernel_size),
                                  p["w2"], p["s2"], p["b2"]), 0.0)
    if stride > 1:
        net = lax.reduce_window(net, -jnp.inf, lax.max,
                                (1, stride, stride, 1), (1, stride, stride, 1),
                                "VALID")
    net = jnp.maximum(_convbn_ref(reflect_pad(net, kernel_size),
                                  p["w3"], p["s3"], p["b3"]), 0.0)
    if net.shape != xid.shape:
        sc = lax.reduce_window(xid, 0.0, lax.add,
                               (1, stride, stride, 1), (1, stride, stride, 1),
                               "VALID") / float(stride * stride)
        sc = _convbn_ref(sc, p["w4"], p["s4"], p["b4"])
    else:
        sc = xid
    return net + sc


# ----------------------------------------------------------------------------
if __name__ == "__main__":
    N, Cin, H, W = 2, 4, 16, 16
    filters, ksize, stride, block_id, preact = 8, 3, 2, 2, True

    key = jax.random.PRNGKey(0)
    kx, kp = jax.random.split(key)
    x_nchw = jax.random.normal(kx, (N, Cin, H, W), jnp.float32)   # PyTorch layout
    x = jnp.transpose(x_nchw, (0, 2, 3, 1))                       # NCHW -> NHWC

    params = init_params(kp, Cin, filters, ksize)

    fwd = jax.jit(lambda xx, pp: resblock_forward(
        xx, pp, stride=stride, block_id=block_id,
        preactivated=preact, kernel_size=ksize))
    out = jax.block_until_ready(fwd(x, params))

    assert out.shape == (N, H // stride, W // stride, filters), out.shape

    ref = resblock_ref(x, params, stride=stride, block_id=block_id,
                       preactivated=preact, kernel_size=ksize)
    np.testing.assert_allclose(np.asarray(out), np.asarray(ref),
                               rtol=1e-2, atol=1e-2)

    print("KERNEL_OK")
</pallas_src>

<mosaic_0001>
module attributes {stable_mosaic.version = 11 : i64} {
  func.func @_conv_bn_pool_kernel(%arg0: i32, %arg1: memref<1x16x16x4xf32, #tpu.memory_space<vmem>>, %arg2: memref<4x4xf32, #tpu.memory_space<vmem>>, %arg3: memref<1x4xf32, #tpu.memory_space<vmem>>, %arg4: memref<1x18x18x4xf32, #tpu.memory_space<vmem>>) attributes {dimension_semantics = [#tpu.dimension_semantics<parallel>], iteration_bounds = array<i64: 2>, scalar_prefetch = 0 : i64, scratch_operands = 0 : i64, tpu.core_type = #tpu.core_type<tc>, window_params = [{transform_indices = @transform_0, window_bounds = array<i64: 1, 16, 16, 4>}, {pipeline_mode = #tpu.pipeline_mode<synchronous>, transform_indices = @transform_1, window_bounds = array<i64: 4, 4>}, {pipeline_mode = #tpu.pipeline_mode<synchronous>, transform_indices = @transform_2, window_bounds = array<i64: 1, 4>}, {transform_indices = @transform_3, window_bounds = array<i64: 1, 18, 18, 4>}]} {
    %c0 = arith.constant 0 : index
    %c0_0 = arith.constant 0 : index
    %c0_1 = arith.constant 0 : index
    %c0_2 = arith.constant 0 : index
    %0 = vector.load %arg1[%c0, %c0_0, %c0_1, %c0_2] : memref<1x16x16x4xf32, #tpu.memory_space<vmem>>, vector<1x16x16x4xf32>
    %1 = vector.shape_cast %0 : vector<1x16x16x4xf32> to vector<16x16x4xf32>
    %cst = arith.constant 0.000000e+00 : f32
    %2 = vector.broadcast %cst : f32 to vector<16x16x4xf32>
    %3 = arith.maximumf %1, %2 : vector<16x16x4xf32>
    %4 = vector.shape_cast %3 : vector<16x16x4xf32> to vector<256x4xf32>
    %c0_3 = arith.constant 0 : index
    %c0_4 = arith.constant 0 : index
    %5 = vector.load %arg2[%c0_3, %c0_4] : memref<4x4xf32, #tpu.memory_space<vmem>>, vector<4x4xf32>
    %cst_5 = arith.constant dense<0.000000e+00> : vector<256x4xf32>
    %6 = tpu.matmul %4, %5, %cst_5 {dimension_numbers = #tpu.dot_dimension_numbers<[1], [0], [0], [1], [0, 0, 1, 1], [], []>} : vector<256x4xf32>, vector<4x4xf32>, vector<256x4xf32> -> vector<256x4xf32>
    %c0_6 = arith.constant 0 : index
    %c0_7 = arith.constant 0 : index
    %7 = vector.load %arg3[%c0_6, %c0_7] : memref<1x4xf32, #tpu.memory_space<vmem>>, vector<1x4xf32>
    %8 = vector.broadcast %7 : vector<1x4xf32> to vector<256x4xf32>
    %9 = arith.addf %6, %8 : vector<256x4xf32>
    %cst_8 = arith.constant 0.000000e+00 : f32
    %10 = vector.broadcast %cst_8 : f32 to vector<256x4xf32>
    %11 = arith.maximumf %9, %10 : vector<256x4xf32>
    %12 = vector.shape_cast %11 : vector<256x4xf32> to vector<16x16x4xf32>
    %c0_9 = arith.constant 0 : index
    %c1 = arith.constant 1 : index
    %c1_10 = arith.constant 1 : index
    %c0_11 = arith.constant 0 : index
    %13 = vector.load %arg4[%c0_9, %c1, %c1_10, %c0_11] : memref<1x18x18x4xf32, #tpu.memory_space<vmem>>, vector<1x16x16x4xf32>
    %14 = vector.shape_cast %13 : vector<1x16x16x4xf32> to vector<16x16x4xf32>
    %15 = vector.shape_cast %12 : vector<16x16x4xf32> to vector<1x16x16x4xf32>
    tpu.vector_store %arg4[%c0_9, %c1, %c1_10, %c0_11], %15 {strides = array<i32>} : memref<1x18x18x4xf32, #tpu.memory_space<vmem>>, vector<1x16x16x4xf32>,
    %16 = vector.extract_strided_slice %12 {offsets = [1, 0, 0], sizes = [1, 16, 4], strides = [1, 1, 1]} : vector<16x16x4xf32> to vector<1x16x4xf32>
    %c0_12 = arith.constant 0 : index
    %c0_13 = arith.constant 0 : index
    %c1_14 = arith.constant 1 : index
    %c0_15 = arith.constant 0 : index
    %17 = vector.load %arg4[%c0_12, %c0_13, %c1_14, %c0_15] : memref<1x18x18x4xf32, #tpu.memory_space<vmem>>, vector<1x1x16x4xf32>
    %18 = vector.shape_cast %17 : vector<1x1x16x4xf32> to vector<1x16x4xf32>
    %19 = vector.shape_cast %16 : vector<1x16x4xf32> to vector<1x1x16x4xf32>
    tpu.vector_store %arg4[%c0_12, %c0_13, %c1_14, %c0_15], %19 {strides = array<i32>} : memref<1x18x18x4xf32, #tpu.memory_space<vmem>>, vector<1x1x16x4xf32>,
    %20 = vector.extract_strided_slice %12 {offsets = [14, 0, 0], sizes = [1, 16, 4], strides = [1, 1, 1]} : vector<16x16x4xf32> to vector<1x16x4xf32>
    %c0_16 = arith.constant 0 : index
    %c17 = arith.constant 17 : index
    %c1_17 = arith.constant 1 : index
    %c0_18 = arith.constant 0 : index
    %21 = vector.load %arg4[%c0_16, %c17, %c1_17, %c0_18] : memref<1x18x18x4xf32, #tpu.memory_space<vmem>>, vector<1x1x16x4xf32>
    %22 = vector.shape_cast %21 : vector<1x1x16x4xf32> to vector<1x16x4xf32>
    %23 = vector.shape_cast %20 : vector<1x16x4xf32> to vector<1x1x16x4xf32>
    tpu.vector_store %arg4[%c0_16, %c17, %c1_17, %c0_18], %23 {strides = array<i32>} : memref<1x18x18x4xf32, #tpu.memory_space<vmem>>, vector<1x1x16x4xf32>,
    %c0_19 = arith.constant 0 : index
    %c0_20 = arith.constant 0 : index
    %c2 = arith.constant 2 : index
    %c0_21 = arith.constant 0 : index
    %24 = vector.load %arg4[%c0_19, %c0_20, %c2, %c0_21] : memref<1x18x18x4xf32, #tpu.memory_space<vmem>>, vector<1x18x1x4xf32>
    %25 = vector.shape_cast %24 : vector<1x18x1x4xf32> to vector<18x1x4xf32>
    %c0_22 = arith.constant 0 : index
    %c0_23 = arith.constant 0 : index
    %c0_24 = arith.constant 0 : index
    %c0_25 = arith.constant 0 : index
    %26 = vector.load %arg4[%c0_22, %c0_23, %c0_24, %c0_25] : memref<1x18x18x4xf32, #tpu.memory_space<vmem>>, vector<1x18x1x4xf32>
    %27 = vector.shape_cast %26 : vector<1x18x1x4xf32> to vector<18x1x4xf32>
    %28 = vector.shape_cast %25 : vector<18x1x4xf32> to vector<1x18x1x4xf32>
    tpu.vector_store %arg4[%c0_22, %c0_23, %c0_24, %c0_25], %28 {strides = array<i32>} : memref<1x18x18x4xf32, #tpu.memory_space<vmem>>, vector<1x18x1x4xf32>,
    %c0_26 = arith.constant 0 : index
    %c0_27 = arith.constant 0 : index
    %c15 = arith.constant 15 : index
    %c0_28 = arith.constant 0 : index
    %29 = vector.load %arg4[%c0_26, %c0_27, %c15, %c0_28] : memref<1x18x18x4xf32, #tpu.memory_space<vmem>>, vector<1x18x1x4xf32>
    %30 = vector.shape_cast %29 : vector<1x18x1x4xf32> to vector<18x1x4xf32>
    %c0_29 = arith.constant 0 : index
    %c0_30 = arith.constant 0 : index
    %c17_31 = arith.constant 17 : index
    %c0_32 = arith.constant 0 : index
    %31 = vector.load %arg4[%c0_29, %c0_30, %c17_31, %c0_32] : memref<1x18x18x4xf32, #tpu.memory_space<vmem>>, vector<1x18x1x4xf32>
    %32 = vector.shape_cast %31 : vector<1x18x1x4xf32> to vector<18x1x4xf32>
    %33 = vector.shape_cast %30 : vector<18x1x4xf32> to vector<1x18x1x4xf32>
    tpu.vector_store %arg4[%c0_29, %c0_30, %c17_31, %c0_32], %33 {strides = array<i32>} : memref<1x18x18x4xf32, #tpu.memory_space<vmem>>, vector<1x18x1x4xf32>,
    return
  }
  func.func @transform_0(%arg0: i32) -> (i32, i32, i32, i32) {
    %c0_i32 = arith.constant 0 : i32
    %c0_i32_0 = arith.constant 0 : i32
    %c0_i32_1 = arith.constant 0 : i32
    %c0_i32_2 = arith.constant 0 : i32
    return %arg0, %c0_i32, %c0_i32_0, %c0_i32_1 : i32, i32, i32, i32
  }
  func.func @transform_1(%arg0: i32) -> (i32, i32) {
    %c0_i32 = arith.constant 0 : i32
    %c0_i32_0 = arith.constant 0 : i32
    %c0_i32_1 = arith.constant 0 : i32
    return %c0_i32, %c0_i32_0 : i32, i32
  }
  func.func @transform_2(%arg0: i32) -> (i32, i32) {
    %c0_i32 = arith.constant 0 : i32
    %c0_i32_0 = arith.constant 0 : i32
    %c0_i32_1 = arith.constant 0 : i32
    return %c0_i32, %c0_i32_0 : i32, i32
  }
  func.func @transform_3(%arg0: i32) -> (i32, i32, i32, i32) {
    %c0_i32 = arith.constant 0 : i32
    %c0_i32_0 = arith.constant 0 : i32
    %c0_i32_1 = arith.constant 0 : i32
    %c0_i32_2 = arith.constant 0 : i32
    return %arg0, %c0_i32, %c0_i32_0, %c0_i32_1 : i32, i32, i32, i32
  }
}

module attributes {stable_mosaic.version = 11 : i64} {
  func.func @_conv_bn_pool_kernel(%arg0: i32, %arg1: memref<1x18x18x4xf32, #tpu.memory_space<vmem>>, %arg2: memref<36x4xf32, #tpu.memory_space<vmem>>, %arg3: memref<1x4xf32, #tpu.memory_space<vmem>>, %arg4: memref<1x10x10x4xf32, #tpu.memory_space<vmem>>, %arg5: memref<256x36xf32, #tpu.memory_space<vmem>>) attributes {dimension_semantics = [#tpu.dimension_semantics<parallel>], iteration_bounds = array<i64: 2>, scalar_prefetch = 0 : i64, scratch_operands = 1 : i64, tpu.core_type = #tpu.core_type<tc>, window_params = [{transform_indices = @transform_0, window_bounds = array<i64: 1, 18, 18, 4>}, {pipeline_mode = #tpu.pipeline_mode<synchronous>, transform_indices = @transform_1, window_bounds = array<i64: 36, 4>}, {pipeline_mode = #tpu.pipeline_mode<synchronous>, transform_indices = @transform_2, window_bounds = array<i64: 1, 4>}, {transform_indices = @transform_3, window_bounds = array<i64: 1, 10, 10, 4>}]} {
    %c0 = arith.constant 0 : index
    %c0_0 = arith.constant 0 : index
    %c0_1 = arith.constant 0 : index
    %c0_2 = arith.constant 0 : index
    %0 = vector.load %arg1[%c0, %c0_0, %c0_1, %c0_2] : memref<1x18x18x4xf32, #tpu.memory_space<vmem>>, vector<1x18x18x4xf32>
    %1 = vector.shape_cast %0 : vector<1x18x18x4xf32> to vector<18x18x4xf32>
    %2 = vector.extract_strided_slice %1 {offsets = [0, 0, 0], sizes = [16, 16, 4], strides = [1, 1, 1]} : vector<18x18x4xf32> to vector<16x16x4xf32>
    %3 = vector.shape_cast %2 : vector<16x16x4xf32> to vector<256x4xf32>
    %c0_3 = arith.constant 0 : index
    %c0_4 = arith.constant 0 : index
    %4 = vector.load %arg5[%c0_3, %c0_4] : memref<256x36xf32, #tpu.memory_space<vmem>>, vector<256x4xf32>
    tpu.vector_store %arg5[%c0_3, %c0_4], %3 {strides = array<i32>} : memref<256x36xf32, #tpu.memory_space<vmem>>, vector<256x4xf32>,
    %5 = vector.extract_strided_slice %1 {offsets = [0, 1, 0], sizes = [16, 16, 4], strides = [1, 1, 1]} : vector<18x18x4xf32> to vector<16x16x4xf32>
    %6 = vector.shape_cast %5 : vector<16x16x4xf32> to vector<256x4xf32>
    %c0_5 = arith.constant 0 : index
    %c4 = arith.constant 4 : index
    %7 = vector.load %arg5[%c0_5, %c4] : memref<256x36xf32, #tpu.memory_space<vmem>>, vector<256x4xf32>
    tpu.vector_store %arg5[%c0_5, %c4], %6 {strides = array<i32>} : memref<256x36xf32, #tpu.memory_space<vmem>>, vector<256x4xf32>,
    %8 = vector.extract_strided_slice %1 {offsets = [0, 2, 0], sizes = [16, 16, 4], strides = [1, 1, 1]} : vector<18x18x4xf32> to vector<16x16x4xf32>
    %9 = vector.shape_cast %8 : vector<16x16x4xf32> to vector<256x4xf32>
    %c0_6 = arith.constant 0 : index
    %c8 = arith.constant 8 : index
    %10 = vector.load %arg5[%c0_6, %c8] : memref<256x36xf32, #tpu.memory_space<vmem>>, vector<256x4xf32>
    tpu.vector_store %arg5[%c0_6, %c8], %9 {strides = array<i32>} : memref<256x36xf32, #tpu.memory_space<vmem>>, vector<256x4xf32>,
    %11 = vector.extract_strided_slice %1 {offsets = [1, 0, 0], sizes = [16, 16, 4], strides = [1, 1, 1]} : vector<18x18x4xf32> to vector<16x16x4xf32>
    %12 = vector.shape_cast %11 : vector<16x16x4xf32> to vector<256x4xf32>
    %c0_7 = arith.constant 0 : index
    %c12 = arith.constant 12 : index
    %13 = vector.load %arg5[%c0_7, %c12] : memref<256x36xf32, #tpu.memory_space<vmem>>, vector<256x4xf32>
    tpu.vector_store %arg5[%c0_7, %c12], %12 {strides = array<i32>} : memref<256x36xf32, #tpu.memory_space<vmem>>, vector<256x4xf32>,
    %14 = vector.extract_strided_slice %1 {offsets = [1, 1, 0], sizes = [16, 16, 4], strides = [1, 1, 1]} : vector<18x18x4xf32> to vector<16x16x4xf32>
    %15 = vector.shape_cast %14 : vector<16x16x4xf32> to vector<256x4xf32>
    %c0_8 = arith.constant 0 : index
    %c16 = arith.constant 16 : index
    %16 = vector.load %arg5[%c0_8, %c16] : memref<256x36xf32, #tpu.memory_space<vmem>>, vector<256x4xf32>
    tpu.vector_store %arg5[%c0_8, %c16], %15 {strides = array<i32>} : memref<256x36xf32, #tpu.memory_space<vmem>>, vector<256x4xf32>,
    %17 = vector.extract_strided_slice %1 {offsets = [1, 2, 0], sizes = [16, 16, 4], strides = [1, 1, 1]} : vector<18x18x4xf32> to vector<16x16x4xf32>
    %18 = vector.shape_cast %17 : vector<16x16x4xf32> to vector<256x4xf32>
    %c0_9 = arith.constant 0 : index
    %c20 = arith.constant 20 : index
    %19 = vector.load %arg5[%c0_9, %c20] : memref<256x36xf32, #tpu.memory_space<vmem>>, vector<256x4xf32>
    tpu.vector_store %arg5[%c0_9, %c20], %18 {strides = array<i32>} : memref<256x36xf32, #tpu.memory_space<vmem>>, vector<256x4xf32>,
    %20 = vector.extract_strided_slice %1 {offsets = [2, 0, 0], sizes = [16, 16, 4], strides = [1, 1, 1]} : vector<18x18x4xf32> to vector<16x16x4xf32>
    %21 = vector.shape_cast %20 : vector<16x16x4xf32> to vector<256x4xf32>
    %c0_10 = arith.constant 0 : index
    %c24 = arith.constant 24 : index
    %22 = vector.load %arg5[%c0_10, %c24] : memref<256x36xf32, #tpu.memory_space<vmem>>, vector<256x4xf32>
    tpu.vector_store %arg5[%c0_10, %c24], %21 {strides = array<i32>} : memref<256x36xf32, #tpu.memory_space<vmem>>, vector<256x4xf32>,
    %23 = vector.extract_strided_slice %1 {offsets = [2, 1, 0], sizes = [16, 16, 4], strides = [1, 1, 1]} : vector<18x18x4xf32> to vector<16x16x4xf32>
    %24 = vector.shape_cast %23 : vector<16x16x4xf32> to vector<256x4xf32>
    %c0_11 = arith.constant 0 : index
    %c28 = arith.constant 28 : index
    %25 = vector.load %arg5[%c0_11, %c28] : memref<256x36xf32, #tpu.memory_space<vmem>>, vector<256x4xf32>
    tpu.vector_store %arg5[%c0_11, %c28], %24 {strides = array<i32>} : memref<256x36xf32, #tpu.memory_space<vmem>>, vector<256x4xf32>,
    %26 = vector.extract_strided_slice %1 {offsets = [2, 2, 0], sizes = [16, 16, 4], strides = [1, 1, 1]} : vector<18x18x4xf32> to vector<16x16x4xf32>
    %27 = vector.shape_cast %26 : vector<16x16x4xf32> to vector<256x4xf32>
    %c0_12 = arith.constant 0 : index
    %c32 = arith.constant 32 : index
    %28 = vector.load %arg5[%c0_12, %c32] : memref<256x36xf32, #tpu.memory_space<vmem>>, vector<256x4xf32>
    tpu.vector_store %arg5[%c0_12, %c32], %27 {strides = array<i32>} : memref<256x36xf32, #tpu.memory_space<vmem>>, vector<256x4xf32>,
    %c0_13 = arith.constant 0 : index
    %c0_14 = arith.constant 0 : index
    %29 = vector.load %arg5[%c0_13, %c0_14] : memref<256x36xf32, #tpu.memory_space<vmem>>, vector<256x36xf32>
    %c0_15 = arith.constant 0 : index
    %c0_16 = arith.constant 0 : index
    %30 = vector.load %arg2[%c0_15, %c0_16] : memref<36x4xf32, #tpu.memory_space<vmem>>, vector<36x4xf32>
    %cst = arith.constant dense<0.000000e+00> : vector<256x4xf32>
    %31 = tpu.matmul %29, %30, %cst {dimension_numbers = #tpu.dot_dimension_numbers<[1], [0], [0], [1], [0, 0, 1, 1], [], []>} : vector<256x36xf32>, vector<36x4xf32>, vector<256x4xf32> -> vector<256x4xf32>
    %c0_17 = arith.constant 0 : index
    %c0_18 = arith.constant 0 : index
    %32 = vector.load %arg3[%c0_17, %c0_18] : memref<1x4xf32, #tpu.memory_space<vmem>>, vector<1x4xf32>
    %33 = vector.broadcast %32 : vector<1x4xf32> to vector<256x4xf32>
    %34 = arith.addf %31, %33 : vector<256x4xf32>
    %cst_19 = arith.constant 0.000000e+00 : f32
    %35 = vector.broadcast %cst_19 : f32 to vector<256x4xf32>
    %36 = arith.maximumf %34, %35 : vector<256x4xf32>
    %37 = vector.shape_cast %36 : vector<256x4xf32> to vector<16x16x4xf32>
    %38 = vector.shape_cast %37 : vector<16x16x4xf32> to vector<8x2x16x4xf32>
    %cst_20 = arith.constant dense<0xFF800000> : vector<8x16x4xf32>
    %39 = vector.multi_reduction <maximumf>, %38, %cst_20 [1] : vector<8x2x16x4xf32> to vector<8x16x4xf32>
    %40 = vector.shape_cast %39 : vector<8x16x4xf32> to vector<8x8x2x4xf32>
    %cst_21 = arith.constant dense<0xFF800000> : vector<8x8x4xf32>
    %41 = vector.multi_reduction <maximumf>, %40, %cst_21 [2] : vector<8x8x2x4xf32> to vector<8x8x4xf32>
    %c0_22 = arith.constant 0 : index
    %c1 = arith.constant 1 : index
    %c1_23 = arith.constant 1 : index
    %c0_24 = arith.constant 0 : index
    %42 = vector.load %arg4[%c0_22, %c1, %c1_23, %c0_24] : memref<1x10x10x4xf32, #tpu.memory_space<vmem>>, vector<1x8x8x4xf32>
    %43 = vector.shape_cast %42 : vector<1x8x8x4xf32> to vector<8x8x4xf32>
    %44 = vector.shape_cast %41 : vector<8x8x4xf32> to vector<1x8x8x4xf32>
    tpu.vector_store %arg4[%c0_22, %c1, %c1_23, %c0_24], %44 {strides = array<i32>} : memref<1x10x10x4xf32, #tpu.memory_space<vmem>>, vector<1x8x8x4xf32>,
    %45 = vector.extract_strided_slice %41 {offsets = [1, 0, 0], sizes = [1, 8, 4], strides = [1, 1, 1]} : vector<8x8x4xf32> to vector<1x8x4xf32>
    %c0_25 = arith.constant 0 : index
    %c0_26 = arith.constant 0 : index
    %c1_27 = arith.constant 1 : index
    %c0_28 = arith.constant 0 : index
    %46 = vector.load %arg4[%c0_25, %c0_26, %c1_27, %c0_28] : memref<1x10x10x4xf32, #tpu.memory_space<vmem>>, vector<1x1x8x4xf32>
    %47 = vector.shape_cast %46 : vector<1x1x8x4xf32> to vector<1x8x4xf32>
    %48 = vector.shape_cast %45 : vector<1x8x4xf32> to vector<1x1x8x4xf32>
    tpu.vector_store %arg4[%c0_25, %c0_26, %c1_27, %c0_28], %48 {strides = array<i32>} : memref<1x10x10x4xf32, #tpu.memory_space<vmem>>, vector<1x1x8x4xf32>,
    %49 = vector.extract_strided_slice %41 {offsets = [6, 0, 0], sizes = [1, 8, 4], strides = [1, 1, 1]} : vector<8x8x4xf32> to vector<1x8x4xf32>
    %c0_29 = arith.constant 0 : index
    %c9 = arith.constant 9 : index
    %c1_30 = arith.constant 1 : index
    %c0_31 = arith.constant 0 : index
    %50 = vector.load %arg4[%c0_29, %c9, %c1_30, %c0_31] : memref<1x10x10x4xf32, #tpu.memory_space<vmem>>, vector<1x1x8x4xf32>
    %51 = vector.shape_cast %50 : vector<1x1x8x4xf32> to vector<1x8x4xf32>
    %52 = vector.shape_cast %49 : vector<1x8x4xf32> to vector<1x1x8x4xf32>
    tpu.vector_store %arg4[%c0_29, %c9, %c1_30, %c0_31], %52 {strides = array<i32>} : memref<1x10x10x4xf32, #tpu.memory_space<vmem>>, vector<1x1x8x4xf32>,
    %c0_32 = arith.constant 0 : index
    %c0_33 = arith.constant 0 : index
    %c2 = arith.constant 2 : index
    %c0_34 = arith.constant 0 : index
    %53 = vector.load %arg4[%c0_32, %c0_33, %c2, %c0_34] : memref<1x10x10x4xf32, #tpu.memory_space<vmem>>, vector<1x10x1x4xf32>
    %54 = vector.shape_cast %53 : vector<1x10x1x4xf32> to vector<10x1x4xf32>
    %c0_35 = arith.constant 0 : index
    %c0_36 = arith.constant 0 : index
    %c0_37 = arith.constant 0 : index
    %c0_38 = arith.constant 0 : index
    %55 = vector.load %arg4[%c0_35, %c0_36, %c0_37, %c0_38] : memref<1x10x10x4xf32, #tpu.memory_space<vmem>>, vector<1x10x1x4xf32>
    %56 = vector.shape_cast %55 : vector<1x10x1x4xf32> to vector<10x1x4xf32>
    %57 = vector.shape_cast %54 : vector<10x1x4xf32> to vector<1x10x1x4xf32>
    tpu.vector_store %arg4[%c0_35, %c0_36, %c0_37, %c0_38], %57 {strides = array<i32>} : memref<1x10x10x4xf32, #tpu.memory_space<vmem>>, vector<1x10x1x4xf32>,
    %c0_39 = arith.constant 0 : index
    %c0_40 = arith.constant 0 : index
    %c7 = arith.constant 7 : index
    %c0_41 = arith.constant 0 : index
    %58 = vector.load %arg4[%c0_39, %c0_40, %c7, %c0_41] : memref<1x10x10x4xf32, #tpu.memory_space<vmem>>, vector<1x10x1x4xf32>
    %59 = vector.shape_cast %58 : vector<1x10x1x4xf32> to vector<10x1x4xf32>
    %c0_42 = arith.constant 0 : index
    %c0_43 = arith.constant 0 : index
    %c9_44 = arith.constant 9 : index
    %c0_45 = arith.constant 0 : index
    %60 = vector.load %arg4[%c0_42, %c0_43, %c9_44, %c0_45] : memref<1x10x10x4xf32, #tpu.memory_space<vmem>>, vector<1x10x1x4xf32>
    %61 = vector.shape_cast %60 : vector<1x10x1x4xf32> to vector<10x1x4xf32>
    %62 = vector.shape_cast %59 : vector<10x1x4xf32> to vector<1x10x1x4xf32>
    tpu.vector_store %arg4[%c0_42, %c0_43, %c9_44, %c0_45], %62 {strides = array<i32>} : memref<1x10x10x4xf32, #tpu.memory_space<vmem>>, vector<1x10x1x4xf32>,
    return
  }
  func.func @transform_0(%arg0: i32) -> (i32, i32, i32, i32) {
    %c0_i32 = arith.constant 0 : i32
    %c0_i32_0 = arith.constant 0 : i32
    %c0_i32_1 = arith.constant 0 : i32
    %c0_i32_2 = arith.constant 0 : i32
    return %arg0, %c0_i32, %c0_i32_0, %c0_i32_1 : i32, i32, i32, i32
  }
  func.func @transform_1(%arg0: i32) -> (i32, i32) {
    %c0_i32 = arith.constant 0 : i32
    %c0_i32_0 = arith.constant 0 : i32
    %c0_i32_1 = arith.constant 0 : i32
    return %c0_i32, %c0_i32_0 : i32, i32
  }
  func.func @transform_2(%arg0: i32) -> (i32, i32) {
    %c0_i32 = arith.constant 0 : i32
    %c0_i32_0 = arith.constant 0 : i32
    %c0_i32_1 = arith.constant 0 : i32
    return %c0_i32, %c0_i32_0 : i32, i32
  }
  func.func @transform_3(%arg0: i32) -> (i32, i32, i32, i32) {
    %c0_i32 = arith.constant 0 : i32
    %c0_i32_0 = arith.constant 0 : i32
    %c0_i32_1 = arith.constant 0 : i32
    %c0_i32_2 = arith.constant 0 : i32
    return %arg0, %c0_i32, %c0_i32_0, %c0_i32_1 : i32, i32, i32, i32
  }
}

module attributes {stable_mosaic.version = 11 : i64} {
  func.func @_conv_bn_pool_kernel(%arg0: i32, %arg1: memref<1x10x10x4xf32, #tpu.memory_space<vmem>>, %arg2: memref<36x8xf32, #tpu.memory_space<vmem>>, %arg3: memref<1x8xf32, #tpu.memory_space<vmem>>, %arg4: memref<1x8x8x8xf32, #tpu.memory_space<vmem>>, %arg5: memref<64x36xf32, #tpu.memory_space<vmem>>) attributes {dimension_semantics = [#tpu.dimension_semantics<parallel>], iteration_bounds = array<i64: 2>, scalar_prefetch = 0 : i64, scratch_operands = 1 : i64, tpu.core_type = #tpu.core_type<tc>, window_params = [{transform_indices = @transform_0, window_bounds = array<i64: 1, 10, 10, 4>}, {pipeline_mode = #tpu.pipeline_mode<synchronous>, transform_indices = @transform_1, window_bounds = array<i64: 36, 8>}, {pipeline_mode = #tpu.pipeline_mode<synchronous>, transform_indices = @transform_2, window_bounds = array<i64: 1, 8>}, {transform_indices = @transform_3, window_bounds = array<i64: 1, 8, 8, 8>}]} {
    %c0 = arith.constant 0 : index
    %c0_0 = arith.constant 0 : index
    %c0_1 = arith.constant 0 : index
    %c0_2 = arith.constant 0 : index
    %0 = vector.load %arg1[%c0, %c0_0, %c0_1, %c0_2] : memref<1x10x10x4xf32, #tpu.memory_space<vmem>>, vector<1x10x10x4xf32>
    %1 = vector.shape_cast %0 : vector<1x10x10x4xf32> to vector<10x10x4xf32>
    %2 = vector.extract_strided_slice %1 {offsets = [0, 0, 0], sizes = [8, 8, 4], strides = [1, 1, 1]} : vector<10x10x4xf32> to vector<8x8x4xf32>
    %3 = vector.shape_cast %2 : vector<8x8x4xf32> to vector<64x4xf32>
    %c0_3 = arith.constant 0 : index
    %c0_4 = arith.constant 0 : index
    %4 = vector.load %arg5[%c0_3, %c0_4] : memref<64x36xf32, #tpu.memory_space<vmem>>, vector<64x4xf32>
    tpu.vector_store %arg5[%c0_3, %c0_4], %3 {strides = array<i32>} : memref<64x36xf32, #tpu.memory_space<vmem>>, vector<64x4xf32>,
    %5 = vector.extract_strided_slice %1 {offsets = [0, 1, 0], sizes = [8, 8, 4], strides = [1, 1, 1]} : vector<10x10x4xf32> to vector<8x8x4xf32>
    %6 = vector.shape_cast %5 : vector<8x8x4xf32> to vector<64x4xf32>
    %c0_5 = arith.constant 0 : index
    %c4 = arith.constant 4 : index
    %7 = vector.load %arg5[%c0_5, %c4] : memref<64x36xf32, #tpu.memory_space<vmem>>, vector<64x4xf32>
    tpu.vector_store %arg5[%c0_5, %c4], %6 {strides = array<i32>} : memref<64x36xf32, #tpu.memory_space<vmem>>, vector<64x4xf32>,
    %8 = vector.extract_strided_slice %1 {offsets = [0, 2, 0], sizes = [8, 8, 4], strides = [1, 1, 1]} : vector<10x10x4xf32> to vector<8x8x4xf32>
    %9 = vector.shape_cast %8 : vector<8x8x4xf32> to vector<64x4xf32>
    %c0_6 = arith.constant 0 : index
    %c8 = arith.constant 8 : index
    %10 = vector.load %arg5[%c0_6, %c8] : memref<64x36xf32, #tpu.memory_space<vmem>>, vector<64x4xf32>
    tpu.vector_store %arg5[%c0_6, %c8], %9 {strides = array<i32>} : memref<64x36xf32, #tpu.memory_space<vmem>>, vector<64x4xf32>,
    %11 = vector.extract_strided_slice %1 {offsets = [1, 0, 0], sizes = [8, 8, 4], strides = [1, 1, 1]} : vector<10x10x4xf32> to vector<8x8x4xf32>
    %12 = vector.shape_cast %11 : vector<8x8x4xf32> to vector<64x4xf32>
    %c0_7 = arith.constant 0 : index
    %c12 = arith.constant 12 : index
    %13 = vector.load %arg5[%c0_7, %c12] : memref<64x36xf32, #tpu.memory_space<vmem>>, vector<64x4xf32>
    tpu.vector_store %arg5[%c0_7, %c12], %12 {strides = array<i32>} : memref<64x36xf32, #tpu.memory_space<vmem>>, vector<64x4xf32>,
    %14 = vector.extract_strided_slice %1 {offsets = [1, 1, 0], sizes = [8, 8, 4], strides = [1, 1, 1]} : vector<10x10x4xf32> to vector<8x8x4xf32>
    %15 = vector.shape_cast %14 : vector<8x8x4xf32> to vector<64x4xf32>
    %c0_8 = arith.constant 0 : index
    %c16 = arith.constant 16 : index
    %16 = vector.load %arg5[%c0_8, %c16] : memref<64x36xf32, #tpu.memory_space<vmem>>, vector<64x4xf32>
    tpu.vector_store %arg5[%c0_8, %c16], %15 {strides = array<i32>} : memref<64x36xf32, #tpu.memory_space<vmem>>, vector<64x4xf32>,
    %17 = vector.extract_strided_slice %1 {offsets = [1, 2, 0], sizes = [8, 8, 4], strides = [1, 1, 1]} : vector<10x10x4xf32> to vector<8x8x4xf32>
    %18 = vector.shape_cast %17 : vector<8x8x4xf32> to vector<64x4xf32>
    %c0_9 = arith.constant 0 : index
    %c20 = arith.constant 20 : index
    %19 = vector.load %arg5[%c0_9, %c20] : memref<64x36xf32, #tpu.memory_space<vmem>>, vector<64x4xf32>
    tpu.vector_store %arg5[%c0_9, %c20], %18 {strides = array<i32>} : memref<64x36xf32, #tpu.memory_space<vmem>>, vector<64x4xf32>,
    %20 = vector.extract_strided_slice %1 {offsets = [2, 0, 0], sizes = [8, 8, 4], strides = [1, 1, 1]} : vector<10x10x4xf32> to vector<8x8x4xf32>
    %21 = vector.shape_cast %20 : vector<8x8x4xf32> to vector<64x4xf32>
    %c0_10 = arith.constant 0 : index
    %c24 = arith.constant 24 : index
    %22 = vector.load %arg5[%c0_10, %c24] : memref<64x36xf32, #tpu.memory_space<vmem>>, vector<64x4xf32>
    tpu.vector_store %arg5[%c0_10, %c24], %21 {strides = array<i32>} : memref<64x36xf32, #tpu.memory_space<vmem>>, vector<64x4xf32>,
    %23 = vector.extract_strided_slice %1 {offsets = [2, 1, 0], sizes = [8, 8, 4], strides = [1, 1, 1]} : vector<10x10x4xf32> to vector<8x8x4xf32>
    %24 = vector.shape_cast %23 : vector<8x8x4xf32> to vector<64x4xf32>
    %c0_11 = arith.constant 0 : index
    %c28 = arith.constant 28 : index
    %25 = vector.load %arg5[%c0_11, %c28] : memref<64x36xf32, #tpu.memory_space<vmem>>, vector<64x4xf32>
    tpu.vector_store %arg5[%c0_11, %c28], %24 {strides = array<i32>} : memref<64x36xf32, #tpu.memory_space<vmem>>, vector<64x4xf32>,
    %26 = vector.extract_strided_slice %1 {offsets = [2, 2, 0], sizes = [8, 8, 4], strides = [1, 1, 1]} : vector<10x10x4xf32> to vector<8x8x4xf32>
    %27 = vector.shape_cast %26 : vector<8x8x4xf32> to vector<64x4xf32>
    %c0_12 = arith.constant 0 : index
    %c32 = arith.constant 32 : index
    %28 = vector.load %arg5[%c0_12, %c32] : memref<64x36xf32, #tpu.memory_space<vmem>>, vector<64x4xf32>
    tpu.vector_store %arg5[%c0_12, %c32], %27 {strides = array<i32>} : memref<64x36xf32, #tpu.memory_space<vmem>>, vector<64x4xf32>,
    %c0_13 = arith.constant 0 : index
    %c0_14 = arith.constant 0 : index
    %29 = vector.load %arg5[%c0_13, %c0_14] : memref<64x36xf32, #tpu.memory_space<vmem>>, vector<64x36xf32>
    %c0_15 = arith.constant 0 : index
    %c0_16 = arith.constant 0 : index
    %30 = vector.load %arg2[%c0_15, %c0_16] : memref<36x8xf32, #tpu.memory_space<vmem>>, vector<36x8xf32>
    %cst = arith.constant dense<0.000000e+00> : vector<64x8xf32>
    %31 = tpu.matmul %29, %30, %cst {dimension_numbers = #tpu.dot_dimension_numbers<[1], [0], [0], [1], [0, 0, 1, 1], [], []>} : vector<64x36xf32>, vector<36x8xf32>, vector<64x8xf32> -> vector<64x8xf32>
    %c0_17 = arith.constant 0 : index
    %c0_18 = arith.constant 0 : index
    %32 = vector.load %arg3[%c0_17, %c0_18] : memref<1x8xf32, #tpu.memory_space<vmem>>, vector<1x8xf32>
    %33 = vector.broadcast %32 : vector<1x8xf32> to vector<64x8xf32>
    %34 = arith.addf %31, %33 : vector<64x8xf32>
    %cst_19 = arith.constant 0.000000e+00 : f32
    %35 = vector.broadcast %cst_19 : f32 to vector<64x8xf32>
    %36 = arith.maximumf %34, %35 : vector<64x8xf32>
    %37 = vector.shape_cast %36 : vector<64x8xf32> to vector<8x8x8xf32>
    %c0_20 = arith.constant 0 : index
    %c0_21 = arith.constant 0 : index
    %c0_22 = arith.constant 0 : index
    %c0_23 = arith.constant 0 : index
    %38 = vector.load %arg4[%c0_20, %c0_21, %c0_22, %c0_23] : memref<1x8x8x8xf32, #tpu.memory_space<vmem>>, vector<1x8x8x8xf32>
    %39 = vector.shape_cast %38 : vector<1x8x8x8xf32> to vector<8x8x8xf32>
    %40 = vector.shape_cast %37 : vector<8x8x8xf32> to vector<1x8x8x8xf32>
    tpu.vector_store %arg4[%c0_20, %c0_21, %c0_22, %c0_23], %40 {strides = array<i32>} : memref<1x8x8x8xf32, #tpu.memory_space<vmem>>, vector<1x8x8x8xf32>,
    return
  }
  func.func @transform_0(%arg0: i32) -> (i32, i32, i32, i32) {
    %c0_i32 = arith.constant 0 : i32
    %c0_i32_0 = arith.constant 0 : i32
    %c0_i32_1 = arith.constant 0 : i32
    %c0_i32_2 = arith.constant 0 : i32
    return %arg0, %c0_i32, %c0_i32_0, %c0_i32_1 : i32, i32, i32, i32
  }
  func.func @transform_1(%arg0: i32) -> (i32, i32) {
    %c0_i32 = arith.constant 0 : i32
    %c0_i32_0 = arith.constant 0 : i32
    %c0_i32_1 = arith.constant 0 : i32
    return %c0_i32, %c0_i32_0 : i32, i32
  }
  func.func @transform_2(%arg0: i32) -> (i32, i32) {
    %c0_i32 = arith.constant 0 : i32
    %c0_i32_0 = arith.constant 0 : i32
    %c0_i32_1 = arith.constant 0 : i32
    return %c0_i32, %c0_i32_0 : i32, i32
  }
  func.func @transform_3(%arg0: i32) -> (i32, i32, i32, i32) {
    %c0_i32 = arith.constant 0 : i32
    %c0_i32_0 = arith.constant 0 : i32
    %c0_i32_1 = arith.constant 0 : i32
    %c0_i32_2 = arith.constant 0 : i32
    return %arg0, %c0_i32, %c0_i32_0, %c0_i32_1 : i32, i32, i32, i32
  }
}

module attributes {stable_mosaic.version = 11 : i64} {
  func.func @_conv_bn_pool_kernel(%arg0: i32, %arg1: memref<1x16x16x4xf32, #tpu.memory_space<vmem>>, %arg2: memref<4x8xf32, #tpu.memory_space<vmem>>, %arg3: memref<1x8xf32, #tpu.memory_space<vmem>>, %arg4: memref<1x8x8x8xf32, #tpu.memory_space<vmem>>, %arg5: memref<1x8x8x8xf32, #tpu.memory_space<vmem>>) attributes {dimension_semantics = [#tpu.dimension_semantics<parallel>], iteration_bounds = array<i64: 2>, scalar_prefetch = 0 : i64, scratch_operands = 0 : i64, tpu.core_type = #tpu.core_type<tc>, window_params = [{transform_indices = @transform_0, window_bounds = array<i64: 1, 16, 16, 4>}, {pipeline_mode = #tpu.pipeline_mode<synchronous>, transform_indices = @transform_1, window_bounds = array<i64: 4, 8>}, {pipeline_mode = #tpu.pipeline_mode<synchronous>, transform_indices = @transform_2, window_bounds = array<i64: 1, 8>}, {transform_indices = @transform_3, window_bounds = array<i64: 1, 8, 8, 8>}, {transform_indices = @transform_4, window_bounds = array<i64: 1, 8, 8, 8>}]} {
    %c0 = arith.constant 0 : index
    %c0_0 = arith.constant 0 : index
    %c0_1 = arith.constant 0 : index
    %c0_2 = arith.constant 0 : index
    %0 = vector.load %arg1[%c0, %c0_0, %c0_1, %c0_2] : memref<1x16x16x4xf32, #tpu.memory_space<vmem>>, vector<1x16x16x4xf32>
    %1 = vector.shape_cast %0 : vector<1x16x16x4xf32> to vector<16x16x4xf32>
    %cst = arith.constant 0.000000e+00 : f32
    %2 = vector.broadcast %cst : f32 to vector<16x16x4xf32>
    %3 = arith.maximumf %1, %2 : vector<16x16x4xf32>
    %4 = vector.shape_cast %3 : vector<16x16x4xf32> to vector<8x2x16x4xf32>
    %cst_3 = arith.constant dense<0.000000e+00> : vector<8x16x4xf32>
    %5 = vector.multi_reduction <add>, %4, %cst_3 [1] : vector<8x2x16x4xf32> to vector<8x16x4xf32>
    %6 = vector.shape_cast %5 : vector<8x16x4xf32> to vector<8x8x2x4xf32>
    %cst_4 = arith.constant dense<0.000000e+00> : vector<8x8x4xf32>
    %7 = vector.multi_reduction <add>, %6, %cst_4 [2] : vector<8x8x2x4xf32> to vector<8x8x4xf32>
    %cst_5 = arith.constant 2.500000e-01 : f32
    %8 = vector.broadcast %cst_5 : f32 to vector<8x8x4xf32>
    %9 = arith.mulf %7, %8 : vector<8x8x4xf32>
    %10 = vector.shape_cast %9 : vector<8x8x4xf32> to vector<64x4xf32>
    %c0_6 = arith.constant 0 : index
    %c0_7 = arith.constant 0 : index
    %11 = vector.load %arg2[%c0_6, %c0_7] : memref<4x8xf32, #tpu.memory_space<vmem>>, vector<4x8xf32>
    %cst_8 = arith.constant dense<0.000000e+00> : vector<64x8xf32>
    %12 = tpu.matmul %10, %11, %cst_8 {dimension_numbers = #tpu.dot_dimension_numbers<[1], [0], [0], [1], [0, 0, 1, 1], [], []>} : vector<64x4xf32>, vector<4x8xf32>, vector<64x8xf32> -> vector<64x8xf32>
    %c0_9 = arith.constant 0 : index
    %c0_10 = arith.constant 0 : index
    %13 = vector.load %arg3[%c0_9, %c0_10] : memref<1x8xf32, #tpu.memory_space<vmem>>, vector<1x8xf32>
    %14 = vector.broadcast %13 : vector<1x8xf32> to vector<64x8xf32>
    %15 = arith.addf %12, %14 : vector<64x8xf32>
    %16 = vector.shape_cast %15 : vector<64x8xf32> to vector<8x8x8xf32>
    %c0_11 = arith.constant 0 : index
    %c0_12 = arith.constant 0 : index
    %c0_13 = arith.constant 0 : index
    %c0_14 = arith.constant 0 : index
    %17 = vector.load %arg4[%c0_11, %c0_12, %c0_13, %c0_14] : memref<1x8x8x8xf32, #tpu.memory_space<vmem>>, vector<1x8x8x8xf32>
    %18 = vector.shape_cast %17 : vector<1x8x8x8xf32> to vector<8x8x8xf32>
    %19 = arith.addf %16, %18 : vector<8x8x8xf32>
    %c0_15 = arith.constant 0 : index
    %c0_16 = arith.constant 0 : index
    %c0_17 = arith.constant 0 : index
    %c0_18 = arith.constant 0 : index
    %20 = vector.load %arg5[%c0_15, %c0_16, %c0_17, %c0_18] : memref<1x8x8x8xf32, #tpu.memory_space<vmem>>, vector<1x8x8x8xf32>
    %21 = vector.shape_cast %20 : vector<1x8x8x8xf32> to vector<8x8x8xf32>
    %22 = vector.shape_cast %19 : vector<8x8x8xf32> to vector<1x8x8x8xf32>
    tpu.vector_store %arg5[%c0_15, %c0_16, %c0_17, %c0_18], %22 {strides = array<i32>} : memref<1x8x8x8xf32, #tpu.memory_space<vmem>>, vector<1x8x8x8xf32>,
    return
  }
  func.func @transform_0(%arg0: i32) -> (i32, i32, i32, i32) {
    %c0_i32 = arith.constant 0 : i32
    %c0_i32_0 = arith.constant 0 : i32
    %c0_i32_1 = arith.constant 0 : i32
    %c0_i32_2 = arith.constant 0 : i32
    return %arg0, %c0_i32, %c0_i32_0, %c0_i32_1 : i32, i32, i32, i32
  }
  func.func @transform_1(%arg0: i32) -> (i32, i32) {
    %c0_i32 = arith.constant 0 : i32
    %c0_i32_0 = arith.constant 0 : i32
    %c0_i32_1 = arith.constant 0 : i32
    return %c0_i32, %c0_i32_0 : i32, i32
  }
  func.func @transform_2(%arg0: i32) -> (i32, i32) {
    %c0_i32 = arith.constant 0 : i32
    %c0_i32_0 = arith.constant 0 : i32
    %c0_i32_1 = arith.constant 0 : i32
    return %c0_i32, %c0_i32_0 : i32, i32
  }
  func.func @transform_3(%arg0: i32) -> (i32, i32, i32, i32) {
    %c0_i32 = arith.constant 0 : i32
    %c0_i32_0 = arith.constant 0 : i32
    %c0_i32_1 = arith.constant 0 : i32
    %c0_i32_2 = arith.constant 0 : i32
    return %arg0, %c0_i32, %c0_i32_0, %c0_i32_1 : i32, i32, i32, i32
  }
  func.func @transform_4(%arg0: i32) -> (i32, i32, i32, i32) {
    %c0_i32 = arith.constant 0 : i32
    %c0_i32_0 = arith.constant 0 : i32
    %c0_i32_1 = arith.constant 0 : i32
    %c0_i32_2 = arith.constant 0 : i32
    return %arg0, %c0_i32, %c0_i32_0, %c0_i32_1 : i32, i32, i32, i32
  }
}

</mosaic_0001>

<llo_original>
// kernel: _lambda_.4
$region0: #{_lambda_.4}
  #allocation0 [shape = 'u32[]', space=smem, size = 0x4, offset = 0x4, fixed_abs, tag = 'smem constant byte address 0x4 - core index']
  #allocation1 [shape = 'u32[144,128]{1,0:T(1,128)}', space=vmem, size = 0x12000, scoped, tag = 'internal scratch']
  %s0 = inlined_call_operand.vmem [shape: f32[2,16,16,4], index: 0, kind: input, shape index: {}]
  %s1 = inlined_call_operand.vmem [shape: f32[4,4], index: 1, kind: input, shape index: {}]
  %s2 = inlined_call_operand.vmem [shape: f32[1,4], index: 2, kind: input, shape index: {}]
  %s3 = inlined_call_operand.vmem [shape: f32[2,18,18,4], index: 3, kind: output, shape index: {}]
  %s4 = sld [smem:[#allocation0]]
  $region45: #{_lambda_.4} parent=0
    _
  %s6 = ssub.s32 1, %s4
  %s7 = scalar_select 0, %s6, %s4
  loop: start=0, step=1, limit=4
  $region2: #{_lambda_.4} parent=0 // loop_pre_header
    _
  $region3: #{_lambda_.4} parent=0 // loop_header
    %s9 = sphi 0, %s13
    %p10 = scmp.ge.s32.totalorder %s9, 4
    %s19 = sphi 0, %s21
    %s22 = sphi 0, %s19
    %s23 = sphi 0, %s22
    %s39 = sphi 0, %s23
    %s43 = sphi 0, %s43
    %s45 = sphi 0, %s43
    %s46 = sphi 0, %s45
    %s60 = sphi 0, %s46
    %s64 = sphi 0, %s64
    %s66 = sphi 0, %s64
    %s67 = sphi 0, %s66
    %s81 = sphi 0, %s67
    %s87 = sphi 0, %s89
    %s90 = sphi 0, %s87
    %s91 = sphi 0, %s90
    %s107 = sphi 0, %s91
  $region4: #{_lambda_.4} parent=0 // loop_header_branch
    %12 = sbr.rel (%p10) target = $region8
  $region5: #{_lambda_.4} parent=0 // loop_body
    %s14 = ssub.s32 %s9, 1
    %s15 = ssub.s32 %s9, 2
    %s16 = sadd.s32 %s9, 1
    %s17 = ssub.s32 %s9, %s16
    %p18 = scmp.eq.s32.totalorder %s17, 0
    %s20 = sadd.s32 %s19, 1
    %s21 = scalar_select %p18, %s19, %s20
    %p24 = pneg %p18
    %p25 = scmp.eq.s32.totalorder %s9, 1
    %p26 = por %p24, %p25
    %p27 = scmp.ne.s32.totalorder %s19, %s22
    %p28 = scmp.eq.s32.totalorder %s9, 0
    %p29 = por %p27, %p28
    %p30 = scmp.ne.s32.totalorder %s19, %s22
    %p31 = scmp.eq.s32.totalorder %s14, 1
    %p32 = por %p30, %p31
    %p33 = scmp.ne.s32.totalorder %s22, %s23
    %p34 = scmp.eq.s32.totalorder %s14, 0
    %p35 = por %p33, %p34
    %p36 = scmp.ne.s32.totalorder %s22, %s23
    %p37 = scmp.eq.s32.totalorder %s15, 1
    %p38 = por %p36, %p37
    %p40 = scmp.ne.s32.totalorder %s23, %s39
    %p41 = scmp.eq.s32.totalorder %s15, 0
    %p42 = por %p40, %p41
    %s44 = sadd.s32 %s43, 1
    %p47 = scmp.eq.s32.totalorder %s9, 1
    %p48 = scmp.ne.s32.totalorder %s43, %s45
    %p49 = scmp.eq.s32.totalorder %s9, 0
    %p50 = por %p48, %p49
    %p51 = scmp.ne.s32.totalorder %s43, %s45
    %p52 = scmp.eq.s32.totalorder %s14, 1
    %p53 = por %p51, %p52
    %p54 = scmp.ne.s32.totalorder %s45, %s46
    %p55 = scmp.eq.s32.totalorder %s14, 0
    %p56 = por %p54, %p55
    %p57 = scmp.ne.s32.totalorder %s45, %s46
    %p58 = scmp.eq.s32.totalorder %s15, 1
    %p59 = por %p57, %p58
    %p61 = scmp.ne.s32.totalorder %s46, %s60
    %p62 = scmp.eq.s32.totalorder %s15, 0
    %p63 = por %p61, %p62
    %s65 = sadd.s32 %s64, 1
    %p68 = scmp.eq.s32.totalorder %s9, 1
    %p69 = scmp.ne.s32.totalorder %s64, %s66
    %p70 = scmp.eq.s32.totalorder %s9, 0
    %p71 = por %p69, %p70
    %p72 = scmp.ne.s32.totalorder %s64, %s66
    %p73 = scmp.eq.s32.totalorder %s14, 1
    %p74 = por %p72, %p73
    %p75 = scmp.ne.s32.totalorder %s66, %s67
    %p76 = scmp.eq.s32.totalorder %s14, 0
    %p77 = por %p75, %p76
    %p78 = scmp.ne.s32.totalorder %s66, %s67
    %p79 = scmp.eq.s32.totalorder %s15, 1
    %p80 = por %p78, %p79
    %p82 = scmp.ne.s32.totalorder %s67, %s81
    %p83 = scmp.eq.s32.totalorder %s15, 0
    %p84 = por %p82, %p83
    %s85 = ssub.s32 %s9, %s16
    %p86 = scmp.eq.s32.totalorder %s85, 0
    %s88 = sadd.s32 %s87, 1
    %s89 = scalar_select %p86, %s87, %s88
    %p92 = pneg %p86
    %p93 = scmp.eq.s32.totalorder %s9, 1
    %p94 = por %p92, %p93
    %p95 = scmp.ne.s32.totalorder %s87, %s90
    %p96 = scmp.eq.s32.totalorder %s9, 0
    %p97 = por %p95, %p96
    %p98 = scmp.ne.s32.totalorder %s87, %s90
    %p99 = scmp.eq.s32.totalorder %s14, 1
    %p100 = por %p98, %p99
    %p101 = scmp.ne.s32.totalorder %s90, %s91
    %p102 = scmp.eq.s32.totalorder %s14, 0
    %p103 = por %p101, %p102
    %p104 = scmp.ne.s32.totalorder %s90, %s91
    %p105 = scmp.eq.s32.totalorder %s15, 1
    %p106 = por %p104, %p105
    %p108 = scmp.ne.s32.totalorder %s91, %s107
    %p109 = scmp.eq.s32.totalorder %s15, 0
    %p110 = por %p108, %p109
    %p111 = scmp.le.s32.totalorder 1, %s9
    %p112 = scmp.lt.s32.totalorder %s9, 3
    %p113 = pnand %p111, %p112
    %p114 = pneg %p113
    // Predicated region
    $region9: #{_lambda_.4} parent=5 // pred_check
      _
    $region10: #{_lambda_.4} parent=5 // pred_check_branch
      %116 = sbr.rel (%p113) target = $region12
    $region11: #{_lambda_.4} parent=5 // pred_region
      %s117 = ssub.s32 %s9, 1
      // Predicated region
      $region13: #{_lambda_.4} parent=11 // pred_check
        %p118 = pneg %p56
      $region14: #{_lambda_.4} parent=11 // pred_check_branch
        %120 = sbr.rel (%p118) target = $region16
      $region15: #{_lambda_.4} parent=11 // pred_region
        _
      $region16: #{_lambda_.4} parent=11 // pred_fallthru
        _
      // Predicated region
      $region17: #{_lambda_.4} parent=11 // pred_check
        %p121 = pneg %p77
      $region18: #{_lambda_.4} parent=11 // pred_check_branch
        %123 = sbr.rel (%p121) target = $region20
      $region19: #{_lambda_.4} parent=11 // pred_region
        _
      $region20: #{_lambda_.4} parent=11 // pred_fallthru
        _
    $region12: #{_lambda_.4} parent=5 // pred_fallthru
      _
    %p124 = scmp.lt.s32.totalorder %s9, 2
    // Predicated region
    $region21: #{_lambda_.4} parent=5 // pred_check
      %p125 = pneg %p124
    $region22: #{_lambda_.4} parent=5 // pred_check_branch
      %127 = sbr.rel (%p125) target = $region24
    $region23: #{_lambda_.4} parent=5 // pred_region
      // Predicated region
      $region25: #{_lambda_.4} parent=23 // pred_check
        %p128 = pneg %p29
      $region26: #{_lambda_.4} parent=23 // pred_check_branch
        %130 = sbr.rel (%p128) target = $region28
      $region27: #{_lambda_.4} parent=23 // pred_region
        %p131 = scmp.lt.s32.totalorder %s9, 1
        %s132 = scalar_select %p131, %s9, 1
        %s133 = smul.addr %s132, 32
        %s134 = smul.addr %s133, 8
        %s135 = scalar_lea.vmem %s0, %s134
      $region28: #{_lambda_.4} parent=23 // pred_fallthru
        _
    $region24: #{_lambda_.4} parent=5 // pred_fallthru
      _
    %p136 = scmp.le.s32.totalorder 1, %s9
    %p137 = scmp.lt.s32.totalorder %s9, 3
    %p138 = pnand %p136, %p137
    %p139 = pneg %p138
    // Predicated region
    $region29: #{_lambda_.4} parent=5 // pred_check
      _
    $region30: #{_lambda_.4} parent=5 // pred_check_branch
      %141 = sbr.rel (%p138) target = $region32
    $region31: #{_lambda_.4} parent=5 // pred_region
      %s142 = ssub.s32 %s9, 1
      %p143 = scmp.lt.s32.totalorder %s14, 1
      %s144 = scalar_select %p143, %s14, 1
      %s145 = smul.addr %s144, 32
      %s146 = smul.addr %s145, 8
      %s147 = scalar_lea.vmem %s0, %s146
      %p148 = pneg %p35
      %p149 = pneg %p32
      %p150 = pneg %p56
      %p151 = pneg %p53
      %p152 = pneg %p77
      %p153 = pneg %p74
      %p154 = pneg %p103
      %p155 = pneg %p100
      %p156 = scmp.lt.s32.totalorder %s14, 1
      %s157 = scalar_select %p156, %s14, 1
      %s158 = smul.addr %s157, 54
      %s159 = smul.addr %s158, 8
      %s160 = scalar_lea.vmem %s3, %s159
      %p161 = scmp.lt.s32.totalorder %s14, 1
      %s162 = scalar_select %p161, %s14, 1
      %s163 = smul.addr %s162, 32
      %s164 = smul.addr %s163, 8
      %s165 = scalar_lea.vmem %s0, %s164
      %p166 = scmp.lt.s32.totalorder %s14, 1
      %s167 = scalar_select %p166, %s14, 1
      %s168 = smul.addr %s167, 54
      %s169 = smul.addr %s168, 8
      %s170 = scalar_lea.vmem %s3, %s169
      %v171 = vld [vmem:[%s165] sm:$0xff]
      %v172 = vld [vmem:[%s165 + $0x8] sm:$0xff]
      %v173 = vld [vmem:[%s165 + $0x10] sm:$0xff]
      %v174 = vld [vmem:[%s165 + $0x18] sm:$0xff]
      %v175 = vld [vmem:[%s165 + $0x20] sm:$0xff]
      %v176 = vld [vmem:[%s165 + $0x28] sm:$0xff]
      %v177 = vld [vmem:[%s165 + $0x30] sm:$0xff]
      %v178 = vld [vmem:[%s165 + $0x38] sm:$0xff]
      %v179 = vld [vmem:[%s165 + $0x40] sm:$0xff]
      %v180 = vld [vmem:[%s165 + $0x48] sm:$0xff]
      %v181 = vld [vmem:[%s165 + $0x50] sm:$0xff]
      %v182 = vld [vmem:[%s165 + $0x58] sm:$0xff]
      %v183 = vld [vmem:[%s165 + $0x60] sm:$0xff]
      %v184 = vld [vmem:[%s165 + $0x68] sm:$0xff]
      %v185 = vld [vmem:[%s165 + $0x70] sm:$0xff]
      %v186 = vld [vmem:[%s165 + $0x78] sm:$0xff]
      %v187 = vld [vmem:[%s165 + $0x80] sm:$0xff]
      %v188 = vld [vmem:[%s165 + $0x88] sm:$0xff]
      %v189 = vld [vmem:[%s165 + $0x90] sm:$0xff]
      %v190 = vld [vmem:[%s165 + $0x98] sm:$0xff]
      %v191 = vld [vmem:[%s165 + $0xa0] sm:$0xff]
      %v192 = vld [vmem:[%s165 + $0xa8] sm:$0xff]
      %v193 = vld [vmem:[%s165 + $0xb0] sm:$0xff]
      %v194 = vld [vmem:[%s165 + $0xb8] sm:$0xff]
      %v195 = vld [vmem:[%s165 + $0xc0] sm:$0xff]
      %v196 = vld [vmem:[%s165 + $0xc8] sm:$0xff]
      %v197 = vld [vmem:[%s165 + $0xd0] sm:$0xff]
      %v198 = vld [vmem:[%s165 + $0xd8] sm:$0xff]
      %v199 = vld [vmem:[%s165 + $0xe0] sm:$0xff]
      %v200 = vld [vmem:[%s165 + $0xe8] sm:$0xff]
      %v201 = vld [vmem:[%s165 + $0xf0] sm:$0xff]
      %v202 = vld [vmem:[%s165 + $0xf8] sm:$0xff]
      %v203 = vmax.f32 %v171, 0.0
      %v204 = vmax.f32 %v172, 0.0
      %v205 = vmax.f32 %v173, 0.0
      %v206 = vmax.f32 %v174, 0.0
      %v207 = vmax.f32 %v175, 0.0
      %v208 = vmax.f32 %v176, 0.0
      %v209 = vmax.f32 %v177, 0.0
      %v210 = vmax.f32 %v178, 0.0
      %v211 = vmax.f32 %v179, 0.0
      %v212 = vmax.f32 %v180, 0.0
      %v213 = vmax.f32 %v181, 0.0
      %v214 = vmax.f32 %v182, 0.0
      %v215 = vmax.f32 %v183, 0.0
      %v216 = vmax.f32 %v184, 0.0
      %v217 = vmax.f32 %v185, 0.0
      %v218 = vmax.f32 %v186, 0.0
      %v219 = vmax.f32 %v187, 0.0
      %v220 = vmax.f32 %v188, 0.0
      %v221 = vmax.f32 %v189, 0.0
      %v222 = vmax.f32 %v190, 0.0
      %v223 = vmax.f32 %v191, 0.0
      %v224 = vmax.f32 %v192, 0.0
      %v225 = vmax.f32 %v193, 0.0
      %v226 = vmax.f32 %v194, 0.0
      %v227 = vmax.f32 %v195, 0.0
      %v228 = vmax.f32 %v196, 0.0
      %v229 = vmax.f32 %v197, 0.0
      %v230 = vmax.f32 %v198, 0.0
      %v231 = vmax.f32 %v199, 0.0
      %v232 = vmax.f32 %v200, 0.0
      %v233 = vmax.f32 %v201, 0.0
      %v234 = vmax.f32 %v202, 0.0
      %v235 = vld [vmem:[%s1] sm:$0xf]
      %v236 = vld [vmem:[%s2] sm:$0x1]
      %v238 = vlaneseq
      %v239 = vshrl.u32 %v238, 7
      %v240 = vsub.s32 0, %v239
      %v241 = vrot.slane %v236, %v240
      %vm243 = vcmask 31744
      %v245 = vsel %vm243, %v203, 0
      %v248 = vsel %vm243, %v204, 0
      %v251 = vsel %vm243, %v205, 0
      %v254 = vsel %vm243, %v206, 0
      %v257 = vsel %vm243, %v207, 0
      %v260 = vsel %vm243, %v208, 0
      %v263 = vsel %vm243, %v209, 0
      %v266 = vsel %vm243, %v210, 0
      %v269 = vsel %vm243, %v211, 0
      %v272 = vsel %vm243, %v212, 0
      %v275 = vsel %vm243, %v213, 0
      %v278 = vsel %vm243, %v214, 0
      %v281 = vsel %vm243, %v215, 0
      %v284 = vsel %vm243, %v216, 0
      %v287 = vsel %vm243, %v217, 0
      %v290 = vsel %vm243, %v218, 0
      %v293 = vsel %vm243, %v219, 0
      %v296 = vsel %vm243, %v220, 0
      %v299 = vsel %vm243, %v221, 0
      %v302 = vsel %vm243, %v222, 0
      %v305 = vsel %vm243, %v223, 0
      %v308 = vsel %vm243, %v224, 0
      %v311 = vsel %vm243, %v225, 0
      %v314 = vsel %vm243, %v226, 0
      %v317 = vsel %vm243, %v227, 0
      %v320 = vsel %vm243, %v228, 0
      %v323 = vsel %vm243, %v229, 0
      %v326 = vsel %vm243, %v230, 0
      %v329 = vsel %vm243, %v231, 0
      %v332 = vsel %vm243, %v232, 0
      %v335 = vsel %vm243, %v233, 0
      %v338 = vsel %vm243, %v234, 0
      %vm340 = vcmask 1043456
      %v342 = vsel %vm340, %v235, 0
      %344 = vmatprep.subr.mxu0 0.0
      %345 = vmatpush1.msra.mxu0 0.0
      %346 = vmatprep.subr.mxu0 0.0
      %347 = vmatpush1.msra.mxu0 0.0
      %348 = vmatprep.subr.mxu0 0.0
      %349 = vmatpush1.msra.mxu0 0.0
      %350 = vmatprep.subr.mxu0 0.0
      %351 = vmatpush1.msra.mxu0 0.0
      %352 = vmatprep.subr.mxu0 0.0
      %353 = vmatpush1.msra.mxu0 0.0
      %354 = vmatprep.subr.mxu0 0.0
      %355 = vmatpush1.msra.mxu0 0.0
      %356 = vmatprep.subr.mxu0 0.0
      %357 = vmatpush1.msra.mxu0 0.0
      %358 = vmatprep.subr.mxu0 0.0
      %359 = vmatpush1.msra.mxu0 0.0
      %360 = vmatprep.subr.mxu0 0.0
      %361 = vmatpush1.msra.mxu0 0.0
      %362 = vmatprep.subr.mxu0 0.0
      %363 = vmatpush1.msra.mxu0 0.0
      %364 = vmatprep.subr.mxu0 0.0
      %365 = vmatpush1.msra.mxu0 0.0
      %366 = vmatprep.subr.mxu0 0.0
      %367 = vmatpush1.msra.mxu0 0.0
      %368 = vmatprep.subr.mxu0 0.0
      %369 = vmatpush1.msra.mxu0 0.0
      %370 = vmatprep.subr.mxu0 0.0
      %371 = vmatpush1.msra.mxu0 0.0
      %372 = vmatprep.subr.mxu0 0.0
      %373 = vmatpush1.msra.mxu0 0.0
      %374 = vmatprep.subr.mxu0 0.0
      %375 = vmatpush1.msra.mxu0 %v342
      %376 = vmatprep.subr.mxu0 0.0
      %377 = vmatpush2.msra.mxu0 0.0
      %378 = vmatprep.subr.mxu0 0.0
      %379 = vmatpush2.msra.mxu0 0.0
      %380 = vmatprep.subr.mxu0 0.0
      %381 = vmatpush2.msra.mxu0 0.0
      %382 = vmatprep.subr.mxu0 0.0
      %383 = vmatpush2.msra.mxu0 0.0
      %384 = vmatprep.subr.mxu0 0.0
      %385 = vmatpush2.msra.mxu0 0.0
      %386 = vmatprep.subr.mxu0 0.0
      %387 = vmatpush2.msra.mxu0 0.0
      %388 = vmatprep.subr.mxu0 0.0
      %389 = vmatpush2.msra.mxu0 0.0
      %390 = vmatprep.subr.mxu0 0.0
      %391 = vmatpush2.msra.mxu0 0.0
      %392 = vmatprep.subr.mxu0 0.0
      %393 = vmatpush2.msra.mxu0 0.0
      %394 = vmatprep.subr.mxu0 0.0
      %395 = vmatpush2.msra.mxu0 0.0
      %396 = vmatprep.subr.mxu0 0.0
      %397 = vmatpush2.msra.mxu0 0.0
      %398 = vmatprep.subr.mxu0 0.0
      %399 = vmatpush2.msra.mxu0 0.0
      %400 = vmatprep.subr.mxu0 0.0
      %401 = vmatpush2.msra.mxu0 0.0
      %402 = vmatprep.subr.mxu0 0.0
      %403 = vmatpush2.msra.mxu0 0.0
      %404 = vmatprep.subr.mxu0 0.0
      %405 = vmatpush2.msra.mxu0 0.0
      %406 = vmatprep.subr.mxu0 0.0
      %407 = vmatpush2.msra.mxu0 0.0
      %408 = vmatprep.mubr.f32.mxu0 0.0
      %409 = vmatmul.mubr.f32.gmra.mxu0 %v245
      %v410 = vpop.f32.mrf.mxu0
      %v411 = vadd.f32 %v241, %v410
      %v412 = vpop.f32.mrf.mxu0
      %413 = vmatprep.mubr.f32.mxu0 0.0
      %414 = vmatmul.mubr.f32.gmra.mxu0 %v248
      %v415 = vpop.f32.mrf.mxu0
      %v416 = vadd.f32 %v241, %v415
      %v417 = vpop.f32.mrf.mxu0
      %418 = vmatprep.mubr.f32.mxu0 0.0
      %419 = vmatmul.mubr.f32.gmra.mxu0 %v251
      %v420 = vpop.f32.mrf.mxu0
      %v421 = vadd.f32 %v241, %v420
      %v422 = vpop.f32.mrf.mxu0
      %423 = vmatprep.mubr.f32.mxu0 0.0
      %424 = vmatmul.mubr.f32.gmra.mxu0 %v254
      %v425 = vpop.f32.mrf.mxu0
      %v426 = vadd.f32 %v241, %v425
      %v427 = vpop.f32.mrf.mxu0
      %428 = vmatprep.mubr.f32.mxu0 0.0
      %429 = vmatmul.mubr.f32.gmra.mxu0 %v257
      %v430 = vpop.f32.mrf.mxu0
      %v431 = vadd.f32 %v241, %v430
      %v432 = vpop.f32.mrf.mxu0
      %433 = vmatprep.mubr.f32.mxu0 0.0
      %434 = vmatmul.mubr.f32.gmra.mxu0 %v260
      %v435 = vpop.f32.mrf.mxu0
      %v436 = vadd.f32 %v241, %v435
      %v437 = vpop.f32.mrf.mxu0
      %438 = vmatprep.mubr.f32.mxu0 0.0
      %439 = vmatmul.mubr.f32.gmra.mxu0 %v263
      %v440 = vpop.f32.mrf.mxu0
      %v441 = vadd.f32 %v241, %v440
      %v442 = vpop.f32.mrf.mxu0
      %443 = vmatprep.mubr.f32.mxu0 0.0
      %444 = vmatmul.mubr.f32.gmra.mxu0 %v266
      %v445 = vpop.f32.mrf.mxu0
      %v446 = vadd.f32 %v241, %v445
      %v447 = vpop.f32.mrf.mxu0
      %448 = vmatprep.mubr.f32.mxu0 0.0
      %449 = vmatmul.mubr.f32.gmra.mxu0 %v269
      %v450 = vpop.f32.mrf.mxu0
      %v451 = vadd.f32 %v241, %v450
      %v452 = vpop.f32.mrf.mxu0
      %453 = vmatprep.mubr.f32.mxu0 0.0
      %454 = vmatmul.mubr.f32.gmra.mxu0 %v272
      %v455 = vpop.f32.mrf.mxu0
      %v456 = vadd.f32 %v241, %v455
      %v457 = vpop.f32.mrf.mxu0
      %458 = vmatprep.mubr.f32.mxu0 0.0
      %459 = vmatmul.mubr.f32.gmra.mxu0 %v275
      %v460 = vpop.f32.mrf.mxu0
      %v461 = vadd.f32 %v241, %v460
      %v462 = vpop.f32.mrf.mxu0
      %463 = vmatprep.mubr.f32.mxu0 0.0
      %464 = vmatmul.mubr.f32.gmra.mxu0 %v278
      %v465 = vpop.f32.mrf.mxu0
      %v466 = vadd.f32 %v241, %v465
      %v467 = vpop.f32.mrf.mxu0
      %468 = vmatprep.mubr.f32.mxu0 0.0
      %469 = vmatmul.mubr.f32.gmra.mxu0 %v281
      %v470 = vpop.f32.mrf.mxu0
      %v471 = vadd.f32 %v241, %v470
      %v472 = vpop.f32.mrf.mxu0
      %473 = vmatprep.mubr.f32.mxu0 0.0
      %474 = vmatmul.mubr.f32.gmra.mxu0 %v284
      %v475 = vpop.f32.mrf.mxu0
      %v476 = vadd.f32 %v241, %v475
      %v477 = vpop.f32.mrf.mxu0
      %478 = vmatprep.mubr.f32.mxu0 0.0
      %479 = vmatmul.mubr.f32.gmra.mxu0 %v287
      %v480 = vpop.f32.mrf.mxu0
      %v481 = vadd.f32 %v241, %v480
      %v482 = vpop.f32.mrf.mxu0
      %483 = vmatprep.mubr.f32.mxu0 0.0
      %484 = vmatmul.mubr.f32.gmra.mxu0 %v290
      %v485 = vpop.f32.mrf.mxu0
      %v486 = vadd.f32 %v241, %v485
      %v487 = vpop.f32.mrf.mxu0
      %488 = vmatprep.mubr.f32.mxu0 0.0
      %489 = vmatmul.mubr.f32.gmra.mxu0 %v293
      %v490 = vpop.f32.mrf.mxu0
      %v491 = vadd.f32 %v241, %v490
      %v492 = vpop.f32.mrf.mxu0
      %493 = vmatprep.mubr.f32.mxu0 0.0
      %494 = vmatmul.mubr.f32.gmra.mxu0 %v296
      %v495 = vpop.f32.mrf.mxu0
      %v496 = vadd.f32 %v241, %v495
      %v497 = vpop.f32.mrf.mxu0
      %498 = vmatprep.mubr.f32.mxu0 0.0
      %499 = vmatmul.mubr.f32.gmra.mxu0 %v299
      %v500 = vpop.f32.mrf.mxu0
      %v501 = vadd.f32 %v241, %v500
      %v502 = vpop.f32.mrf.mxu0
      %503 = vmatprep.mubr.f32.mxu0 0.0
      %504 = vmatmul.mubr.f32.gmra.mxu0 %v302
      %v505 = vpop.f32.mrf.mxu0
      %v506 = vadd.f32 %v241, %v505
      %v507 = vpop.f32.mrf.mxu0
      %508 = vmatprep.mubr.f32.mxu0 0.0
      %509 = vmatmul.mubr.f32.gmra.mxu0 %v305
      %v510 = vpop.f32.mrf.mxu0
      %v511 = vadd.f32 %v241, %v510
      %v512 = vpop.f32.mrf.mxu0
      %513 = vmatprep.mubr.f32.mxu0 0.0
      %514 = vmatmul.mubr.f32.gmra.mxu0 %v308
      %v515 = vpop.f32.mrf.mxu0
      %v516 = vadd.f32 %v241, %v515
      %v517 = vpop.f32.mrf.mxu0
      %518 = vmatprep.mubr.f32.mxu0 0.0
      %519 = vmatmul.mubr.f32.gmra.mxu0 %v311
      %v520 = vpop.f32.mrf.mxu0
      %v521 = vadd.f32 %v241, %v520
      %v522 = vpop.f32.mrf.mxu0
      %523 = vmatprep.mubr.f32.mxu0 0.0
      %524 = vmatmul.mubr.f32.gmra.mxu0 %v314
      %v525 = vpop.f32.mrf.mxu0
      %v526 = vadd.f32 %v241, %v525
      %v527 = vpop.f32.mrf.mxu0
      %528 = vmatprep.mubr.f32.mxu0 0.0
      %529 = vmatmul.mubr.f32.gmra.mxu0 %v317
      %v530 = vpop.f32.mrf.mxu0
      %v531 = vadd.f32 %v241, %v530
      %v532 = vpop.f32.mrf.mxu0
      %533 = vmatprep.mubr.f32.mxu0 0.0
      %534 = vmatmul.mubr.f32.gmra.mxu0 %v320
      %v535 = vpop.f32.mrf.mxu0
      %v536 = vadd.f32 %v241, %v535
      %v537 = vpop.f32.mrf.mxu0
      %538 = vmatprep.mubr.f32.mxu0 0.0
      %539 = vmatmul.mubr.f32.gmra.mxu0 %v323
      %v540 = vpop.f32.mrf.mxu0
      %v541 = vadd.f32 %v241, %v540
      %v542 = vpop.f32.mrf.mxu0
      %543 = vmatprep.mubr.f32.mxu0 0.0
      %544 = vmatmul.mubr.f32.gmra.mxu0 %v326
      %v545 = vpop.f32.mrf.mxu0
      %v546 = vadd.f32 %v241, %v545
      %v547 = vpop.f32.mrf.mxu0
      %548 = vmatprep.mubr.f32.mxu0 0.0
      %549 = vmatmul.mubr.f32.gmra.mxu0 %v329
      %v550 = vpop.f32.mrf.mxu0
      %v551 = vadd.f32 %v241, %v550
      %v552 = vpop.f32.mrf.mxu0
      %553 = vmatprep.mubr.f32.mxu0 0.0
      %554 = vmatmul.mubr.f32.gmra.mxu0 %v332
      %v555 = vpop.f32.mrf.mxu0
      %v556 = vadd.f32 %v241, %v555
      %v557 = vpop.f32.mrf.mxu0
      %558 = vmatprep.mubr.f32.mxu0 0.0
      %559 = vmatmul.mubr.f32.gmra.mxu0 %v335
      %v560 = vpop.f32.mrf.mxu0
      %v561 = vadd.f32 %v241, %v560
      %v562 = vpop.f32.mrf.mxu0
      %563 = vmatprep.mubr.f32.mxu0 0.0
      %564 = vmatmul.mubr.f32.gmra.mxu0 %v338
      %v565 = vpop.f32.mrf.mxu0
      %v566 = vadd.f32 %v241, %v565
      %v567 = vpop.f32.mrf.mxu0
      %568 = vdwg.mxu0
      %v569 = vmax.f32 %v411, 0.0
      %v570 = vmax.f32 %v416, 0.0
      %v571 = vmax.f32 %v421, 0.0
      %v572 = vmax.f32 %v426, 0.0
      %v573 = vmax.f32 %v431, 0.0
      %v574 = vmax.f32 %v436, 0.0
      %v575 = vmax.f32 %v441, 0.0
      %v576 = vmax.f32 %v446, 0.0
      %v577 = vmax.f32 %v451, 0.0
      %v578 = vmax.f32 %v456, 0.0
      %v579 = vmax.f32 %v461, 0.0
      %v580 = vmax.f32 %v466, 0.0
      %v581 = vmax.f32 %v471, 0.0
      %v582 = vmax.f32 %v476, 0.0
      %v583 = vmax.f32 %v481, 0.0
      %v584 = vmax.f32 %v486, 0.0
      %v585 = vmax.f32 %v491, 0.0
      %v586 = vmax.f32 %v496, 0.0
      %v587 = vmax.f32 %v501, 0.0
      %v588 = vmax.f32 %v506, 0.0
      %v589 = vmax.f32 %v511, 0.0
      %v590 = vmax.f32 %v516, 0.0
      %v591 = vmax.f32 %v521, 0.0
      %v592 = vmax.f32 %v526, 0.0
      %v593 = vmax.f32 %v531, 0.0
      %v594 = vmax.f32 %v536, 0.0
      %v595 = vmax.f32 %v541, 0.0
      %v596 = vmax.f32 %v546, 0.0
      %v597 = vmax.f32 %v551, 0.0
      %v598 = vmax.f32 %v556, 0.0
      %v599 = vmax.f32 %v561, 0.0
      %v600 = vmax.f32 %v566, 0.0
      %s601 = scalar_lea.vmem %s170, 24
      %602 = vst.msk [vmem:[%s601 + $0x1] sm:$0xff] %vm243, %v569
      %603 = vst.msk [vmem:[%s601 + $0x9] sm:$0xff] %vm243, %v570
      %604 = vst.msk [vmem:[%s601 + $0x19] sm:$0xff] %vm243, %v571
      %605 = vst.msk [vmem:[%s601 + $0x21] sm:$0xff] %vm243, %v572
      %606 = vst.msk [vmem:[%s601 + $0x31] sm:$0xff] %vm243, %v573
      %607 = vst.msk [vmem:[%s601 + $0x39] sm:$0xff] %vm243, %v574
      %608 = vst.msk [vmem:[%s601 + $0x49] sm:$0xff] %vm243, %v575
      %609 = vst.msk [vmem:[%s601 + $0x51] sm:$0xff] %vm243, %v576
      %610 = vst.msk [vmem:[%s601 + $0x61] sm:$0xff] %vm243, %v577
      %611 = vst.msk [vmem:[%s601 + $0x69] sm:$0xff] %vm243, %v578
      %612 = vst.msk [vmem:[%s601 + $0x79] sm:$0xff] %vm243, %v579
      %613 = vst.msk [vmem:[%s601 + $0x81] sm:$0xff] %vm243, %v580
      %614 = vst.msk [vmem:[%s601 + $0x91] sm:$0xff] %vm243, %v581
      %615 = vst.msk [vmem:[%s601 + $0x99] sm:$0xff] %vm243, %v582
      %616 = vst.msk [vmem:[%s601 + $0xa9] sm:$0xff] %vm243, %v583
      %617 = vst.msk [vmem:[%s601 + $0xb1] sm:$0xff] %vm243, %v584
      %618 = vst.msk [vmem:[%s601 + $0xc1] sm:$0xff] %vm243, %v585
      %619 = vst.msk [vmem:[%s601 + $0xc9] sm:$0xff] %vm243, %v586
      %620 = vst.msk [vmem:[%s601 + $0xd9] sm:$0xff] %vm243, %v587
      %621 = vst.msk [vmem:[%s601 + $0xe1] sm:$0xff] %vm243, %v588
      %622 = vst.msk [vmem:[%s601 + $0xf1] sm:$0xff] %vm243, %v589
      %623 = vst.msk [vmem:[%s601 + $0xf9] sm:$0xff] %vm243, %v590
      %624 = vst.msk [vmem:[%s601 + $0x109] sm:$0xff] %vm243, %v591
      %625 = vst.msk [vmem:[%s601 + $0x111] sm:$0xff] %vm243, %v592
      %626 = vst.msk [vmem:[%s601 + $0x121] sm:$0xff] %vm243, %v593
      %627 = vst.msk [vmem:[%s601 + $0x129] sm:$0xff] %vm243, %v594
      %628 = vst.msk [vmem:[%s601 + $0x139] sm:$0xff] %vm243, %v595
      %629 = vst.msk [vmem:[%s601 + $0x141] sm:$0xff] %vm243, %v596
      %630 = vst.msk [vmem:[%s601 + $0x151] sm:$0xff] %vm243, %v597
      %631 = vst.msk [vmem:[%s601 + $0x159] sm:$0xff] %vm243, %v598
      %632 = vst.msk [vmem:[%s601 + $0x169] sm:$0xff] %vm243, %v599
      %633 = vst.msk [vmem:[%s601 + $0x171] sm:$0xff] %vm243, %v600
      %634 = vst.msk [vmem:[%s170 + $0x1] sm:$0xff] %vm243, %v571
      %635 = vst.msk [vmem:[%s170 + $0x9] sm:$0xff] %vm243, %v572
      %s636 = scalar_lea.vmem %s170, 408
      %637 = vst.msk [vmem:[%s636 + $0x1] sm:$0xff] %vm243, %v597
      %638 = vst.msk [vmem:[%s636 + $0x9] sm:$0xff] %vm243, %v598
      %v639 = vld [vmem:[%s170 + $0x2] sm:$0x1]
      %v640 = vld [vmem:[%s170 + $0x1a] sm:$0x1]
      %v641 = vld [vmem:[%s170 + $0x32] sm:$0x1]
      %v642 = vld [vmem:[%s170 + $0x4a] sm:$0x1]
      %v643 = vld [vmem:[%s170 + $0x62] sm:$0x1]
      %v644 = vld [vmem:[%s170 + $0x7a] sm:$0x1]
      %v645 = vld [vmem:[%s170 + $0x92] sm:$0x1]
      %v646 = vld [vmem:[%s170 + $0xaa] sm:$0x1]
      %v647 = vld [vmem:[%s170 + $0xc2] sm:$0x1]
      %v648 = vld [vmem:[%s170 + $0xda] sm:$0x1]
      %v649 = vld [vmem:[%s170 + $0xf2] sm:$0x1]
      %v650 = vld [vmem:[%s170 + $0x10a] sm:$0x1]
      %v651 = vld [vmem:[%s170 + $0x122] sm:$0x1]
      %v652 = vld [vmem:[%s170 + $0x13a] sm:$0x1]
      %v653 = vld [vmem:[%s170 + $0x152] sm:$0x1]
      %v654 = vld [vmem:[%s170 + $0x16a] sm:$0x1]
      %v655 = vld [vmem:[%s170 + $0x182] sm:$0x1]
      %v656 = vld [vmem:[%s170 + $0x19a] sm:$0x1]
      %vm657 = vcmask 24576
      %658 = vst.msk [vmem:[%s170] sm:$0x1] %vm657, %v639
      %659 = vst.msk [vmem:[%s170 + $0x18] sm:$0x1] %vm657, %v640
      %660 = vst.msk [vmem:[%s170 + $0x30] sm:$0x1] %vm657, %v641
      %661 = vst.msk [vmem:[%s170 + $0x48] sm:$0x1] %vm657, %v642
      %662 = vst.msk [vmem:[%s170 + $0x60] sm:$0x1] %vm657, %v643
      %663 = vst.msk [vmem:[%s170 + $0x78] sm:$0x1] %vm657, %v644
      %664 = vst.msk [vmem:[%s170 + $0x90] sm:$0x1] %vm657, %v645
      %665 = vst.msk [vmem:[%s170 + $0xa8] sm:$0x1] %vm657, %v646
      %666 = vst.msk [vmem:[%s170 + $0xc0] sm:$0x1] %vm657, %v647
      %667 = vst.msk [vmem:[%s170 + $0xd8] sm:$0x1] %vm657, %v648
      %668 = vst.msk [vmem:[%s170 + $0xf0] sm:$0x1] %vm657, %v649
      %669 = vst.msk [vmem:[%s170 + $0x108] sm:$0x1] %vm657, %v650
      %670 = vst.msk [vmem:[%s170 + $0x120] sm:$0x1] %vm657, %v651
      %671 = vst.msk [vmem:[%s170 + $0x138] sm:$0x1] %vm657, %v652
      %672 = vst.msk [vmem:[%s170 + $0x150] sm:$0x1] %vm657, %v653
      %673 = vst.msk [vmem:[%s170 + $0x168] sm:$0x1] %vm657, %v654
      %674 = vst.msk [vmem:[%s170 + $0x180] sm:$0x1] %vm657, %v655
      %675 = vst.msk [vmem:[%s170 + $0x198] sm:$0x1] %vm657, %v656
      %v676 = vld [vmem:[%s170 + $0xf] sm:$0x1]
      %v677 = vld [vmem:[%s170 + $0x27] sm:$0x1]
      %v678 = vld [vmem:[%s170 + $0x3f] sm:$0x1]
      %v679 = vld [vmem:[%s170 + $0x57] sm:$0x1]
      %v680 = vld [vmem:[%s170 + $0x6f] sm:$0x1]
      %v681 = vld [vmem:[%s170 + $0x87] sm:$0x1]
      %v682 = vld [vmem:[%s170 + $0x9f] sm:$0x1]
      %v683 = vld [vmem:[%s170 + $0xb7] sm:$0x1]
      %v684 = vld [vmem:[%s170 + $0xcf] sm:$0x1]
      %v685 = vld [vmem:[%s170 + $0xe7] sm:$0x1]
      %v686 = vld [vmem:[%s170 + $0xff] sm:$0x1]
      %v687 = vld [vmem:[%s170 + $0x117] sm:$0x1]
      %v688 = vld [vmem:[%s170 + $0x12f] sm:$0x1]
      %v689 = vld [vmem:[%s170 + $0x147] sm:$0x1]
      %v690 = vld [vmem:[%s170 + $0x15f] sm:$0x1]
      %v691 = vld [vmem:[%s170 + $0x177] sm:$0x1]
      %v692 = vld [vmem:[%s170 + $0x18f] sm:$0x1]
      %v693 = vld [vmem:[%s170 + $0x1a7] sm:$0x1]
      %694 = vst.msk [vmem:[%s170 + $0x11] sm:$0x1] %vm657, %v676
      %695 = vst.msk [vmem:[%s170 + $0x29] sm:$0x1] %vm657, %v677
      %696 = vst.msk [vmem:[%s170 + $0x41] sm:$0x1] %vm657, %v678
      %697 = vst.msk [vmem:[%s170 + $0x59] sm:$0x1] %vm657, %v679
      %698 = vst.msk [vmem:[%s170 + $0x71] sm:$0x1] %vm657, %v680
      %699 = vst.msk [vmem:[%s170 + $0x89] sm:$0x1] %vm657, %v681
      %700 = vst.msk [vmem:[%s170 + $0xa1] sm:$0x1] %vm657, %v682
      %701 = vst.msk [vmem:[%s170 + $0xb9] sm:$0x1] %vm657, %v683
      %702 = vst.msk [vmem:[%s170 + $0xd1] sm:$0x1] %vm657, %v684
      %703 = vst.msk [vmem:[%s170 + $0xe9] sm:$0x1] %vm657, %v685
      %704 = vst.msk [vmem:[%s170 + $0x101] sm:$0x1] %vm657, %v686
      %705 = vst.msk [vmem:[%s170 + $0x119] sm:$0x1] %vm657, %v687
      %706 = vst.msk [vmem:[%s170 + $0x131] sm:$0x1] %vm657, %v688
      %707 = vst.msk [vmem:[%s170 + $0x149] sm:$0x1] %vm657, %v689
      %708 = vst.msk [vmem:[%s170 + $0x161] sm:$0x1] %vm657, %v690
      %709 = vst.msk [vmem:[%s170 + $0x179] sm:$0x1] %vm657, %v691
      %710 = vst.msk [vmem:[%s170 + $0x191] sm:$0x1] %vm657, %v692
      %711 = vst.msk [vmem:[%s170 + $0x1a9] sm:$0x1] %vm657, %v693
      %p712 = scmp.lt.s32.totalorder %s14, 1
      %s713 = scalar_select %p712, %s14, 1
      %s714 = smul.addr %s713, 54
      %s715 = smul.addr %s714, 8
      %s716 = scalar_lea.vmem %s3, %s715
      // Predicated region
      $region33: #{_lambda_.4} parent=31 // pred_check
        %p717 = pneg %p100
      $region34: #{_lambda_.4} parent=31 // pred_check_branch
        %719 = sbr.rel (%p717) target = $region36
      $region35: #{_lambda_.4} parent=31 // pred_region
        _
      $region36: #{_lambda_.4} parent=31 // pred_fallthru
        _
    $region32: #{_lambda_.4} parent=5 // pred_fallthru
      _
    %p720 = scmp.le.s32.totalorder 2, %s9
    // Predicated region
    $region37: #{_lambda_.4} parent=5 // pred_check
      %p721 = pneg %p720
    $region38: #{_lambda_.4} parent=5 // pred_check_branch
      %723 = sbr.rel (%p721) target = $region40
    $region39: #{_lambda_.4} parent=5 // pred_region
      %s724 = ssub.s32 %s9, 2
      // Predicated region
      $region41: #{_lambda_.4} parent=39 // pred_check
        %p725 = pneg %p106
      $region42: #{_lambda_.4} parent=39 // pred_check_branch
        %727 = sbr.rel (%p725) target = $region44
      $region43: #{_lambda_.4} parent=39 // pred_region
        %p728 = scmp.lt.s32.totalorder %s15, 1
        %s729 = scalar_select %p728, %s15, 1
        %s730 = smul.addr %s729, 54
        %s731 = smul.addr %s730, 8
        %s732 = scalar_lea.vmem %s3, %s731
      $region44: #{_lambda_.4} parent=39 // pred_fallthru
        _
    $region40: #{_lambda_.4} parent=5 // pred_fallthru
      _
  $region6: #{_lambda_.4} parent=0 // loop_footer
    %s13 = sadd.s32 1, %s9
  $region7: #{_lambda_.4} parent=0 // loop_footer_branch
    %8 = sbr.rel target = $region3
  $region8: #{_lambda_.4} parent=0 // loop_exit
    _

// kernel: _lambda_.6
$region0: #{_lambda_.6}
  #allocation0 [shape = 'u32[]', space=smem, size = 0x4, offset = 0x4, fixed_abs, tag = 'smem constant byte address 0x4 - core index']
  #allocation1 [shape = 'u32[144,128]{1,0:T(1,128)}', space=vmem, size = 0x12000, scoped, tag = 'internal scratch']
  #allocation2 [shape = 'f32[64,36]{1,0:T(8,128)}', space=vmem, size = 0x8000, scoped, tag = 'scratch operand']
  %s0 = inlined_call_operand.vmem [shape: f32[2,10,10,4], index: 0, kind: input, shape index: {}]
  %s1 = inlined_call_operand.vmem [shape: f32[36,8], index: 1, kind: input, shape index: {}]
  %s2 = inlined_call_operand.vmem [shape: f32[1,8], index: 2, kind: input, shape index: {}]
  %s3 = inlined_call_operand.vmem [shape: f32[2,8,8,8], index: 3, kind: output, shape index: {}]
  %s4 = sld [smem:[#allocation0]]
  $region45: #{_lambda_.6} parent=0
    _
  %s6 = ssub.s32 1, %s4
  %s7 = scalar_select 0, %s6, %s4
  loop: start=0, step=1, limit=4
  $region2: #{_lambda_.6} parent=0 // loop_pre_header
    _
  $region3: #{_lambda_.6} parent=0 // loop_header
    %s9 = sphi 0, %s13
    %p10 = scmp.ge.s32.totalorder %s9, 4
    %s19 = sphi 0, %s21
    %s22 = sphi 0, %s19
    %s23 = sphi 0, %s22
    %s39 = sphi 0, %s23
    %s43 = sphi 0, %s43
    %s45 = sphi 0, %s43
    %s46 = sphi 0, %s45
    %s60 = sphi 0, %s46
    %s64 = sphi 0, %s64
    %s66 = sphi 0, %s64
    %s67 = sphi 0, %s66
    %s81 = sphi 0, %s67
    %s87 = sphi 0, %s89
    %s90 = sphi 0, %s87
    %s91 = sphi 0, %s90
    %s107 = sphi 0, %s91
  $region4: #{_lambda_.6} parent=0 // loop_header_branch
    %12 = sbr.rel (%p10) target = $region8
  $region5: #{_lambda_.6} parent=0 // loop_body
    %s14 = ssub.s32 %s9, 1
    %s15 = ssub.s32 %s9, 2
    %s16 = sadd.s32 %s9, 1
    %s17 = ssub.s32 %s9, %s16
    %p18 = scmp.eq.s32.totalorder %s17, 0
    %s20 = sadd.s32 %s19, 1
    %s21 = scalar_select %p18, %s19, %s20
    %p24 = pneg %p18
    %p25 = scmp.eq.s32.totalorder %s9, 1
    %p26 = por %p24, %p25
    %p27 = scmp.ne.s32.totalorder %s19, %s22
    %p28 = scmp.eq.s32.totalorder %s9, 0
    %p29 = por %p27, %p28
    %p30 = scmp.ne.s32.totalorder %s19, %s22
    %p31 = scmp.eq.s32.totalorder %s14, 1
    %p32 = por %p30, %p31
    %p33 = scmp.ne.s32.totalorder %s22, %s23
    %p34 = scmp.eq.s32.totalorder %s14, 0
    %p35 = por %p33, %p34
    %p36 = scmp.ne.s32.totalorder %s22, %s23
    %p37 = scmp.eq.s32.totalorder %s15, 1
    %p38 = por %p36, %p37
    %p40 = scmp.ne.s32.totalorder %s23, %s39
    %p41 = scmp.eq.s32.totalorder %s15, 0
    %p42 = por %p40, %p41
    %s44 = sadd.s32 %s43, 1
    %p47 = scmp.eq.s32.totalorder %s9, 1
    %p48 = scmp.ne.s32.totalorder %s43, %s45
    %p49 = scmp.eq.s32.totalorder %s9, 0
    %p50 = por %p48, %p49
    %p51 = scmp.ne.s32.totalorder %s43, %s45
    %p52 = scmp.eq.s32.totalorder %s14, 1
    %p53 = por %p51, %p52
    %p54 = scmp.ne.s32.totalorder %s45, %s46
    %p55 = scmp.eq.s32.totalorder %s14, 0
    %p56 = por %p54, %p55
    %p57 = scmp.ne.s32.totalorder %s45, %s46
    %p58 = scmp.eq.s32.totalorder %s15, 1
    %p59 = por %p57, %p58
    %p61 = scmp.ne.s32.totalorder %s46, %s60
    %p62 = scmp.eq.s32.totalorder %s15, 0
    %p63 = por %p61, %p62
    %s65 = sadd.s32 %s64, 1
    %p68 = scmp.eq.s32.totalorder %s9, 1
    %p69 = scmp.ne.s32.totalorder %s64, %s66
    %p70 = scmp.eq.s32.totalorder %s9, 0
    %p71 = por %p69, %p70
    %p72 = scmp.ne.s32.totalorder %s64, %s66
    %p73 = scmp.eq.s32.totalorder %s14, 1
    %p74 = por %p72, %p73
    %p75 = scmp.ne.s32.totalorder %s66, %s67
    %p76 = scmp.eq.s32.totalorder %s14, 0
    %p77 = por %p75, %p76
    %p78 = scmp.ne.s32.totalorder %s66, %s67
    %p79 = scmp.eq.s32.totalorder %s15, 1
    %p80 = por %p78, %p79
    %p82 = scmp.ne.s32.totalorder %s67, %s81
    %p83 = scmp.eq.s32.totalorder %s15, 0
    %p84 = por %p82, %p83
    %s85 = ssub.s32 %s9, %s16
    %p86 = scmp.eq.s32.totalorder %s85, 0
    %s88 = sadd.s32 %s87, 1
    %s89 = scalar_select %p86, %s87, %s88
    %p92 = pneg %p86
    %p93 = scmp.eq.s32.totalorder %s9, 1
    %p94 = por %p92, %p93
    %p95 = scmp.ne.s32.totalorder %s87, %s90
    %p96 = scmp.eq.s32.totalorder %s9, 0
    %p97 = por %p95, %p96
    %p98 = scmp.ne.s32.totalorder %s87, %s90
    %p99 = scmp.eq.s32.totalorder %s14, 1
    %p100 = por %p98, %p99
    %p101 = scmp.ne.s32.totalorder %s90, %s91
    %p102 = scmp.eq.s32.totalorder %s14, 0
    %p103 = por %p101, %p102
    %p104 = scmp.ne.s32.totalorder %s90, %s91
    %p105 = scmp.eq.s32.totalorder %s15, 1
    %p106 = por %p104, %p105
    %p108 = scmp.ne.s32.totalorder %s91, %s107
    %p109 = scmp.eq.s32.totalorder %s15, 0
    %p110 = por %p108, %p109
    %p111 = scmp.le.s32.totalorder 1, %s9
    %p112 = scmp.lt.s32.totalorder %s9, 3
    %p113 = pnand %p111, %p112
    %p114 = pneg %p113
    // Predicated region
    $region9: #{_lambda_.6} parent=5 // pred_check
      _
    $region10: #{_lambda_.6} parent=5 // pred_check_branch
      %116 = sbr.rel (%p113) target = $region12
    $region11: #{_lambda_.6} parent=5 // pred_region
      %s117 = ssub.s32 %s9, 1
      // Predicated region
      $region13: #{_lambda_.6} parent=11 // pred_check
        %p118 = pneg %p56
      $region14: #{_lambda_.6} parent=11 // pred_check_branch
        %120 = sbr.rel (%p118) target = $region16
      $region15: #{_lambda_.6} parent=11 // pred_region
        _
      $region16: #{_lambda_.6} parent=11 // pred_fallthru
        _
      // Predicated region
      $region17: #{_lambda_.6} parent=11 // pred_check
        %p121 = pneg %p77
      $region18: #{_lambda_.6} parent=11 // pred_check_branch
        %123 = sbr.rel (%p121) target = $region20
      $region19: #{_lambda_.6} parent=11 // pred_region
        _
      $region20: #{_lambda_.6} parent=11 // pred_fallthru
        _
    $region12: #{_lambda_.6} parent=5 // pred_fallthru
      _
    %p124 = scmp.lt.s32.totalorder %s9, 2
    // Predicated region
    $region21: #{_lambda_.6} parent=5 // pred_check
      %p125 = pneg %p124
    $region22: #{_lambda_.6} parent=5 // pred_check_branch
      %127 = sbr.rel (%p125) target = $region24
    $region23: #{_lambda_.6} parent=5 // pred_region
      // Predicated region
      $region25: #{_lambda_.6} parent=23 // pred_check
        %p128 = pneg %p29
      $region26: #{_lambda_.6} parent=23 // pred_check_branch
        %130 = sbr.rel (%p128) target = $region28
      $region27: #{_lambda_.6} parent=23 // pred_region
        %p131 = scmp.lt.s32.totalorder %s9, 1
        %s132 = scalar_select %p131, %s9, 1
        %s133 = smul.addr %s132, 20
        %s134 = smul.addr %s133, 8
        %s135 = scalar_lea.vmem %s0, %s134
      $region28: #{_lambda_.6} parent=23 // pred_fallthru
        _
    $region24: #{_lambda_.6} parent=5 // pred_fallthru
      _
    %p136 = scmp.le.s32.totalorder 1, %s9
    %p137 = scmp.lt.s32.totalorder %s9, 3
    %p138 = pnand %p136, %p137
    %p139 = pneg %p138
    // Predicated region
    $region29: #{_lambda_.6} parent=5 // pred_check
      _
    $region30: #{_lambda_.6} parent=5 // pred_check_branch
      %141 = sbr.rel (%p138) target = $region32
    $region31: #{_lambda_.6} parent=5 // pred_region
      %s142 = ssub.s32 %s9, 1
      %p143 = scmp.lt.s32.totalorder %s14, 1
      %s144 = scalar_select %p143, %s14, 1
      %s145 = smul.addr %s144, 20
      %s146 = smul.addr %s145, 8
      %s147 = scalar_lea.vmem %s0, %s146
      %p148 = pneg %p35
      %p149 = pneg %p32
      %p150 = pneg %p56
      %p151 = pneg %p53
      %p152 = pneg %p77
      %p153 = pneg %p74
      %p154 = pneg %p103
      %p155 = pneg %p100
      %p156 = scmp.lt.s32.totalorder %s14, 1
      %s157 = scalar_select %p156, %s14, 1
      %s158 = smul.addr %s157, 8
      %s159 = smul.addr %s158, 8
      %s160 = scalar_lea.vmem %s3, %s159
      %p161 = scmp.lt.s32.totalorder %s14, 1
      %s162 = scalar_select %p161, %s14, 1
      %s163 = smul.addr %s162, 20
      %s164 = smul.addr %s163, 8
      %s165 = scalar_lea.vmem %s0, %s164
      %p166 = scmp.lt.s32.totalorder %s14, 1
      %s167 = scalar_select %p166, %s14, 1
      %s168 = smul.addr %s167, 8
      %s169 = smul.addr %s168, 8
      %s170 = scalar_lea.vmem %s3, %s169
      %v171 = vld [vmem:[%s165] sm:$0xff]
      %v172 = vld [vmem:[%s165 + $0x8] sm:$0x3]
      %v173 = vld [vmem:[%s165 + $0x10] sm:$0xff]
      %v174 = vld [vmem:[%s165 + $0x18] sm:$0x3]
      %v175 = vld [vmem:[%s165 + $0x20] sm:$0xff]
      %v176 = vld [vmem:[%s165 + $0x28] sm:$0x3]
      %v177 = vld [vmem:[%s165 + $0x30] sm:$0xff]
      %v178 = vld [vmem:[%s165 + $0x38] sm:$0x3]
      %v179 = vld [vmem:[%s165 + $0x40] sm:$0xff]
      %v180 = vld [vmem:[%s165 + $0x48] sm:$0x3]
      %v181 = vld [vmem:[%s165 + $0x50] sm:$0xff]
      %v182 = vld [vmem:[%s165 + $0x58] sm:$0x3]
      %v183 = vld [vmem:[%s165 + $0x60] sm:$0xff]
      %v184 = vld [vmem:[%s165 + $0x68] sm:$0x3]
      %v185 = vld [vmem:[%s165 + $0x70] sm:$0xff]
      %v186 = vld [vmem:[%s165 + $0x78] sm:$0x3]
      %v187 = vld [vmem:[%s165 + $0x80] sm:$0xff]
      %v188 = vld [vmem:[%s165 + $0x88] sm:$0x3]
      %v189 = vld [vmem:[%s165 + $0x90] sm:$0xff]
      %v190 = vld [vmem:[%s165 + $0x98] sm:$0x3]
      %vm191 = vcmask 31744
      %192 = vst.msk [vmem:[#allocation2] sm:$0xff] %vm191, %v171
      %193 = vst.msk [vmem:[#allocation2 + $0x8] sm:$0xff] %vm191, %v173
      %194 = vst.msk [vmem:[#allocation2 + $0x10] sm:$0xff] %vm191, %v175
      %195 = vst.msk [vmem:[#allocation2 + $0x18] sm:$0xff] %vm191, %v177
      %196 = vst.msk [vmem:[#allocation2 + $0x20] sm:$0xff] %vm191, %v179
      %197 = vst.msk [vmem:[#allocation2 + $0x28] sm:$0xff] %vm191, %v181
      %198 = vst.msk [vmem:[#allocation2 + $0x30] sm:$0xff] %vm191, %v183
      %199 = vst.msk [vmem:[#allocation2 + $0x38] sm:$0xff] %vm191, %v185
      %vm216 = vcmask 1046528
      %v217 = vrot.slane %v171, 1
      %v218 = vrot.slane %v172, 1
      %v219 = vsel %vm216, %v217, %v218
      %v220 = vrot.slane %v173, 1
      %v221 = vrot.slane %v174, 1
      %v222 = vsel %vm216, %v220, %v221
      %v223 = vrot.slane %v175, 1
      %v224 = vrot.slane %v176, 1
      %v225 = vsel %vm216, %v223, %v224
      %v226 = vrot.slane %v177, 1
      %v227 = vrot.slane %v178, 1
      %v228 = vsel %vm216, %v226, %v227
      %v229 = vrot.slane %v179, 1
      %v230 = vrot.slane %v180, 1
      %v231 = vsel %vm216, %v229, %v230
      %v232 = vrot.slane %v181, 1
      %v233 = vrot.slane %v182, 1
      %v234 = vsel %vm216, %v232, %v233
      %v235 = vrot.slane %v183, 1
      %v236 = vrot.slane %v184, 1
      %v237 = vsel %vm216, %v235, %v236
      %v238 = vrot.slane %v185, 1
      %v239 = vrot.slane %v186, 1
      %v240 = vsel %vm216, %v238, %v239
      %241 = vrot.lane.b32.xlu0 %v219, 4
      %v242 = vpop.permute.xlu0 %241
      %243 = vrot.lane.b32.xlu0 %v222, 4
      %v244 = vpop.permute.xlu0 %243
      %245 = vrot.lane.b32.xlu0 %v225, 4
      %v246 = vpop.permute.xlu0 %245
      %247 = vrot.lane.b32.xlu0 %v228, 4
      %v248 = vpop.permute.xlu0 %247
      %249 = vrot.lane.b32.xlu0 %v231, 4
      %v250 = vpop.permute.xlu0 %249
      %251 = vrot.lane.b32.xlu0 %v234, 4
      %v252 = vpop.permute.xlu0 %251
      %253 = vrot.lane.b32.xlu0 %v237, 4
      %v254 = vpop.permute.xlu0 %253
      %255 = vrot.lane.b32.xlu0 %v240, 4
      %v256 = vpop.permute.xlu0 %255
      %vm265 = vcmask 64544
      %266 = vst.msk [vmem:[#allocation2] sm:$0xff] %vm265, %v242
      %267 = vst.msk [vmem:[#allocation2 + $0x8] sm:$0xff] %vm265, %v244
      %268 = vst.msk [vmem:[#allocation2 + $0x10] sm:$0xff] %vm265, %v246
      %269 = vst.msk [vmem:[#allocation2 + $0x18] sm:$0xff] %vm265, %v248
      %270 = vst.msk [vmem:[#allocation2 + $0x20] sm:$0xff] %vm265, %v250
      %271 = vst.msk [vmem:[#allocation2 + $0x28] sm:$0xff] %vm265, %v252
      %272 = vst.msk [vmem:[#allocation2 + $0x30] sm:$0xff] %vm265, %v254
      %273 = vst.msk [vmem:[#allocation2 + $0x38] sm:$0xff] %vm265, %v256
      %vm274 = vcmask 1045504
      %v275 = vrot.slane %v171, 2
      %v276 = vrot.slane %v172, 2
      %v277 = vsel %vm274, %v275, %v276
      %v278 = vrot.slane %v173, 2
      %v279 = vrot.slane %v174, 2
      %v280 = vsel %vm274, %v278, %v279
      %v281 = vrot.slane %v175, 2
      %v282 = vrot.slane %v176, 2
      %v283 = vsel %vm274, %v281, %v282
      %v284 = vrot.slane %v177, 2
      %v285 = vrot.slane %v178, 2
      %v286 = vsel %vm274, %v284, %v285
      %v287 = vrot.slane %v179, 2
      %v288 = vrot.slane %v180, 2
      %v289 = vsel %vm274, %v287, %v288
      %v290 = vrot.slane %v181, 2
      %v291 = vrot.slane %v182, 2
      %v292 = vsel %vm274, %v290, %v291
      %v293 = vrot.slane %v183, 2
      %v294 = vrot.slane %v184, 2
      %v295 = vsel %vm274, %v293, %v294
      %v296 = vrot.slane %v185, 2
      %v297 = vrot.slane %v186, 2
      %v298 = vsel %vm274, %v296, %v297
      %299 = vrot.lane.b32.xlu0 %v277, 8
      %v300 = vpop.permute.xlu0 %299
      %301 = vrot.lane.b32.xlu0 %v280, 8
      %v302 = vpop.permute.xlu0 %301
      %303 = vrot.lane.b32.xlu0 %v283, 8
      %v304 = vpop.permute.xlu0 %303
      %305 = vrot.lane.b32.xlu0 %v286, 8
      %v306 = vpop.permute.xlu0 %305
      %307 = vrot.lane.b32.xlu0 %v289, 8
      %v308 = vpop.permute.xlu0 %307
      %309 = vrot.lane.b32.xlu0 %v292, 8
      %v310 = vpop.permute.xlu0 %309
      %311 = vrot.lane.b32.xlu0 %v295, 8
      %v312 = vpop.permute.xlu0 %311
      %313 = vrot.lane.b32.xlu0 %v298, 8
      %v314 = vpop.permute.xlu0 %313
      %vm323 = vcmask 97344
      %324 = vst.msk [vmem:[#allocation2] sm:$0xff] %vm323, %v300
      %325 = vst.msk [vmem:[#allocation2 + $0x8] sm:$0xff] %vm323, %v302
      %326 = vst.msk [vmem:[#allocation2 + $0x10] sm:$0xff] %vm323, %v304
      %327 = vst.msk [vmem:[#allocation2 + $0x18] sm:$0xff] %vm323, %v306
      %328 = vst.msk [vmem:[#allocation2 + $0x20] sm:$0xff] %vm323, %v308
      %329 = vst.msk [vmem:[#allocation2 + $0x28] sm:$0xff] %vm323, %v310
      %330 = vst.msk [vmem:[#allocation2 + $0x30] sm:$0xff] %vm323, %v312
      %331 = vst.msk [vmem:[#allocation2 + $0x38] sm:$0xff] %vm323, %v314
      %333 = vrot.lane.b32.xlu0 %v173, 12
      %v334 = vpop.permute.xlu0 %333
      %335 = vrot.lane.b32.xlu0 %v175, 12
      %v336 = vpop.permute.xlu0 %335
      %337 = vrot.lane.b32.xlu0 %v177, 12
      %v338 = vpop.permute.xlu0 %337
      %339 = vrot.lane.b32.xlu0 %v179, 12
      %v340 = vpop.permute.xlu0 %339
      %341 = vrot.lane.b32.xlu0 %v181, 12
      %v342 = vpop.permute.xlu0 %341
      %343 = vrot.lane.b32.xlu0 %v183, 12
      %v344 = vpop.permute.xlu0 %343
      %345 = vrot.lane.b32.xlu0 %v185, 12
      %v346 = vpop.permute.xlu0 %345
      %347 = vrot.lane.b32.xlu0 %v187, 12
      %v348 = vpop.permute.xlu0 %347
      %vm357 = vcmask 130144
      %358 = vst.msk [vmem:[#allocation2] sm:$0xff] %vm357, %v334
      %359 = vst.msk [vmem:[#allocation2 + $0x8] sm:$0xff] %vm357, %v336
      %360 = vst.msk [vmem:[#allocation2 + $0x10] sm:$0xff] %vm357, %v338
      %361 = vst.msk [vmem:[#allocation2 + $0x18] sm:$0xff] %vm357, %v340
      %362 = vst.msk [vmem:[#allocation2 + $0x20] sm:$0xff] %vm357, %v342
      %363 = vst.msk [vmem:[#allocation2 + $0x28] sm:$0xff] %vm357, %v344
      %364 = vst.msk [vmem:[#allocation2 + $0x30] sm:$0xff] %vm357, %v346
      %365 = vst.msk [vmem:[#allocation2 + $0x38] sm:$0xff] %vm357, %v348
      %v367 = vrot.slane %v187, 1
      %v368 = vrot.slane %v188, 1
      %v369 = vsel %vm216, %v367, %v368
      %370 = vrot.lane.b32.xlu0 %v222, 16
      %v371 = vpop.permute.xlu0 %370
      %372 = vrot.lane.b32.xlu0 %v225, 16
      %v373 = vpop.permute.xlu0 %372
      %374 = vrot.lane.b32.xlu0 %v228, 16
      %v375 = vpop.permute.xlu0 %374
      %376 = vrot.lane.b32.xlu0 %v231, 16
      %v377 = vpop.permute.xlu0 %376
      %378 = vrot.lane.b32.xlu0 %v234, 16
      %v379 = vpop.permute.xlu0 %378
      %380 = vrot.lane.b32.xlu0 %v237, 16
      %v381 = vpop.permute.xlu0 %380
      %382 = vrot.lane.b32.xlu0 %v240, 16
      %v383 = vpop.permute.xlu0 %382
      %384 = vrot.lane.b32.xlu0 %v369, 16
      %v385 = vpop.permute.xlu0 %384
      %vm394 = vcmask 162944
      %395 = vst.msk [vmem:[#allocation2] sm:$0xff] %vm394, %v371
      %396 = vst.msk [vmem:[#allocation2 + $0x8] sm:$0xff] %vm394, %v373
      %397 = vst.msk [vmem:[#allocation2 + $0x10] sm:$0xff] %vm394, %v375
      %398 = vst.msk [vmem:[#allocation2 + $0x18] sm:$0xff] %vm394, %v377
      %399 = vst.msk [vmem:[#allocation2 + $0x20] sm:$0xff] %vm394, %v379
      %400 = vst.msk [vmem:[#allocation2 + $0x28] sm:$0xff] %vm394, %v381
      %401 = vst.msk [vmem:[#allocation2 + $0x30] sm:$0xff] %vm394, %v383
      %402 = vst.msk [vmem:[#allocation2 + $0x38] sm:$0xff] %vm394, %v385
      %v403 = vrot.slane %v187, 2
      %v404 = vrot.slane %v188, 2
      %v405 = vsel %vm274, %v403, %v404
      %406 = vrot.lane.b32.xlu0 %v280, 20
      %v407 = vpop.permute.xlu0 %406
      %408 = vrot.lane.b32.xlu0 %v283, 20
      %v409 = vpop.permute.xlu0 %408
      %410 = vrot.lane.b32.xlu0 %v286, 20
      %v411 = vpop.permute.xlu0 %410
      %412 = vrot.lane.b32.xlu0 %v289, 20
      %v413 = vpop.permute.xlu0 %412
      %414 = vrot.lane.b32.xlu0 %v292, 20
      %v415 = vpop.permute.xlu0 %414
      %416 = vrot.lane.b32.xlu0 %v295, 20
      %v417 = vpop.permute.xlu0 %416
      %418 = vrot.lane.b32.xlu0 %v298, 20
      %v419 = vpop.permute.xlu0 %418
      %420 = vrot.lane.b32.xlu0 %v405, 20
      %v421 = vpop.permute.xlu0 %420
      %vm430 = vcmask 195744
      %431 = vst.msk [vmem:[#allocation2] sm:$0xff] %vm430, %v407
      %432 = vst.msk [vmem:[#allocation2 + $0x8] sm:$0xff] %vm430, %v409
      %433 = vst.msk [vmem:[#allocation2 + $0x10] sm:$0xff] %vm430, %v411
      %434 = vst.msk [vmem:[#allocation2 + $0x18] sm:$0xff] %vm430, %v413
      %435 = vst.msk [vmem:[#allocation2 + $0x20] sm:$0xff] %vm430, %v415
      %436 = vst.msk [vmem:[#allocation2 + $0x28] sm:$0xff] %vm430, %v417
      %437 = vst.msk [vmem:[#allocation2 + $0x30] sm:$0xff] %vm430, %v419
      %438 = vst.msk [vmem:[#allocation2 + $0x38] sm:$0xff] %vm430, %v421
      %440 = vrot.lane.b32.xlu0 %v175, 24
      %v441 = vpop.permute.xlu0 %440
      %442 = vrot.lane.b32.xlu0 %v177, 24
      %v443 = vpop.permute.xlu0 %442
      %444 = vrot.lane.b32.xlu0 %v179, 24
      %v445 = vpop.permute.xlu0 %444
      %446 = vrot.lane.b32.xlu0 %v181, 24
      %v447 = vpop.permute.xlu0 %446
      %448 = vrot.lane.b32.xlu0 %v183, 24
      %v449 = vpop.permute.xlu0 %448
      %450 = vrot.lane.b32.xlu0 %v185, 24
      %v451 = vpop.permute.xlu0 %450
      %452 = vrot.lane.b32.xlu0 %v187, 24
      %v453 = vpop.permute.xlu0 %452
      %454 = vrot.lane.b32.xlu0 %v189, 24
      %v455 = vpop.permute.xlu0 %454
      %vm464 = vcmask 228544
      %465 = vst.msk [vmem:[#allocation2] sm:$0xff] %vm464, %v441
      %466 = vst.msk [vmem:[#allocation2 + $0x8] sm:$0xff] %vm464, %v443
      %467 = vst.msk [vmem:[#allocation2 + $0x10] sm:$0xff] %vm464, %v445
      %468 = vst.msk [vmem:[#allocation2 + $0x18] sm:$0xff] %vm464, %v447
      %469 = vst.msk [vmem:[#allocation2 + $0x20] sm:$0xff] %vm464, %v449
      %470 = vst.msk [vmem:[#allocation2 + $0x28] sm:$0xff] %vm464, %v451
      %471 = vst.msk [vmem:[#allocation2 + $0x30] sm:$0xff] %vm464, %v453
      %472 = vst.msk [vmem:[#allocation2 + $0x38] sm:$0xff] %vm464, %v455
      %v474 = vrot.slane %v189, 1
      %v475 = vrot.slane %v190, 1
      %v476 = vsel %vm216, %v474, %v475
      %477 = vrot.lane.b32.xlu0 %v225, 28
      %v478 = vpop.permute.xlu0 %477
      %479 = vrot.lane.b32.xlu0 %v228, 28
      %v480 = vpop.permute.xlu0 %479
      %481 = vrot.lane.b32.xlu0 %v231, 28
      %v482 = vpop.permute.xlu0 %481
      %483 = vrot.lane.b32.xlu0 %v234, 28
      %v484 = vpop.permute.xlu0 %483
      %485 = vrot.lane.b32.xlu0 %v237, 28
      %v486 = vpop.permute.xlu0 %485
      %487 = vrot.lane.b32.xlu0 %v240, 28
      %v488 = vpop.permute.xlu0 %487
      %489 = vrot.lane.b32.xlu0 %v369, 28
      %v490 = vpop.permute.xlu0 %489
      %491 = vrot.lane.b32.xlu0 %v476, 28
      %v492 = vpop.permute.xlu0 %491
      %vm501 = vcmask 261344
      %502 = vst.msk [vmem:[#allocation2] sm:$0xff] %vm501, %v478
      %503 = vst.msk [vmem:[#allocation2 + $0x8] sm:$0xff] %vm501, %v480
      %504 = vst.msk [vmem:[#allocation2 + $0x10] sm:$0xff] %vm501, %v482
      %505 = vst.msk [vmem:[#allocation2 + $0x18] sm:$0xff] %vm501, %v484
      %506 = vst.msk [vmem:[#allocation2 + $0x20] sm:$0xff] %vm501, %v486
      %507 = vst.msk [vmem:[#allocation2 + $0x28] sm:$0xff] %vm501, %v488
      %508 = vst.msk [vmem:[#allocation2 + $0x30] sm:$0xff] %vm501, %v490
      %509 = vst.msk [vmem:[#allocation2 + $0x38] sm:$0xff] %vm501, %v492
      %v510 = vrot.slane %v189, 2
      %v511 = vrot.slane %v190, 2
      %v512 = vsel %vm274, %v510, %v511
      %513 = vrot.lane.b32.xlu0 %v283, 32
      %v514 = vpop.permute.xlu0 %513
      %515 = vrot.lane.b32.xlu0 %v286, 32
      %v516 = vpop.permute.xlu0 %515
      %517 = vrot.lane.b32.xlu0 %v289, 32
      %v518 = vpop.permute.xlu0 %517
      %519 = vrot.lane.b32.xlu0 %v292, 32
      %v520 = vpop.permute.xlu0 %519
      %521 = vrot.lane.b32.xlu0 %v295, 32
      %v522 = vpop.permute.xlu0 %521
      %523 = vrot.lane.b32.xlu0 %v298, 32
      %v524 = vpop.permute.xlu0 %523
      %525 = vrot.lane.b32.xlu0 %v405, 32
      %v526 = vpop.permute.xlu0 %525
      %527 = vrot.lane.b32.xlu0 %v512, 32
      %v528 = vpop.permute.xlu0 %527
      %vm537 = vcmask 294144
      %538 = vst.msk [vmem:[#allocation2] sm:$0xff] %vm537, %v514
      %539 = vst.msk [vmem:[#allocation2 + $0x8] sm:$0xff] %vm537, %v516
      %540 = vst.msk [vmem:[#allocation2 + $0x10] sm:$0xff] %vm537, %v518
      %541 = vst.msk [vmem:[#allocation2 + $0x18] sm:$0xff] %vm537, %v520
      %542 = vst.msk [vmem:[#allocation2 + $0x20] sm:$0xff] %vm537, %v522
      %543 = vst.msk [vmem:[#allocation2 + $0x28] sm:$0xff] %vm537, %v524
      %544 = vst.msk [vmem:[#allocation2 + $0x30] sm:$0xff] %vm537, %v526
      %545 = vst.msk [vmem:[#allocation2 + $0x38] sm:$0xff] %vm537, %v528
      %v546 = vld [vmem:[#allocation2] sm:$0xff]
      %v547 = vld [vmem:[#allocation2 + $0x8] sm:$0xff]
      %v548 = vld [vmem:[#allocation2 + $0x10] sm:$0xff]
      %v549 = vld [vmem:[#allocation2 + $0x18] sm:$0xff]
      %v550 = vld [vmem:[#allocation2 + $0x20] sm:$0xff]
      %v551 = vld [vmem:[#allocation2 + $0x28] sm:$0xff]
      %v552 = vld [vmem:[#allocation2 + $0x30] sm:$0xff]
      %v553 = vld [vmem:[#allocation2 + $0x38] sm:$0xff]
      %v554 = vld [vmem:[%s1] sm:$0xff]
      %v555 = vld [vmem:[%s1 + $0x8] sm:$0xff]
      %v556 = vld [vmem:[%s1 + $0x10] sm:$0xff]
      %v557 = vld [vmem:[%s1 + $0x18] sm:$0xff]
      %v558 = vld [vmem:[%s1 + $0x20] sm:$0xf]
      %v559 = vld [vmem:[%s2] sm:$0x1]
      %v561 = vlaneseq
      %v562 = vshrl.u32 %v561, 7
      %v563 = vsub.s32 0, %v562
      %v564 = vrot.slane %v559, %v563
      %vm566 = vcmask 293888
      %v568 = vsel %vm566, %v546, 0
      %v571 = vsel %vm566, %v547, 0
      %v574 = vsel %vm566, %v548, 0
      %v577 = vsel %vm566, %v549, 0
      %v580 = vsel %vm566, %v550, 0
      %v583 = vsel %vm566, %v551, 0
      %v586 = vsel %vm566, %v552, 0
      %v589 = vsel %vm566, %v553, 0
      %vm591 = vcmask 1043456
      %v593 = vsel %vm591, %v558, 0
      %595 = vmatprep.subr.mxu0 0.0
      %596 = vmatpush1.msra.mxu0 0.0
      %597 = vmatprep.subr.mxu0 0.0
      %598 = vmatpush1.msra.mxu0 0.0
      %599 = vmatprep.subr.mxu0 0.0
      %600 = vmatpush1.msra.mxu0 0.0
      %601 = vmatprep.subr.mxu0 0.0
      %602 = vmatpush1.msra.mxu0 0.0
      %603 = vmatprep.subr.mxu0 0.0
      %604 = vmatpush1.msra.mxu0 0.0
      %605 = vmatprep.subr.mxu0 0.0
      %606 = vmatpush1.msra.mxu0 0.0
      %607 = vmatprep.subr.mxu0 0.0
      %608 = vmatpush1.msra.mxu0 0.0
      %609 = vmatprep.subr.mxu0 0.0
      %610 = vmatpush1.msra.mxu0 0.0
      %611 = vmatprep.subr.mxu0 0.0
      %612 = vmatpush1.msra.mxu0 0.0
      %613 = vmatprep.subr.mxu0 0.0
      %614 = vmatpush1.msra.mxu0 0.0
      %615 = vmatprep.subr.mxu0 0.0
      %616 = vmatpush1.msra.mxu0 0.0
      %617 = vmatprep.subr.mxu0 0.0
      %618 = vmatpush1.msra.mxu0 %v593
      %619 = vmatprep.subr.mxu0 0.0
      %620 = vmatpush1.msra.mxu0 %v557
      %621 = vmatprep.subr.mxu0 0.0
      %622 = vmatpush1.msra.mxu0 %v556
      %623 = vmatprep.subr.mxu0 0.0
      %624 = vmatpush1.msra.mxu0 %v555
      %625 = vmatprep.subr.mxu0 0.0
      %626 = vmatpush1.msra.mxu0 %v554
      %627 = vmatprep.subr.mxu0 0.0
      %628 = vmatpush2.msra.mxu0 0.0
      %629 = vmatprep.subr.mxu0 0.0
      %630 = vmatpush2.msra.mxu0 0.0
      %631 = vmatprep.subr.mxu0 0.0
      %632 = vmatpush2.msra.mxu0 0.0
      %633 = vmatprep.subr.mxu0 0.0
      %634 = vmatpush2.msra.mxu0 0.0
      %635 = vmatprep.subr.mxu0 0.0
      %636 = vmatpush2.msra.mxu0 0.0
      %637 = vmatprep.subr.mxu0 0.0
      %638 = vmatpush2.msra.mxu0 0.0
      %639 = vmatprep.subr.mxu0 0.0
      %640 = vmatpush2.msra.mxu0 0.0
      %641 = vmatprep.subr.mxu0 0.0
      %642 = vmatpush2.msra.mxu0 0.0
      %643 = vmatprep.subr.mxu0 0.0
      %644 = vmatpush2.msra.mxu0 0.0
      %645 = vmatprep.subr.mxu0 0.0
      %646 = vmatpush2.msra.mxu0 0.0
      %647 = vmatprep.subr.mxu0 0.0
      %648 = vmatpush2.msra.mxu0 0.0
      %649 = vmatprep.subr.mxu0 0.0
      %650 = vmatpush2.msra.mxu0 0.0
      %651 = vmatprep.subr.mxu0 0.0
      %652 = vmatpush2.msra.mxu0 0.0
      %653 = vmatprep.subr.mxu0 0.0
      %654 = vmatpush2.msra.mxu0 0.0
      %655 = vmatprep.subr.mxu0 0.0
      %656 = vmatpush2.msra.mxu0 0.0
      %657 = vmatprep.subr.mxu0 0.0
      %658 = vmatpush2.msra.mxu0 0.0
      %659 = vmatprep.mubr.f32.mxu0 0.0
      %660 = vmatmul.mubr.f32.gmra.mxu0 %v568
      %v661 = vpop.f32.mrf.mxu0
      %v662 = vadd.f32 %v564, %v661
      %v663 = vpop.f32.mrf.mxu0
      %664 = vmatprep.mubr.f32.mxu0 0.0
      %665 = vmatmul.mubr.f32.gmra.mxu0 %v571
      %v666 = vpop.f32.mrf.mxu0
      %v667 = vadd.f32 %v564, %v666
      %v668 = vpop.f32.mrf.mxu0
      %669 = vmatprep.mubr.f32.mxu0 0.0
      %670 = vmatmul.mubr.f32.gmra.mxu0 %v574
      %v671 = vpop.f32.mrf.mxu0
      %v672 = vadd.f32 %v564, %v671
      %v673 = vpop.f32.mrf.mxu0
      %674 = vmatprep.mubr.f32.mxu0 0.0
      %675 = vmatmul.mubr.f32.gmra.mxu0 %v577
      %v676 = vpop.f32.mrf.mxu0
      %v677 = vadd.f32 %v564, %v676
      %v678 = vpop.f32.mrf.mxu0
      %679 = vmatprep.mubr.f32.mxu0 0.0
      %680 = vmatmul.mubr.f32.gmra.mxu0 %v580
      %v681 = vpop.f32.mrf.mxu0
      %v682 = vadd.f32 %v564, %v681
      %v683 = vpop.f32.mrf.mxu0
      %684 = vmatprep.mubr.f32.mxu0 0.0
      %685 = vmatmul.mubr.f32.gmra.mxu0 %v583
      %v686 = vpop.f32.mrf.mxu0
      %v687 = vadd.f32 %v564, %v686
      %v688 = vpop.f32.mrf.mxu0
      %689 = vmatprep.mubr.f32.mxu0 0.0
      %690 = vmatmul.mubr.f32.gmra.mxu0 %v586
      %v691 = vpop.f32.mrf.mxu0
      %v692 = vadd.f32 %v564, %v691
      %v693 = vpop.f32.mrf.mxu0
      %694 = vmatprep.mubr.f32.mxu0 0.0
      %695 = vmatmul.mubr.f32.gmra.mxu0 %v589
      %v696 = vpop.f32.mrf.mxu0
      %v697 = vadd.f32 %v564, %v696
      %v698 = vpop.f32.mrf.mxu0
      %699 = vdwg.mxu0
      %v700 = vmax.f32 %v662, 0.0
      %v701 = vmax.f32 %v667, 0.0
      %v702 = vmax.f32 %v672, 0.0
      %v703 = vmax.f32 %v677, 0.0
      %v704 = vmax.f32 %v682, 0.0
      %v705 = vmax.f32 %v687, 0.0
      %v706 = vmax.f32 %v692, 0.0
      %v707 = vmax.f32 %v697, 0.0
      %vm708 = vcmask 64512
      %709 = vst.msk [vmem:[%s170] sm:$0xff] %vm708, %v700
      %710 = vst.msk [vmem:[%s170 + $0x8] sm:$0xff] %vm708, %v701
      %711 = vst.msk [vmem:[%s170 + $0x10] sm:$0xff] %vm708, %v702
      %712 = vst.msk [vmem:[%s170 + $0x18] sm:$0xff] %vm708, %v703
      %713 = vst.msk [vmem:[%s170 + $0x20] sm:$0xff] %vm708, %v704
      %714 = vst.msk [vmem:[%s170 + $0x28] sm:$0xff] %vm708, %v705
      %715 = vst.msk [vmem:[%s170 + $0x30] sm:$0xff] %vm708, %v706
      %716 = vst.msk [vmem:[%s170 + $0x38] sm:$0xff] %vm708, %v707
      %p717 = scmp.lt.s32.totalorder %s14, 1
      %s718 = scalar_select %p717, %s14, 1
      %s719 = smul.addr %s718, 8
      %s720 = smul.addr %s719, 8
      %s721 = scalar_lea.vmem %s3, %s720
      // Predicated region
      $region33: #{_lambda_.6} parent=31 // pred_check
        %p722 = pneg %p100
      $region34: #{_lambda_.6} parent=31 // pred_check_branch
        %724 = sbr.rel (%p722) target = $region36
      $region35: #{_lambda_.6} parent=31 // pred_region
        _
      $region36: #{_lambda_.6} parent=31 // pred_fallthru
        _
    $region32: #{_lambda_.6} parent=5 // pred_fallthru
      _
    %p725 = scmp.le.s32.totalorder 2, %s9
    // Predicated region
    $region37: #{_lambda_.6} parent=5 // pred_check
      %p726 = pneg %p725
    $region38: #{_lambda_.6} parent=5 // pred_check_branch
      %728 = sbr.rel (%p726) target = $region40
    $region39: #{_lambda_.6} parent=5 // pred_region
      %s729 = ssub.s32 %s9, 2
      // Predicated region
      $region41: #{_lambda_.6} parent=39 // pred_check
        %p730 = pneg %p106
      $region42: #{_lambda_.6} parent=39 // pred_check_branch
        %732 = sbr.rel (%p730) target = $region44
      $region43: #{_lambda_.6} parent=39 // pred_region
        %p733 = scmp.lt.s32.totalorder %s15, 1
        %s734 = scalar_select %p733, %s15, 1
        %s735 = smul.addr %s734, 8
        %s736 = smul.addr %s735, 8
        %s737 = scalar_lea.vmem %s3, %s736
      $region44: #{_lambda_.6} parent=39 // pred_fallthru
        _
    $region40: #{_lambda_.6} parent=5 // pred_fallthru
      _
  $region6: #{_lambda_.6} parent=0 // loop_footer
    %s13 = sadd.s32 1, %s9
  $region7: #{_lambda_.6} parent=0 // loop_footer_branch
    %8 = sbr.rel target = $region3
  $region8: #{_lambda_.6} parent=0 // loop_exit
    _

// kernel: _lambda_.7
$region0: #{_lambda_.7}
  #allocation0 [shape = 'u32[]', space=smem, size = 0x4, offset = 0x4, fixed_abs, tag = 'smem constant byte address 0x4 - core index']
  #allocation1 [shape = 'u32[144,128]{1,0:T(1,128)}', space=vmem, size = 0x12000, scoped, tag = 'internal scratch']
  %s0 = inlined_call_operand.vmem [shape: f32[2,16,16,4], index: 0, kind: input, shape index: {}]
  %s1 = inlined_call_operand.vmem [shape: f32[4,8], index: 1, kind: input, shape index: {}]
  %s2 = inlined_call_operand.vmem [shape: f32[1,8], index: 2, kind: input, shape index: {}]
  %s3 = inlined_call_operand.vmem [shape: f32[2,8,8,8], index: 3, kind: input, shape index: {}]
  %s4 = inlined_call_operand.hbm [shape: f32[2,8,8,8], index: 4, kind: output, shape index: {}]
  %s5 = sld [smem:[#allocation0]]
  $region49: #{_lambda_.7} parent=0
    _
  %s7 = ssub.s32 1, %s5
  %s8 = scalar_select 0, %s7, %s5
  $region1: #{_lambda_.7} parent=0
    #allocation2 [shape = 'u8[65536]{0}', space=vmem, size = 0x10000, scoped, tag = 'output window, operand 0']
    #allocation3 [shape = 's32[2]{0}', space=sflag, size = 0x8, scoped, tag = 'scoped memory for _lambda_.7']
    %9 = vsyncpa [#allocation3], 0
    %s10 = scalar_lea.sflag [#allocation3], 1
    %11 = vsyncpa %s10, 0
    loop: start=0, step=1, limit=4
    $region2: #{_lambda_.7} parent=1 // loop_pre_header
      _
    $region3: #{_lambda_.7} parent=1 // loop_header
      %s13 = sphi 0, %s17
      %p14 = scmp.ge.s32.totalorder %s13, 4
      %s23 = sphi 0, %s25
      %s26 = sphi 0, %s23
      %s27 = sphi 0, %s26
      %s43 = sphi 0, %s27
      %s47 = sphi 0, %s47
      %s49 = sphi 0, %s47
      %s50 = sphi 0, %s49
      %s64 = sphi 0, %s50
      %s68 = sphi 0, %s68
      %s70 = sphi 0, %s68
      %s71 = sphi 0, %s70
      %s85 = sphi 0, %s71
      %s91 = sphi 0, %s93
      %s94 = sphi 0, %s91
      %s95 = sphi 0, %s94
      %s111 = sphi 0, %s95
      %s117 = sphi 0, %s119
      %s120 = sphi 0, %s117
      %s121 = sphi 0, %s120
      %s137 = sphi 0, %s121
    $region4: #{_lambda_.7} parent=1 // loop_header_branch
      %16 = sbr.rel (%p14) target = $region8
    $region5: #{_lambda_.7} parent=1 // loop_body
      %s18 = ssub.s32 %s13, 1
      %s19 = ssub.s32 %s13, 2
      %s20 = sadd.s32 %s13, 1
      %s21 = ssub.s32 %s13, %s20
      %p22 = scmp.eq.s32.totalorder %s21, 0
      %s24 = sadd.s32 %s23, 1
      %s25 = scalar_select %p22, %s23, %s24
      %p28 = pneg %p22
      %p29 = scmp.eq.s32.totalorder %s13, 1
      %p30 = por %p28, %p29
      %p31 = scmp.ne.s32.totalorder %s23, %s26
      %p32 = scmp.eq.s32.totalorder %s13, 0
      %p33 = por %p31, %p32
      %p34 = scmp.ne.s32.totalorder %s23, %s26
      %p35 = scmp.eq.s32.totalorder %s18, 1
      %p36 = por %p34, %p35
      %p37 = scmp.ne.s32.totalorder %s26, %s27
      %p38 = scmp.eq.s32.totalorder %s18, 0
      %p39 = por %p37, %p38
      %p40 = scmp.ne.s32.totalorder %s26, %s27
      %p41 = scmp.eq.s32.totalorder %s19, 1
      %p42 = por %p40, %p41
      %p44 = scmp.ne.s32.totalorder %s27, %s43
      %p45 = scmp.eq.s32.totalorder %s19, 0
      %p46 = por %p44, %p45
      %s48 = sadd.s32 %s47, 1
      %p51 = scmp.eq.s32.totalorder %s13, 1
      %p52 = scmp.ne.s32.totalorder %s47, %s49
      %p53 = scmp.eq.s32.totalorder %s13, 0
      %p54 = por %p52, %p53
      %p55 = scmp.ne.s32.totalorder %s47, %s49
      %p56 = scmp.eq.s32.totalorder %s18, 1
      %p57 = por %p55, %p56
      %p58 = scmp.ne.s32.totalorder %s49, %s50
      %p59 = scmp.eq.s32.totalorder %s18, 0
      %p60 = por %p58, %p59
      %p61 = scmp.ne.s32.totalorder %s49, %s50
      %p62 = scmp.eq.s32.totalorder %s19, 1
      %p63 = por %p61, %p62
      %p65 = scmp.ne.s32.totalorder %s50, %s64
      %p66 = scmp.eq.s32.totalorder %s19, 0
      %p67 = por %p65, %p66
      %s69 = sadd.s32 %s68, 1
      %p72 = scmp.eq.s32.totalorder %s13, 1
      %p73 = scmp.ne.s32.totalorder %s68, %s70
      %p74 = scmp.eq.s32.totalorder %s13, 0
      %p75 = por %p73, %p74
      %p76 = scmp.ne.s32.totalorder %s68, %s70
      %p77 = scmp.eq.s32.totalorder %s18, 1
      %p78 = por %p76, %p77
      %p79 = scmp.ne.s32.totalorder %s70, %s71
      %p80 = scmp.eq.s32.totalorder %s18, 0
      %p81 = por %p79, %p80
      %p82 = scmp.ne.s32.totalorder %s70, %s71
      %p83 = scmp.eq.s32.totalorder %s19, 1
      %p84 = por %p82, %p83
      %p86 = scmp.ne.s32.totalorder %s71, %s85
      %p87 = scmp.eq.s32.totalorder %s19, 0
      %p88 = por %p86, %p87
      %s89 = ssub.s32 %s13, %s20
      %p90 = scmp.eq.s32.totalorder %s89, 0
      %s92 = sadd.s32 %s91, 1
      %s93 = scalar_select %p90, %s91, %s92
      %p96 = pneg %p90
      %p97 = scmp.eq.s32.totalorder %s13, 1
      %p98 = por %p96, %p97
      %p99 = scmp.ne.s32.totalorder %s91, %s94
      %p100 = scmp.eq.s32.totalorder %s13, 0
      %p101 = por %p99, %p100
      %p102 = scmp.ne.s32.totalorder %s91, %s94
      %p103 = scmp.eq.s32.totalorder %s18, 1
      %p104 = por %p102, %p103
      %p105 = scmp.ne.s32.totalorder %s94, %s95
      %p106 = scmp.eq.s32.totalorder %s18, 0
      %p107 = por %p105, %p106
      %p108 = scmp.ne.s32.totalorder %s94, %s95
      %p109 = scmp.eq.s32.totalorder %s19, 1
      %p110 = por %p108, %p109
      %p112 = scmp.ne.s32.totalorder %s95, %s111
      %p113 = scmp.eq.s32.totalorder %s19, 0
      %p114 = por %p112, %p113
      %s115 = ssub.s32 %s13, %s20
      %p116 = scmp.eq.s32.totalorder %s115, 0
      %s118 = sadd.s32 %s117, 1
      %s119 = scalar_select %p116, %s117, %s118
      %p122 = pneg %p116
      %p123 = scmp.eq.s32.totalorder %s13, 1
      %p124 = por %p122, %p123
      %p125 = scmp.ne.s32.totalorder %s117, %s120
      %p126 = scmp.eq.s32.totalorder %s13, 0
      %p127 = por %p125, %p126
      %p128 = scmp.ne.s32.totalorder %s117, %s120
      %p129 = scmp.eq.s32.totalorder %s18, 1
      %p130 = por %p128, %p129
      %p131 = scmp.ne.s32.totalorder %s120, %s121
      %p132 = scmp.eq.s32.totalorder %s18, 0
      %p133 = por %p131, %p132
      %p134 = scmp.ne.s32.totalorder %s120, %s121
      %p135 = scmp.eq.s32.totalorder %s19, 1
      %p136 = por %p134, %p135
      %p138 = scmp.ne.s32.totalorder %s121, %s137
      %p139 = scmp.eq.s32.totalorder %s19, 0
      %p140 = por %p138, %p139
      %p141 = scmp.le.s32.totalorder 1, %s13
      %p142 = scmp.lt.s32.totalorder %s13, 3
      %p143 = pnand %p141, %p142
      %p144 = pneg %p143
      // Predicated region
      $region9: #{_lambda_.7} parent=5 // pred_check
        _
      $region10: #{_lambda_.7} parent=5 // pred_check_branch
        %146 = sbr.rel (%p143) target = $region12
      $region11: #{_lambda_.7} parent=5 // pred_region
        %s147 = ssub.s32 %s13, 1
        // Predicated region
        $region13: #{_lambda_.7} parent=11 // pred_check
          %p148 = pneg %p60
        $region14: #{_lambda_.7} parent=11 // pred_check_branch
          %150 = sbr.rel (%p148) target = $region16
        $region15: #{_lambda_.7} parent=11 // pred_region
          _
        $region16: #{_lambda_.7} parent=11 // pred_fallthru
          _
        // Predicated region
        $region17: #{_lambda_.7} parent=11 // pred_check
          %p151 = pneg %p81
        $region18: #{_lambda_.7} parent=11 // pred_check_branch
          %153 = sbr.rel (%p151) target = $region20
        $region19: #{_lambda_.7} parent=11 // pred_region
          _
        $region20: #{_lambda_.7} parent=11 // pred_fallthru
          _
      $region12: #{_lambda_.7} parent=5 // pred_fallthru
        _
      %p154 = scmp.lt.s32.totalorder %s13, 2
      // Predicated region
      $region21: #{_lambda_.7} parent=5 // pred_check
        %p155 = pneg %p154
      $region22: #{_lambda_.7} parent=5 // pred_check_branch
        %157 = sbr.rel (%p155) target = $region24
      $region23: #{_lambda_.7} parent=5 // pred_region
        // Predicated region
        $region25: #{_lambda_.7} parent=23 // pred_check
          %p158 = pneg %p33
        $region26: #{_lambda_.7} parent=23 // pred_check_branch
          %160 = sbr.rel (%p158) target = $region28
        $region27: #{_lambda_.7} parent=23 // pred_region
          %p161 = scmp.lt.s32.totalorder %s13, 1
          %s162 = scalar_select %p161, %s13, 1
          %s163 = smul.addr %s162, 32
          %s164 = smul.addr %s163, 8
          %s165 = scalar_lea.vmem %s0, %s164
        $region28: #{_lambda_.7} parent=23 // pred_fallthru
          _
        // Predicated region
        $region29: #{_lambda_.7} parent=23 // pred_check
          %p166 = pneg %p101
        $region30: #{_lambda_.7} parent=23 // pred_check_branch
          %168 = sbr.rel (%p166) target = $region32
        $region31: #{_lambda_.7} parent=23 // pred_region
          %p169 = scmp.lt.s32.totalorder %s13, 1
          %s170 = scalar_select %p169, %s13, 1
          %s171 = smul.addr %s170, 8
          %s172 = smul.addr %s171, 8
          %s173 = scalar_lea.vmem %s3, %s172
        $region32: #{_lambda_.7} parent=23 // pred_fallthru
          _
      $region24: #{_lambda_.7} parent=5 // pred_fallthru
        _
      %p174 = scmp.le.s32.totalorder 1, %s13
      %p175 = scmp.lt.s32.totalorder %s13, 3
      %p176 = pnand %p174, %p175
      %p177 = pneg %p176
      // Predicated region
      $region33: #{_lambda_.7} parent=5 // pred_check
        _
      $region34: #{_lambda_.7} parent=5 // pred_check_branch
        %179 = sbr.rel (%p176) target = $region36
      $region35: #{_lambda_.7} parent=5 // pred_region
        %s180 = ssub.s32 %s13, 1
        %p181 = scmp.lt.s32.totalorder %s18, 1
        %s182 = scalar_select %p181, %s18, 1
        %s183 = smul.addr %s182, 32
        %s184 = smul.addr %s183, 8
        %s185 = scalar_lea.vmem %s0, %s184
        %p186 = pneg %p39
        %p187 = pneg %p36
        %p188 = pneg %p60
        %p189 = pneg %p57
        %p190 = pneg %p81
        %p191 = pneg %p78
        %p192 = scmp.lt.s32.totalorder %s18, 1
        %s193 = scalar_select %p192, %s18, 1
        %s194 = smul.addr %s193, 8
        %s195 = smul.addr %s194, 8
        %s196 = scalar_lea.vmem %s3, %s195
        %p197 = pneg %p107
        %p198 = pneg %p104
        %p199 = pneg %p133
        %p200 = pneg %p130
        %s201 = sand.u32 %s120, 1
        %s202 = scalar_lea.sflag [#allocation3], %s201
        %s203 = sand.u32 %s120, 1
        %s204 = smul.addr %s203, 64
        %s205 = scalar_lea.vmem [#allocation2], %s204
        %p206 = scmp.lt.s32.totalorder %s18, 1
        %s207 = scalar_select %p206, %s18, 1
        %s208 = smul.addr %s207, 32
        %s209 = smul.addr %s208, 8
        %s210 = scalar_lea.vmem %s0, %s209
        %p211 = scmp.lt.s32.totalorder %s18, 1
        %s212 = scalar_select %p211, %s18, 1
        %s213 = smul.addr %s212, 8
        %s214 = smul.addr %s213, 8
        %s215 = scalar_lea.vmem %s3, %s214
        %v216 = vld [vmem:[%s210] sm:$0xff]
        %v217 = vld [vmem:[%s210 + $0x8] sm:$0xff]
        %v218 = vld [vmem:[%s210 + $0x10] sm:$0xff]
        %v219 = vld [vmem:[%s210 + $0x18] sm:$0xff]
        %v220 = vld [vmem:[%s210 + $0x20] sm:$0xff]
        %v221 = vld [vmem:[%s210 + $0x28] sm:$0xff]
        %v222 = vld [vmem:[%s210 + $0x30] sm:$0xff]
        %v223 = vld [vmem:[%s210 + $0x38] sm:$0xff]
        %v224 = vld [vmem:[%s210 + $0x40] sm:$0xff]
        %v225 = vld [vmem:[%s210 + $0x48] sm:$0xff]
        %v226 = vld [vmem:[%s210 + $0x50] sm:$0xff]
        %v227 = vld [vmem:[%s210 + $0x58] sm:$0xff]
        %v228 = vld [vmem:[%s210 + $0x60] sm:$0xff]
        %v229 = vld [vmem:[%s210 + $0x68] sm:$0xff]
        %v230 = vld [vmem:[%s210 + $0x70] sm:$0xff]
        %v231 = vld [vmem:[%s210 + $0x78] sm:$0xff]
        %v232 = vld [vmem:[%s210 + $0x80] sm:$0xff]
        %v233 = vld [vmem:[%s210 + $0x88] sm:$0xff]
        %v234 = vld [vmem:[%s210 + $0x90] sm:$0xff]
        %v235 = vld [vmem:[%s210 + $0x98] sm:$0xff]
        %v236 = vld [vmem:[%s210 + $0xa0] sm:$0xff]
        %v237 = vld [vmem:[%s210 + $0xa8] sm:$0xff]
        %v238 = vld [vmem:[%s210 + $0xb0] sm:$0xff]
        %v239 = vld [vmem:[%s210 + $0xb8] sm:$0xff]
        %v240 = vld [vmem:[%s210 + $0xc0] sm:$0xff]
        %v241 = vld [vmem:[%s210 + $0xc8] sm:$0xff]
        %v242 = vld [vmem:[%s210 + $0xd0] sm:$0xff]
        %v243 = vld [vmem:[%s210 + $0xd8] sm:$0xff]
        %v244 = vld [vmem:[%s210 + $0xe0] sm:$0xff]
        %v245 = vld [vmem:[%s210 + $0xe8] sm:$0xff]
        %v246 = vld [vmem:[%s210 + $0xf0] sm:$0xff]
        %v247 = vld [vmem:[%s210 + $0xf8] sm:$0xff]
        %v248 = vmax.f32 %v216, 0.0
        %v249 = vmax.f32 %v217, 0.0
        %v250 = vmax.f32 %v218, 0.0
        %v251 = vmax.f32 %v219, 0.0
        %v252 = vmax.f32 %v220, 0.0
        %v253 = vmax.f32 %v221, 0.0
        %v254 = vmax.f32 %v222, 0.0
        %v255 = vmax.f32 %v223, 0.0
        %v256 = vmax.f32 %v224, 0.0
        %v257 = vmax.f32 %v225, 0.0
        %v258 = vmax.f32 %v226, 0.0
        %v259 = vmax.f32 %v227, 0.0
        %v260 = vmax.f32 %v228, 0.0
        %v261 = vmax.f32 %v229, 0.0
        %v262 = vmax.f32 %v230, 0.0
        %v263 = vmax.f32 %v231, 0.0
        %v264 = vmax.f32 %v232, 0.0
        %v265 = vmax.f32 %v233, 0.0
        %v266 = vmax.f32 %v234, 0.0
        %v267 = vmax.f32 %v235, 0.0
        %v268 = vmax.f32 %v236, 0.0
        %v269 = vmax.f32 %v237, 0.0
        %v270 = vmax.f32 %v238, 0.0
        %v271 = vmax.f32 %v239, 0.0
        %v272 = vmax.f32 %v240, 0.0
        %v273 = vmax.f32 %v241, 0.0
        %v274 = vmax.f32 %v242, 0.0
        %v275 = vmax.f32 %v243, 0.0
        %v276 = vmax.f32 %v244, 0.0
        %v277 = vmax.f32 %v245, 0.0
        %v278 = vmax.f32 %v246, 0.0
        %v279 = vmax.f32 %v247, 0.0
        %vm280 = vcmask 31744
        %v281 = vsel %vm280, %v248, 0.0
        %v282 = vsel %vm280, %v250, 0.0
        %v283 = vadd.f32 %v281, %v282
        %v284 = vsel %vm280, %v249, 0.0
        %v285 = vsel %vm280, %v251, 0.0
        %v286 = vadd.f32 %v284, %v285
        %v287 = vsel %vm280, %v252, 0.0
        %v288 = vsel %vm280, %v254, 0.0
        %v289 = vadd.f32 %v287, %v288
        %v290 = vsel %vm280, %v253, 0.0
        %v291 = vsel %vm280, %v255, 0.0
        %v292 = vadd.f32 %v290, %v291
        %v293 = vsel %vm280, %v256, 0.0
        %v294 = vsel %vm280, %v258, 0.0
        %v295 = vadd.f32 %v293, %v294
        %v296 = vsel %vm280, %v257, 0.0
        %v297 = vsel %vm280, %v259, 0.0
        %v298 = vadd.f32 %v296, %v297
        %v299 = vsel %vm280, %v260, 0.0
        %v300 = vsel %vm280, %v262, 0.0
        %v301 = vadd.f32 %v299, %v300
        %v302 = vsel %vm280, %v261, 0.0
        %v303 = vsel %vm280, %v263, 0.0
        %v304 = vadd.f32 %v302, %v303
        %v305 = vsel %vm280, %v264, 0.0
        %v306 = vsel %vm280, %v266, 0.0
        %v307 = vadd.f32 %v305, %v306
        %v308 = vsel %vm280, %v265, 0.0
        %v309 = vsel %vm280, %v267, 0.0
        %v310 = vadd.f32 %v308, %v309
        %v311 = vsel %vm280, %v268, 0.0
        %v312 = vsel %vm280, %v270, 0.0
        %v313 = vadd.f32 %v311, %v312
        %v314 = vsel %vm280, %v269, 0.0
        %v315 = vsel %vm280, %v271, 0.0
        %v316 = vadd.f32 %v314, %v315
        %v317 = vsel %vm280, %v272, 0.0
        %v318 = vsel %vm280, %v274, 0.0
        %v319 = vadd.f32 %v317, %v318
        %v320 = vsel %vm280, %v273, 0.0
        %v321 = vsel %vm280, %v275, 0.0
        %v322 = vadd.f32 %v320, %v321
        %v323 = vsel %vm280, %v276, 0.0
        %v324 = vsel %vm280, %v278, 0.0
        %v325 = vadd.f32 %v323, %v324
        %v326 = vsel %vm280, %v277, 0.0
        %v327 = vsel %vm280, %v279, 0.0
        %v328 = vadd.f32 %v326, %v327
        %v345 = vcombine.high %v283, %v283
        %v347 = vunpack.c.l.s4 1983009808
        %v348 = vunpack.c.0.s8 %v347
        %v349 = vlaneseq
        %v350 = vshrl.u32 %v349, 7
        %v351 = vsub.s32 %v348, %v350
        %v352 = vrot.slane %v283, %v351
        %v354 = vunpack.c.l.s4 1983009808
        %v355 = vunpack.c.0.s8 %v354
        %v356 = vlaneseq
        %v357 = vshrl.u32 %v356, 7
        %v358 = vsub.s32 %v355, %v357
        %v359 = vrot.slane %v345, %v358
        %v360 = vcombine.high %v352, %v352
        %v361 = vcombine.high %v359, %v359
        %v362 = vcombine.high %v286, %v286
        %v364 = vunpack.c.l.s4 1983009808
        %v365 = vunpack.c.0.s8 %v364
        %v366 = vlaneseq
        %v367 = vshrl.u32 %v366, 7
        %v368 = vsub.s32 %v365, %v367
        %v369 = vrot.slane %v286, %v368
        %v371 = vunpack.c.l.s4 1983009808
        %v372 = vunpack.c.0.s8 %v371
        %v373 = vlaneseq
        %v374 = vshrl.u32 %v373, 7
        %v375 = vsub.s32 %v372, %v374
        %v376 = vrot.slane %v362, %v375
        %v377 = vcombine.high %v369, %v369
        %v378 = vcombine.high %v376, %v376
        %v379 = vcombine.high %v289, %v289
        %v381 = vunpack.c.l.s4 1983009808
        %v382 = vunpack.c.0.s8 %v381
        %v383 = vlaneseq
        %v384 = vshrl.u32 %v383, 7
        %v385 = vsub.s32 %v382, %v384
        %v386 = vrot.slane %v289, %v385
        %v388 = vunpack.c.l.s4 1983009808
        %v389 = vunpack.c.0.s8 %v388
        %v390 = vlaneseq
        %v391 = vshrl.u32 %v390, 7
        %v392 = vsub.s32 %v389, %v391
        %v393 = vrot.slane %v379, %v392
        %v394 = vcombine.high %v386, %v386
        %v395 = vcombine.high %v393, %v393
        %v396 = vcombine.high %v292, %v292
        %v398 = vunpack.c.l.s4 1983009808
        %v399 = vunpack.c.0.s8 %v398
        %v400 = vlaneseq
        %v401 = vshrl.u32 %v400, 7
        %v402 = vsub.s32 %v399, %v401
        %v403 = vrot.slane %v292, %v402
        %v405 = vunpack.c.l.s4 1983009808
        %v406 = vunpack.c.0.s8 %v405
        %v407 = vlaneseq
        %v408 = vshrl.u32 %v407, 7
        %v409 = vsub.s32 %v406, %v408
        %v410 = vrot.slane %v396, %v409
        %v411 = vcombine.high %v403, %v403
        %v412 = vcombine.high %v410, %v410
        %v413 = vcombine.high %v295, %v295
        %v415 = vunpack.c.l.s4 1983009808
        %v416 = vunpack.c.0.s8 %v415
        %v417 = vlaneseq
        %v418 = vshrl.u32 %v417, 7
        %v419 = vsub.s32 %v416, %v418
        %v420 = vrot.slane %v295, %v419
        %v422 = vunpack.c.l.s4 1983009808
        %v423 = vunpack.c.0.s8 %v422
        %v424 = vlaneseq
        %v425 = vshrl.u32 %v424, 7
        %v426 = vsub.s32 %v423, %v425
        %v427 = vrot.slane %v413, %v426
        %v428 = vcombine.high %v420, %v420
        %v429 = vcombine.high %v427, %v427
        %v430 = vcombine.high %v298, %v298
        %v432 = vunpack.c.l.s4 1983009808
        %v433 = vunpack.c.0.s8 %v432
        %v434 = vlaneseq
        %v435 = vshrl.u32 %v434, 7
        %v436 = vsub.s32 %v433, %v435
        %v437 = vrot.slane %v298, %v436
        %v439 = vunpack.c.l.s4 1983009808
        %v440 = vunpack.c.0.s8 %v439
        %v441 = vlaneseq
        %v442 = vshrl.u32 %v441, 7
        %v443 = vsub.s32 %v440, %v442
        %v444 = vrot.slane %v430, %v443
        %v445 = vcombine.high %v437, %v437
        %v446 = vcombine.high %v444, %v444
        %v447 = vcombine.high %v301, %v301
        %v449 = vunpack.c.l.s4 1983009808
        %v450 = vunpack.c.0.s8 %v449
        %v451 = vlaneseq
        %v452 = vshrl.u32 %v451, 7
        %v453 = vsub.s32 %v450, %v452
        %v454 = vrot.slane %v301, %v453
        %v456 = vunpack.c.l.s4 1983009808
        %v457 = vunpack.c.0.s8 %v456
        %v458 = vlaneseq
        %v459 = vshrl.u32 %v458, 7
        %v460 = vsub.s32 %v457, %v459
        %v461 = vrot.slane %v447, %v460
        %v462 = vcombine.high %v454, %v454
        %v463 = vcombine.high %v461, %v461
        %v464 = vcombine.high %v304, %v304
        %v466 = vunpack.c.l.s4 1983009808
        %v467 = vunpack.c.0.s8 %v466
        %v468 = vlaneseq
        %v469 = vshrl.u32 %v468, 7
        %v470 = vsub.s32 %v467, %v469
        %v471 = vrot.slane %v304, %v470
        %v473 = vunpack.c.l.s4 1983009808
        %v474 = vunpack.c.0.s8 %v473
        %v475 = vlaneseq
        %v476 = vshrl.u32 %v475, 7
        %v477 = vsub.s32 %v474, %v476
        %v478 = vrot.slane %v464, %v477
        %v479 = vcombine.high %v471, %v471
        %v480 = vcombine.high %v478, %v478
        %v481 = vcombine.high %v307, %v307
        %v483 = vunpack.c.l.s4 1983009808
        %v484 = vunpack.c.0.s8 %v483
        %v485 = vlaneseq
        %v486 = vshrl.u32 %v485, 7
        %v487 = vsub.s32 %v484, %v486
        %v488 = vrot.slane %v307, %v487
        %v490 = vunpack.c.l.s4 1983009808
        %v491 = vunpack.c.0.s8 %v490
        %v492 = vlaneseq
        %v493 = vshrl.u32 %v492, 7
        %v494 = vsub.s32 %v491, %v493
        %v495 = vrot.slane %v481, %v494
        %v496 = vcombine.high %v488, %v488
        %v497 = vcombine.high %v495, %v495
        %v498 = vcombine.high %v310, %v310
        %v500 = vunpack.c.l.s4 1983009808
        %v501 = vunpack.c.0.s8 %v500
        %v502 = vlaneseq
        %v503 = vshrl.u32 %v502, 7
        %v504 = vsub.s32 %v501, %v503
        %v505 = vrot.slane %v310, %v504
        %v507 = vunpack.c.l.s4 1983009808
        %v508 = vunpack.c.0.s8 %v507
        %v509 = vlaneseq
        %v510 = vshrl.u32 %v509, 7
        %v511 = vsub.s32 %v508, %v510
        %v512 = vrot.slane %v498, %v511
        %v513 = vcombine.high %v505, %v505
        %v514 = vcombine.high %v512, %v512
        %v515 = vcombine.high %v313, %v313
        %v517 = vunpack.c.l.s4 1983009808
        %v518 = vunpack.c.0.s8 %v517
        %v519 = vlaneseq
        %v520 = vshrl.u32 %v519, 7
        %v521 = vsub.s32 %v518, %v520
        %v522 = vrot.slane %v313, %v521
        %v524 = vunpack.c.l.s4 1983009808
        %v525 = vunpack.c.0.s8 %v524
        %v526 = vlaneseq
        %v527 = vshrl.u32 %v526, 7
        %v528 = vsub.s32 %v525, %v527
        %v529 = vrot.slane %v515, %v528
        %v530 = vcombine.high %v522, %v522
        %v531 = vcombine.high %v529, %v529
        %v532 = vcombine.high %v316, %v316
        %v534 = vunpack.c.l.s4 1983009808
        %v535 = vunpack.c.0.s8 %v534
        %v536 = vlaneseq
        %v537 = vshrl.u32 %v536, 7
        %v538 = vsub.s32 %v535, %v537
        %v539 = vrot.slane %v316, %v538
        %v541 = vunpack.c.l.s4 1983009808
        %v542 = vunpack.c.0.s8 %v541
        %v543 = vlaneseq
        %v544 = vshrl.u32 %v543, 7
        %v545 = vsub.s32 %v542, %v544
        %v546 = vrot.slane %v532, %v545
        %v547 = vcombine.high %v539, %v539
        %v548 = vcombine.high %v546, %v546
        %v549 = vcombine.high %v319, %v319
        %v551 = vunpack.c.l.s4 1983009808
        %v552 = vunpack.c.0.s8 %v551
        %v553 = vlaneseq
        %v554 = vshrl.u32 %v553, 7
        %v555 = vsub.s32 %v552, %v554
        %v556 = vrot.slane %v319, %v555
        %v558 = vunpack.c.l.s4 1983009808
        %v559 = vunpack.c.0.s8 %v558
        %v560 = vlaneseq
        %v561 = vshrl.u32 %v560, 7
        %v562 = vsub.s32 %v559, %v561
        %v563 = vrot.slane %v549, %v562
        %v564 = vcombine.high %v556, %v556
        %v565 = vcombine.high %v563, %v563
        %v566 = vcombine.high %v322, %v322
        %v568 = vunpack.c.l.s4 1983009808
        %v569 = vunpack.c.0.s8 %v568
        %v570 = vlaneseq
        %v571 = vshrl.u32 %v570, 7
        %v572 = vsub.s32 %v569, %v571
        %v573 = vrot.slane %v322, %v572
        %v575 = vunpack.c.l.s4 1983009808
        %v576 = vunpack.c.0.s8 %v575
        %v577 = vlaneseq
        %v578 = vshrl.u32 %v577, 7
        %v579 = vsub.s32 %v576, %v578
        %v580 = vrot.slane %v566, %v579
        %v581 = vcombine.high %v573, %v573
        %v582 = vcombine.high %v580, %v580
        %v583 = vcombine.high %v325, %v325
        %v585 = vunpack.c.l.s4 1983009808
        %v586 = vunpack.c.0.s8 %v585
        %v587 = vlaneseq
        %v588 = vshrl.u32 %v587, 7
        %v589 = vsub.s32 %v586, %v588
        %v590 = vrot.slane %v325, %v589
        %v592 = vunpack.c.l.s4 1983009808
        %v593 = vunpack.c.0.s8 %v592
        %v594 = vlaneseq
        %v595 = vshrl.u32 %v594, 7
        %v596 = vsub.s32 %v593, %v595
        %v597 = vrot.slane %v583, %v596
        %v598 = vcombine.high %v590, %v590
        %v599 = vcombine.high %v597, %v597
        %v600 = vcombine.high %v328, %v328
        %v602 = vunpack.c.l.s4 1983009808
        %v603 = vunpack.c.0.s8 %v602
        %v604 = vlaneseq
        %v605 = vshrl.u32 %v604, 7
        %v606 = vsub.s32 %v603, %v605
        %v607 = vrot.slane %v328, %v606
        %v609 = vunpack.c.l.s4 1983009808
        %v610 = vunpack.c.0.s8 %v609
        %v611 = vlaneseq
        %v612 = vshrl.u32 %v611, 7
        %v613 = vsub.s32 %v610, %v612
        %v614 = vrot.slane %v600, %v613
        %v615 = vcombine.high %v607, %v607
        %v616 = vcombine.high %v614, %v614
        %vm681 = vcmask 25600
        %v682 = vsel %vm681, %v352, 0.0
        %v683 = vrot.slane %v682, 4
        %v684 = vadd.f32 %v682, %v683
        %v685 = vrot.slane %v684, 2
        %v686 = vadd.f32 %v684, %v685
        %v687 = vrot.slane %v686, 1
        %v688 = vadd.f32 %v686, %v687
        %v689 = vsel %vm681, %v360, 0.0
        %v690 = vrot.slane %v689, 4
        %v691 = vadd.f32 %v689, %v690
        %v692 = vrot.slane %v691, 2
        %v693 = vadd.f32 %v691, %v692
        %v694 = vrot.slane %v693, 1
        %v695 = vadd.f32 %v693, %v694
        %v696 = vsel %vm681, %v359, 0.0
        %v697 = vrot.slane %v696, 4
        %v698 = vadd.f32 %v696, %v697
        %v699 = vrot.slane %v698, 2
        %v700 = vadd.f32 %v698, %v699
        %v701 = vrot.slane %v700, 1
        %v702 = vadd.f32 %v700, %v701
        %v703 = vsel %vm681, %v361, 0.0
        %v704 = vrot.slane %v703, 4
        %v705 = vadd.f32 %v703, %v704
        %v706 = vrot.slane %v705, 2
        %v707 = vadd.f32 %v705, %v706
        %v708 = vrot.slane %v707, 1
        %v709 = vadd.f32 %v707, %v708
        %v710 = vsel %vm681, %v369, 0.0
        %v711 = vrot.slane %v710, 4
        %v712 = vadd.f32 %v710, %v711
        %v713 = vrot.slane %v712, 2
        %v714 = vadd.f32 %v712, %v713
        %v715 = vrot.slane %v714, 1
        %v716 = vadd.f32 %v714, %v715
        %v717 = vsel %vm681, %v377, 0.0
        %v718 = vrot.slane %v717, 4
        %v719 = vadd.f32 %v717, %v718
        %v720 = vrot.slane %v719, 2
        %v721 = vadd.f32 %v719, %v720
        %v722 = vrot.slane %v721, 1
        %v723 = vadd.f32 %v721, %v722
        %v724 = vsel %vm681, %v376, 0.0
        %v725 = vrot.slane %v724, 4
        %v726 = vadd.f32 %v724, %v725
        %v727 = vrot.slane %v726, 2
        %v728 = vadd.f32 %v726, %v727
        %v729 = vrot.slane %v728, 1
        %v730 = vadd.f32 %v728, %v729
        %v731 = vsel %vm681, %v378, 0.0
        %v732 = vrot.slane %v731, 4
        %v733 = vadd.f32 %v731, %v732
        %v734 = vrot.slane %v733, 2
        %v735 = vadd.f32 %v733, %v734
        %v736 = vrot.slane %v735, 1
        %v737 = vadd.f32 %v735, %v736
        %v738 = vsel %vm681, %v386, 0.0
        %v739 = vrot.slane %v738, 4
        %v740 = vadd.f32 %v738, %v739
        %v741 = vrot.slane %v740, 2
        %v742 = vadd.f32 %v740, %v741
        %v743 = vrot.slane %v742, 1
        %v744 = vadd.f32 %v742, %v743
        %v745 = vsel %vm681, %v394, 0.0
        %v746 = vrot.slane %v745, 4
        %v747 = vadd.f32 %v745, %v746
        %v748 = vrot.slane %v747, 2
        %v749 = vadd.f32 %v747, %v748
        %v750 = vrot.slane %v749, 1
        %v751 = vadd.f32 %v749, %v750
        %v752 = vsel %vm681, %v393, 0.0
        %v753 = vrot.slane %v752, 4
        %v754 = vadd.f32 %v752, %v753
        %v755 = vrot.slane %v754, 2
        %v756 = vadd.f32 %v754, %v755
        %v757 = vrot.slane %v756, 1
        %v758 = vadd.f32 %v756, %v757
        %v759 = vsel %vm681, %v395, 0.0
        %v760 = vrot.slane %v759, 4
        %v761 = vadd.f32 %v759, %v760
        %v762 = vrot.slane %v761, 2
        %v763 = vadd.f32 %v761, %v762
        %v764 = vrot.slane %v763, 1
        %v765 = vadd.f32 %v763, %v764
        %v766 = vsel %vm681, %v403, 0.0
        %v767 = vrot.slane %v766, 4
        %v768 = vadd.f32 %v766, %v767
        %v769 = vrot.slane %v768, 2
        %v770 = vadd.f32 %v768, %v769
        %v771 = vrot.slane %v770, 1
        %v772 = vadd.f32 %v770, %v771
        %v773 = vsel %vm681, %v411, 0.0
        %v774 = vrot.slane %v773, 4
        %v775 = vadd.f32 %v773, %v774
        %v776 = vrot.slane %v775, 2
        %v777 = vadd.f32 %v775, %v776
        %v778 = vrot.slane %v777, 1
        %v779 = vadd.f32 %v777, %v778
        %v780 = vsel %vm681, %v410, 0.0
        %v781 = vrot.slane %v780, 4
        %v782 = vadd.f32 %v780, %v781
        %v783 = vrot.slane %v782, 2
        %v784 = vadd.f32 %v782, %v783
        %v785 = vrot.slane %v784, 1
        %v786 = vadd.f32 %v784, %v785
        %v787 = vsel %vm681, %v412, 0.0
        %v788 = vrot.slane %v787, 4
        %v789 = vadd.f32 %v787, %v788
        %v790 = vrot.slane %v789, 2
        %v791 = vadd.f32 %v789, %v790
        %v792 = vrot.slane %v791, 1
        %v793 = vadd.f32 %v791, %v792
        %v794 = vsel %vm681, %v420, 0.0
        %v795 = vrot.slane %v794, 4
        %v796 = vadd.f32 %v794, %v795
        %v797 = vrot.slane %v796, 2
        %v798 = vadd.f32 %v796, %v797
        %v799 = vrot.slane %v798, 1
        %v800 = vadd.f32 %v798, %v799
        %v801 = vsel %vm681, %v428, 0.0
        %v802 = vrot.slane %v801, 4
        %v803 = vadd.f32 %v801, %v802
        %v804 = vrot.slane %v803, 2
        %v805 = vadd.f32 %v803, %v804
        %v806 = vrot.slane %v805, 1
        %v807 = vadd.f32 %v805, %v806
        %v808 = vsel %vm681, %v427, 0.0
        %v809 = vrot.slane %v808, 4
        %v810 = vadd.f32 %v808, %v809
        %v811 = vrot.slane %v810, 2
        %v812 = vadd.f32 %v810, %v811
        %v813 = vrot.slane %v812, 1
        %v814 = vadd.f32 %v812, %v813
        %v815 = vsel %vm681, %v429, 0.0
        %v816 = vrot.slane %v815, 4
        %v817 = vadd.f32 %v815, %v816
        %v818 = vrot.slane %v817, 2
        %v819 = vadd.f32 %v817, %v818
        %v820 = vrot.slane %v819, 1
        %v821 = vadd.f32 %v819, %v820
        %v822 = vsel %vm681, %v437, 0.0
        %v823 = vrot.slane %v822, 4
        %v824 = vadd.f32 %v822, %v823
        %v825 = vrot.slane %v824, 2
        %v826 = vadd.f32 %v824, %v825
        %v827 = vrot.slane %v826, 1
        %v828 = vadd.f32 %v826, %v827
        %v829 = vsel %vm681, %v445, 0.0
        %v830 = vrot.slane %v829, 4
        %v831 = vadd.f32 %v829, %v830
        %v832 = vrot.slane %v831, 2
        %v833 = vadd.f32 %v831, %v832
        %v834 = vrot.slane %v833, 1
        %v835 = vadd.f32 %v833, %v834
        %v836 = vsel %vm681, %v444, 0.0
        %v837 = vrot.slane %v836, 4
        %v838 = vadd.f32 %v836, %v837
        %v839 = vrot.slane %v838, 2
        %v840 = vadd.f32 %v838, %v839
        %v841 = vrot.slane %v840, 1
        %v842 = vadd.f32 %v840, %v841
        %v843 = vsel %vm681, %v446, 0.0
        %v844 = vrot.slane %v843, 4
        %v845 = vadd.f32 %v843, %v844
        %v846 = vrot.slane %v845, 2
        %v847 = vadd.f32 %v845, %v846
        %v848 = vrot.slane %v847, 1
        %v849 = vadd.f32 %v847, %v848
        %v850 = vsel %vm681, %v454, 0.0
        %v851 = vrot.slane %v850, 4
        %v852 = vadd.f32 %v850, %v851
        %v853 = vrot.slane %v852, 2
        %v854 = vadd.f32 %v852, %v853
        %v855 = vrot.slane %v854, 1
        %v856 = vadd.f32 %v854, %v855
        %v857 = vsel %vm681, %v462, 0.0
        %v858 = vrot.slane %v857, 4
        %v859 = vadd.f32 %v857, %v858
        %v860 = vrot.slane %v859, 2
        %v861 = vadd.f32 %v859, %v860
        %v862 = vrot.slane %v861, 1
        %v863 = vadd.f32 %v861, %v862
        %v864 = vsel %vm681, %v461, 0.0
        %v865 = vrot.slane %v864, 4
        %v866 = vadd.f32 %v864, %v865
        %v867 = vrot.slane %v866, 2
        %v868 = vadd.f32 %v866, %v867
        %v869 = vrot.slane %v868, 1
        %v870 = vadd.f32 %v868, %v869
        %v871 = vsel %vm681, %v463, 0.0
        %v872 = vrot.slane %v871, 4
        %v873 = vadd.f32 %v871, %v872
        %v874 = vrot.slane %v873, 2
        %v875 = vadd.f32 %v873, %v874
        %v876 = vrot.slane %v875, 1
        %v877 = vadd.f32 %v875, %v876
        %v878 = vsel %vm681, %v471, 0.0
        %v879 = vrot.slane %v878, 4
        %v880 = vadd.f32 %v878, %v879
        %v881 = vrot.slane %v880, 2
        %v882 = vadd.f32 %v880, %v881
        %v883 = vrot.slane %v882, 1
        %v884 = vadd.f32 %v882, %v883
        %v885 = vsel %vm681, %v479, 0.0
        %v886 = vrot.slane %v885, 4
        %v887 = vadd.f32 %v885, %v886
        %v888 = vrot.slane %v887, 2
        %v889 = vadd.f32 %v887, %v888
        %v890 = vrot.slane %v889, 1
        %v891 = vadd.f32 %v889, %v890
        %v892 = vsel %vm681, %v478, 0.0
        %v893 = vrot.slane %v892, 4
        %v894 = vadd.f32 %v892, %v893
        %v895 = vrot.slane %v894, 2
        %v896 = vadd.f32 %v894, %v895
        %v897 = vrot.slane %v896, 1
        %v898 = vadd.f32 %v896, %v897
        %v899 = vsel %vm681, %v480, 0.0
        %v900 = vrot.slane %v899, 4
        %v901 = vadd.f32 %v899, %v900
        %v902 = vrot.slane %v901, 2
        %v903 = vadd.f32 %v901, %v902
        %v904 = vrot.slane %v903, 1
        %v905 = vadd.f32 %v903, %v904
        %v906 = vsel %vm681, %v488, 0.0
        %v907 = vrot.slane %v906, 4
        %v908 = vadd.f32 %v906, %v907
        %v909 = vrot.slane %v908, 2
        %v910 = vadd.f32 %v908, %v909
        %v911 = vrot.slane %v910, 1
        %v912 = vadd.f32 %v910, %v911
        %v913 = vsel %vm681, %v496, 0.0
        %v914 = vrot.slane %v913, 4
        %v915 = vadd.f32 %v913, %v914
        %v916 = vrot.slane %v915, 2
        %v917 = vadd.f32 %v915, %v916
        %v918 = vrot.slane %v917, 1
        %v919 = vadd.f32 %v917, %v918
        %v920 = vsel %vm681, %v495, 0.0
        %v921 = vrot.slane %v920, 4
        %v922 = vadd.f32 %v920, %v921
        %v923 = vrot.slane %v922, 2
        %v924 = vadd.f32 %v922, %v923
        %v925 = vrot.slane %v924, 1
        %v926 = vadd.f32 %v924, %v925
        %v927 = vsel %vm681, %v497, 0.0
        %v928 = vrot.slane %v927, 4
        %v929 = vadd.f32 %v927, %v928
        %v930 = vrot.slane %v929, 2
        %v931 = vadd.f32 %v929, %v930
        %v932 = vrot.slane %v931, 1
        %v933 = vadd.f32 %v931, %v932
        %v934 = vsel %vm681, %v505, 0.0
        %v935 = vrot.slane %v934, 4
        %v936 = vadd.f32 %v934, %v935
        %v937 = vrot.slane %v936, 2
        %v938 = vadd.f32 %v936, %v937
        %v939 = vrot.slane %v938, 1
        %v940 = vadd.f32 %v938, %v939
        %v941 = vsel %vm681, %v513, 0.0
        %v942 = vrot.slane %v941, 4
        %v943 = vadd.f32 %v941, %v942
        %v944 = vrot.slane %v943, 2
        %v945 = vadd.f32 %v943, %v944
        %v946 = vrot.slane %v945, 1
        %v947 = vadd.f32 %v945, %v946
        %v948 = vsel %vm681, %v512, 0.0
        %v949 = vrot.slane %v948, 4
        %v950 = vadd.f32 %v948, %v949
        %v951 = vrot.slane %v950, 2
        %v952 = vadd.f32 %v950, %v951
        %v953 = vrot.slane %v952, 1
        %v954 = vadd.f32 %v952, %v953
        %v955 = vsel %vm681, %v514, 0.0
        %v956 = vrot.slane %v955, 4
        %v957 = vadd.f32 %v955, %v956
        %v958 = vrot.slane %v957, 2
        %v959 = vadd.f32 %v957, %v958
        %v960 = vrot.slane %v959, 1
        %v961 = vadd.f32 %v959, %v960
        %v962 = vsel %vm681, %v522, 0.0
        %v963 = vrot.slane %v962, 4
        %v964 = vadd.f32 %v962, %v963
        %v965 = vrot.slane %v964, 2
        %v966 = vadd.f32 %v964, %v965
        %v967 = vrot.slane %v966, 1
        %v968 = vadd.f32 %v966, %v967
        %v969 = vsel %vm681, %v530, 0.0
        %v970 = vrot.slane %v969, 4
        %v971 = vadd.f32 %v969, %v970
        %v972 = vrot.slane %v971, 2
        %v973 = vadd.f32 %v971, %v972
        %v974 = vrot.slane %v973, 1
        %v975 = vadd.f32 %v973, %v974
        %v976 = vsel %vm681, %v529, 0.0
        %v977 = vrot.slane %v976, 4
        %v978 = vadd.f32 %v976, %v977
        %v979 = vrot.slane %v978, 2
        %v980 = vadd.f32 %v978, %v979
        %v981 = vrot.slane %v980, 1
        %v982 = vadd.f32 %v980, %v981
        %v983 = vsel %vm681, %v531, 0.0
        %v984 = vrot.slane %v983, 4
        %v985 = vadd.f32 %v983, %v984
        %v986 = vrot.slane %v985, 2
        %v987 = vadd.f32 %v985, %v986
        %v988 = vrot.slane %v987, 1
        %v989 = vadd.f32 %v987, %v988
        %v990 = vsel %vm681, %v539, 0.0
        %v991 = vrot.slane %v990, 4
        %v992 = vadd.f32 %v990, %v991
        %v993 = vrot.slane %v992, 2
        %v994 = vadd.f32 %v992, %v993
        %v995 = vrot.slane %v994, 1
        %v996 = vadd.f32 %v994, %v995
        %v997 = vsel %vm681, %v547, 0.0
        %v998 = vrot.slane %v997, 4
        %v999 = vadd.f32 %v997, %v998
        %v1000 = vrot.slane %v999, 2
        %v1001 = vadd.f32 %v999, %v1000
        %v1002 = vrot.slane %v1001, 1
        %v1003 = vadd.f32 %v1001, %v1002
        %v1004 = vsel %vm681, %v546, 0.0
        %v1005 = vrot.slane %v1004, 4
        %v1006 = vadd.f32 %v1004, %v1005
        %v1007 = vrot.slane %v1006, 2
        %v1008 = vadd.f32 %v1006, %v1007
        %v1009 = vrot.slane %v1008, 1
        %v1010 = vadd.f32 %v1008, %v1009
        %v1011 = vsel %vm681, %v548, 0.0
        %v1012 = vrot.slane %v1011, 4
        %v1013 = vadd.f32 %v1011, %v1012
        %v1014 = vrot.slane %v1013, 2
        %v1015 = vadd.f32 %v1013, %v1014
        %v1016 = vrot.slane %v1015, 1
        %v1017 = vadd.f32 %v1015, %v1016
        %v1018 = vsel %vm681, %v556, 0.0
        %v1019 = vrot.slane %v1018, 4
        %v1020 = vadd.f32 %v1018, %v1019
        %v1021 = vrot.slane %v1020, 2
        %v1022 = vadd.f32 %v1020, %v1021
        %v1023 = vrot.slane %v1022, 1
        %v1024 = vadd.f32 %v1022, %v1023
        %v1025 = vsel %vm681, %v564, 0.0
        %v1026 = vrot.slane %v1025, 4
        %v1027 = vadd.f32 %v1025, %v1026
        %v1028 = vrot.slane %v1027, 2
        %v1029 = vadd.f32 %v1027, %v1028
        %v1030 = vrot.slane %v1029, 1
        %v1031 = vadd.f32 %v1029, %v1030
        %v1032 = vsel %vm681, %v563, 0.0
        %v1033 = vrot.slane %v1032, 4
        %v1034 = vadd.f32 %v1032, %v1033
        %v1035 = vrot.slane %v1034, 2
        %v1036 = vadd.f32 %v1034, %v1035
        %v1037 = vrot.slane %v1036, 1
        %v1038 = vadd.f32 %v1036, %v1037
        %v1039 = vsel %vm681, %v565, 0.0
        %v1040 = vrot.slane %v1039, 4
        %v1041 = vadd.f32 %v1039, %v1040
        %v1042 = vrot.slane %v1041, 2
        %v1043 = vadd.f32 %v1041, %v1042
        %v1044 = vrot.slane %v1043, 1
        %v1045 = vadd.f32 %v1043, %v1044
        %v1046 = vsel %vm681, %v573, 0.0
        %v1047 = vrot.slane %v1046, 4
        %v1048 = vadd.f32 %v1046, %v1047
        %v1049 = vrot.slane %v1048, 2
        %v1050 = vadd.f32 %v1048, %v1049
        %v1051 = vrot.slane %v1050, 1
        %v1052 = vadd.f32 %v1050, %v1051
        %v1053 = vsel %vm681, %v581, 0.0
        %v1054 = vrot.slane %v1053, 4
        %v1055 = vadd.f32 %v1053, %v1054
        %v1056 = vrot.slane %v1055, 2
        %v1057 = vadd.f32 %v1055, %v1056
        %v1058 = vrot.slane %v1057, 1
        %v1059 = vadd.f32 %v1057, %v1058
        %v1060 = vsel %vm681, %v580, 0.0
        %v1061 = vrot.slane %v1060, 4
        %v1062 = vadd.f32 %v1060, %v1061
        %v1063 = vrot.slane %v1062, 2
        %v1064 = vadd.f32 %v1062, %v1063
        %v1065 = vrot.slane %v1064, 1
        %v1066 = vadd.f32 %v1064, %v1065
        %v1067 = vsel %vm681, %v582, 0.0
        %v1068 = vrot.slane %v1067, 4
        %v1069 = vadd.f32 %v1067, %v1068
        %v1070 = vrot.slane %v1069, 2
        %v1071 = vadd.f32 %v1069, %v1070
        %v1072 = vrot.slane %v1071, 1
        %v1073 = vadd.f32 %v1071, %v1072
        %v1074 = vsel %vm681, %v590, 0.0
        %v1075 = vrot.slane %v1074, 4
        %v1076 = vadd.f32 %v1074, %v1075
        %v1077 = vrot.slane %v1076, 2
        %v1078 = vadd.f32 %v1076, %v1077
        %v1079 = vrot.slane %v1078, 1
        %v1080 = vadd.f32 %v1078, %v1079
        %v1081 = vsel %vm681, %v598, 0.0
        %v1082 = vrot.slane %v1081, 4
        %v1083 = vadd.f32 %v1081, %v1082
        %v1084 = vrot.slane %v1083, 2
        %v1085 = vadd.f32 %v1083, %v1084
        %v1086 = vrot.slane %v1085, 1
        %v1087 = vadd.f32 %v1085, %v1086
        %v1088 = vsel %vm681, %v597, 0.0
        %v1089 = vrot.slane %v1088, 4
        %v1090 = vadd.f32 %v1088, %v1089
        %v1091 = vrot.slane %v1090, 2
        %v1092 = vadd.f32 %v1090, %v1091
        %v1093 = vrot.slane %v1092, 1
        %v1094 = vadd.f32 %v1092, %v1093
        %v1095 = vsel %vm681, %v599, 0.0
        %v1096 = vrot.slane %v1095, 4
        %v1097 = vadd.f32 %v1095, %v1096
        %v1098 = vrot.slane %v1097, 2
        %v1099 = vadd.f32 %v1097, %v1098
        %v1100 = vrot.slane %v1099, 1
        %v1101 = vadd.f32 %v1099, %v1100
        %v1102 = vsel %vm681, %v607, 0.0
        %v1103 = vrot.slane %v1102, 4
        %v1104 = vadd.f32 %v1102, %v1103
        %v1105 = vrot.slane %v1104, 2
        %v1106 = vadd.f32 %v1104, %v1105
        %v1107 = vrot.slane %v1106, 1
        %v1108 = vadd.f32 %v1106, %v1107
        %v1109 = vsel %vm681, %v615, 0.0
        %v1110 = vrot.slane %v1109, 4
        %v1111 = vadd.f32 %v1109, %v1110
        %v1112 = vrot.slane %v1111, 2
        %v1113 = vadd.f32 %v1111, %v1112
        %v1114 = vrot.slane %v1113, 1
        %v1115 = vadd.f32 %v1113, %v1114
        %v1116 = vsel %vm681, %v614, 0.0
        %v1117 = vrot.slane %v1116, 4
        %v1118 = vadd.f32 %v1116, %v1117
        %v1119 = vrot.slane %v1118, 2
        %v1120 = vadd.f32 %v1118, %v1119
        %v1121 = vrot.slane %v1120, 1
        %v1122 = vadd.f32 %v1120, %v1121
        %v1123 = vsel %vm681, %v616, 0.0
        %v1124 = vrot.slane %v1123, 4
        %v1125 = vadd.f32 %v1123, %v1124
        %v1126 = vrot.slane %v1125, 2
        %v1127 = vadd.f32 %v1125, %v1126
        %v1128 = vrot.slane %v1127, 1
        %v1129 = vadd.f32 %v1127, %v1128
        %v1130 = vmul.f32 %v688, 0.25
        %v1131 = vmul.f32 %v695, 0.25
        %v1132 = vmul.f32 %v702, 0.25
        %v1133 = vmul.f32 %v709, 0.25
        %v1134 = vmul.f32 %v716, 0.25
        %v1135 = vmul.f32 %v723, 0.25
        %v1136 = vmul.f32 %v730, 0.25
        %v1137 = vmul.f32 %v737, 0.25
        %v1138 = vmul.f32 %v744, 0.25
        %v1139 = vmul.f32 %v751, 0.25
        %v1140 = vmul.f32 %v758, 0.25
        %v1141 = vmul.f32 %v765, 0.25
        %v1142 = vmul.f32 %v772, 0.25
        %v1143 = vmul.f32 %v779, 0.25
        %v1144 = vmul.f32 %v786, 0.25
        %v1145 = vmul.f32 %v793, 0.25
        %v1146 = vmul.f32 %v800, 0.25
        %v1147 = vmul.f32 %v807, 0.25
        %v1148 = vmul.f32 %v814, 0.25
        %v1149 = vmul.f32 %v821, 0.25
        %v1150 = vmul.f32 %v828, 0.25
        %v1151 = vmul.f32 %v835, 0.25
        %v1152 = vmul.f32 %v842, 0.25
        %v1153 = vmul.f32 %v849, 0.25
        %v1154 = vmul.f32 %v856, 0.25
        %v1155 = vmul.f32 %v863, 0.25
        %v1156 = vmul.f32 %v870, 0.25
        %v1157 = vmul.f32 %v877, 0.25
        %v1158 = vmul.f32 %v884, 0.25
        %v1159 = vmul.f32 %v891, 0.25
        %v1160 = vmul.f32 %v898, 0.25
        %v1161 = vmul.f32 %v905, 0.25
        %v1162 = vmul.f32 %v912, 0.25
        %v1163 = vmul.f32 %v919, 0.25
        %v1164 = vmul.f32 %v926, 0.25
        %v1165 = vmul.f32 %v933, 0.25
        %v1166 = vmul.f32 %v940, 0.25
        %v1167 = vmul.f32 %v947, 0.25
        %v1168 = vmul.f32 %v954, 0.25
        %v1169 = vmul.f32 %v961, 0.25
        %v1170 = vmul.f32 %v968, 0.25
        %v1171 = vmul.f32 %v975, 0.25
        %v1172 = vmul.f32 %v982, 0.25
        %v1173 = vmul.f32 %v989, 0.25
        %v1174 = vmul.f32 %v996, 0.25
        %v1175 = vmul.f32 %v1003, 0.25
        %v1176 = vmul.f32 %v1010, 0.25
        %v1177 = vmul.f32 %v1017, 0.25
        %v1178 = vmul.f32 %v1024, 0.25
        %v1179 = vmul.f32 %v1031, 0.25
        %v1180 = vmul.f32 %v1038, 0.25
        %v1181 = vmul.f32 %v1045, 0.25
        %v1182 = vmul.f32 %v1052, 0.25
        %v1183 = vmul.f32 %v1059, 0.25
        %v1184 = vmul.f32 %v1066, 0.25
        %v1185 = vmul.f32 %v1073, 0.25
        %v1186 = vmul.f32 %v1080, 0.25
        %v1187 = vmul.f32 %v1087, 0.25
        %v1188 = vmul.f32 %v1094, 0.25
        %v1189 = vmul.f32 %v1101, 0.25
        %v1190 = vmul.f32 %v1108, 0.25
        %v1191 = vmul.f32 %v1115, 0.25
        %v1192 = vmul.f32 %v1122, 0.25
        %v1193 = vmul.f32 %v1129, 0.25
        %v1194 = vld [vmem:[%s1] sm:$0xf]
        %v1195 = vld [vmem:[%s2] sm:$0x1]
        %v1197 = vlaneseq
        %v1198 = vshrl.u32 %v1197, 7
        %v1199 = vsub.s32 0, %v1198
        %v1200 = vrot.slane %v1195, %v1199
        %vm1266 = vcmask 1041409
        %v1267 = vsel %vm1266, %v1131, %v1130
        %vm1268 = vcmask 1042434
        %v1269 = vsel %vm1268, %v1132, %v1267
        %vm1270 = vcmask 1043459
        %v1271 = vsel %vm1270, %v1133, %v1269
        %vm1272 = vcmask 1044484
        %v1273 = vsel %vm1272, %v1134, %v1271
        %vm1274 = vcmask 1045509
        %v1275 = vsel %vm1274, %v1135, %v1273
        %vm1276 = vcmask 1046534
        %v1277 = vsel %vm1276, %v1136, %v1275
        %vm1278 = vcmask 1047559
        %v1279 = vsel %vm1278, %v1137, %v1277
        %v1280 = vsel %vm1266, %v1139, %v1138
        %v1281 = vsel %vm1268, %v1140, %v1280
        %v1282 = vsel %vm1270, %v1141, %v1281
        %v1283 = vsel %vm1272, %v1142, %v1282
        %v1284 = vsel %vm1274, %v1143, %v1283
        %v1285 = vsel %vm1276, %v1144, %v1284
        %v1286 = vsel %vm1278, %v1145, %v1285
        %v1287 = vsel %vm1266, %v1147, %v1146
        %v1288 = vsel %vm1268, %v1148, %v1287
        %v1289 = vsel %vm1270, %v1149, %v1288
        %v1290 = vsel %vm1272, %v1150, %v1289
        %v1291 = vsel %vm1274, %v1151, %v1290
        %v1292 = vsel %vm1276, %v1152, %v1291
        %v1293 = vsel %vm1278, %v1153, %v1292
        %v1294 = vsel %vm1266, %v1155, %v1154
        %v1295 = vsel %vm1268, %v1156, %v1294
        %v1296 = vsel %vm1270, %v1157, %v1295
        %v1297 = vsel %vm1272, %v1158, %v1296
        %v1298 = vsel %vm1274, %v1159, %v1297
        %v1299 = vsel %vm1276, %v1160, %v1298
        %v1300 = vsel %vm1278, %v1161, %v1299
        %v1301 = vsel %vm1266, %v1163, %v1162
        %v1302 = vsel %vm1268, %v1164, %v1301
        %v1303 = vsel %vm1270, %v1165, %v1302
        %v1304 = vsel %vm1272, %v1166, %v1303
        %v1305 = vsel %vm1274, %v1167, %v1304
        %v1306 = vsel %vm1276, %v1168, %v1305
        %v1307 = vsel %vm1278, %v1169, %v1306
        %v1308 = vsel %vm1266, %v1171, %v1170
        %v1309 = vsel %vm1268, %v1172, %v1308
        %v1310 = vsel %vm1270, %v1173, %v1309
        %v1311 = vsel %vm1272, %v1174, %v1310
        %v1312 = vsel %vm1274, %v1175, %v1311
        %v1313 = vsel %vm1276, %v1176, %v1312
        %v1314 = vsel %vm1278, %v1177, %v1313
        %v1315 = vsel %vm1266, %v1179, %v1178
        %v1316 = vsel %vm1268, %v1180, %v1315
        %v1317 = vsel %vm1270, %v1181, %v1316
        %v1318 = vsel %vm1272, %v1182, %v1317
        %v1319 = vsel %vm1274, %v1183, %v1318
        %v1320 = vsel %vm1276, %v1184, %v1319
        %v1321 = vsel %vm1278, %v1185, %v1320
        %v1322 = vsel %vm1266, %v1187, %v1186
        %v1323 = vsel %vm1268, %v1188, %v1322
        %v1324 = vsel %vm1270, %v1189, %v1323
        %v1325 = vsel %vm1272, %v1190, %v1324
        %v1326 = vsel %vm1274, %v1191, %v1325
        %v1327 = vsel %vm1276, %v1192, %v1326
        %v1328 = vsel %vm1278, %v1193, %v1327
        %v1329 = vsel %vm280, %v1279, 0
        %v1331 = vsel %vm280, %v1286, 0
        %v1333 = vsel %vm280, %v1293, 0
        %v1335 = vsel %vm280, %v1300, 0
        %v1337 = vsel %vm280, %v1307, 0
        %v1339 = vsel %vm280, %v1314, 0
        %v1341 = vsel %vm280, %v1321, 0
        %v1343 = vsel %vm280, %v1328, 0
        %vm1345 = vcmask 1043456
        %v1347 = vsel %vm1345, %v1194, 0
        %1349 = vmatprep.subr.mxu0 0.0
        %1350 = vmatpush1.msra.mxu0 0.0
        %1351 = vmatprep.subr.mxu0 0.0
        %1352 = vmatpush1.msra.mxu0 0.0
        %1353 = vmatprep.subr.mxu0 0.0
        %1354 = vmatpush1.msra.mxu0 0.0
        %1355 = vmatprep.subr.mxu0 0.0
        %1356 = vmatpush1.msra.mxu0 0.0
        %1357 = vmatprep.subr.mxu0 0.0
        %1358 = vmatpush1.msra.mxu0 0.0
        %1359 = vmatprep.subr.mxu0 0.0
        %1360 = vmatpush1.msra.mxu0 0.0
        %1361 = vmatprep.subr.mxu0 0.0
        %1362 = vmatpush1.msra.mxu0 0.0
        %1363 = vmatprep.subr.mxu0 0.0
        %1364 = vmatpush1.msra.mxu0 0.0
        %1365 = vmatprep.subr.mxu0 0.0
        %1366 = vmatpush1.msra.mxu0 0.0
        %1367 = vmatprep.subr.mxu0 0.0
        %1368 = vmatpush1.msra.mxu0 0.0
        %1369 = vmatprep.subr.mxu0 0.0
        %1370 = vmatpush1.msra.mxu0 0.0
        %1371 = vmatprep.subr.mxu0 0.0
        %1372 = vmatpush1.msra.mxu0 0.0
        %1373 = vmatprep.subr.mxu0 0.0
        %1374 = vmatpush1.msra.mxu0 0.0
        %1375 = vmatprep.subr.mxu0 0.0
        %1376 = vmatpush1.msra.mxu0 0.0
        %1377 = vmatprep.subr.mxu0 0.0
        %1378 = vmatpush1.msra.mxu0 0.0
        %1379 = vmatprep.subr.mxu0 0.0
        %1380 = vmatpush1.msra.mxu0 %v1347
        %1381 = vmatprep.subr.mxu0 0.0
        %1382 = vmatpush2.msra.mxu0 0.0
        %1383 = vmatprep.subr.mxu0 0.0
        %1384 = vmatpush2.msra.mxu0 0.0
        %1385 = vmatprep.subr.mxu0 0.0
        %1386 = vmatpush2.msra.mxu0 0.0
        %1387 = vmatprep.subr.mxu0 0.0
        %1388 = vmatpush2.msra.mxu0 0.0
        %1389 = vmatprep.subr.mxu0 0.0
        %1390 = vmatpush2.msra.mxu0 0.0
        %1391 = vmatprep.subr.mxu0 0.0
        %1392 = vmatpush2.msra.mxu0 0.0
        %1393 = vmatprep.subr.mxu0 0.0
        %1394 = vmatpush2.msra.mxu0 0.0
        %1395 = vmatprep.subr.mxu0 0.0
        %1396 = vmatpush2.msra.mxu0 0.0
        %1397 = vmatprep.subr.mxu0 0.0
        %1398 = vmatpush2.msra.mxu0 0.0
        %1399 = vmatprep.subr.mxu0 0.0
        %1400 = vmatpush2.msra.mxu0 0.0
        %1401 = vmatprep.subr.mxu0 0.0
        %1402 = vmatpush2.msra.mxu0 0.0
        %1403 = vmatprep.subr.mxu0 0.0
        %1404 = vmatpush2.msra.mxu0 0.0
        %1405 = vmatprep.subr.mxu0 0.0
        %1406 = vmatpush2.msra.mxu0 0.0
        %1407 = vmatprep.subr.mxu0 0.0
        %1408 = vmatpush2.msra.mxu0 0.0
        %1409 = vmatprep.subr.mxu0 0.0
        %1410 = vmatpush2.msra.mxu0 0.0
        %1411 = vmatprep.subr.mxu0 0.0
        %1412 = vmatpush2.msra.mxu0 0.0
        %1413 = vmatprep.mubr.f32.mxu0 0.0
        %1414 = vmatmul.mubr.f32.gmra.mxu0 %v1329
        %v1415 = vpop.f32.mrf.mxu0
        %v1416 = vadd.f32 %v1200, %v1415
        %v1417 = vpop.f32.mrf.mxu0
        %1418 = vmatprep.mubr.f32.mxu0 0.0
        %1419 = vmatmul.mubr.f32.gmra.mxu0 %v1331
        %v1420 = vpop.f32.mrf.mxu0
        %v1421 = vadd.f32 %v1200, %v1420
        %v1422 = vpop.f32.mrf.mxu0
        %1423 = vmatprep.mubr.f32.mxu0 0.0
        %1424 = vmatmul.mubr.f32.gmra.mxu0 %v1333
        %v1425 = vpop.f32.mrf.mxu0
        %v1426 = vadd.f32 %v1200, %v1425
        %v1427 = vpop.f32.mrf.mxu0
        %1428 = vmatprep.mubr.f32.mxu0 0.0
        %1429 = vmatmul.mubr.f32.gmra.mxu0 %v1335
        %v1430 = vpop.f32.mrf.mxu0
        %v1431 = vadd.f32 %v1200, %v1430
        %v1432 = vpop.f32.mrf.mxu0
        %1433 = vmatprep.mubr.f32.mxu0 0.0
        %1434 = vmatmul.mubr.f32.gmra.mxu0 %v1337
        %v1435 = vpop.f32.mrf.mxu0
        %v1436 = vadd.f32 %v1200, %v1435
        %v1437 = vpop.f32.mrf.mxu0
        %1438 = vmatprep.mubr.f32.mxu0 0.0
        %1439 = vmatmul.mubr.f32.gmra.mxu0 %v1339
        %v1440 = vpop.f32.mrf.mxu0
        %v1441 = vadd.f32 %v1200, %v1440
        %v1442 = vpop.f32.mrf.mxu0
        %1443 = vmatprep.mubr.f32.mxu0 0.0
        %1444 = vmatmul.mubr.f32.gmra.mxu0 %v1341
        %v1445 = vpop.f32.mrf.mxu0
        %v1446 = vadd.f32 %v1200, %v1445
        %v1447 = vpop.f32.mrf.mxu0
        %1448 = vmatprep.mubr.f32.mxu0 0.0
        %1449 = vmatmul.mubr.f32.gmra.mxu0 %v1343
        %v1450 = vpop.f32.mrf.mxu0
        %v1451 = vadd.f32 %v1200, %v1450
        %v1452 = vpop.f32.mrf.mxu0
        %1453 = vdwg.mxu0
        %v1454 = vld [vmem:[%s215] sm:$0xff]
        %v1455 = vld [vmem:[%s215 + $0x8] sm:$0xff]
        %v1456 = vld [vmem:[%s215 + $0x10] sm:$0xff]
        %v1457 = vld [vmem:[%s215 + $0x18] sm:$0xff]
        %v1458 = vld [vmem:[%s215 + $0x20] sm:$0xff]
        %v1459 = vld [vmem:[%s215 + $0x28] sm:$0xff]
        %v1460 = vld [vmem:[%s215 + $0x30] sm:$0xff]
        %v1461 = vld [vmem:[%s215 + $0x38] sm:$0xff]
        %v1462 = vadd.f32 %v1416, %v1454
        %v1463 = vadd.f32 %v1421, %v1455
        %v1464 = vadd.f32 %v1426, %v1456
        %v1465 = vadd.f32 %v1431, %v1457
        %v1466 = vadd.f32 %v1436, %v1458
        %v1467 = vadd.f32 %v1441, %v1459
        %v1468 = vadd.f32 %v1446, %v1460
        %v1469 = vadd.f32 %v1451, %v1461
        %vm1470 = vcmask 64512
        %1471 = vst.msk [vmem:[%s205] sm:$0xff] %vm1470, %v1462
        %1472 = vst.msk [vmem:[%s205 + $0x8] sm:$0xff] %vm1470, %v1463
        %1473 = vst.msk [vmem:[%s205 + $0x10] sm:$0xff] %vm1470, %v1464
        %1474 = vst.msk [vmem:[%s205 + $0x18] sm:$0xff] %vm1470, %v1465
        %1475 = vst.msk [vmem:[%s205 + $0x20] sm:$0xff] %vm1470, %v1466
        %1476 = vst.msk [vmem:[%s205 + $0x28] sm:$0xff] %vm1470, %v1467
        %1477 = vst.msk [vmem:[%s205 + $0x30] sm:$0xff] %vm1470, %v1468
        %1478 = vst.msk [vmem:[%s205 + $0x38] sm:$0xff] %vm1470, %v1469
        %s1479 = sand.u32 %s120, 1
        %s1480 = scalar_lea.sflag [#allocation3], %s1479
        %s1481 = sand.u32 %s120, 1
        %s1482 = smul.addr %s1481, 64
        %s1483 = scalar_lea.vmem [#allocation2], %s1482
        // Predicated region
        $region37: #{_lambda_.7} parent=35 // pred_check
          %p1484 = pneg %p130
        $region38: #{_lambda_.7} parent=35 // pred_check_branch
          %1486 = sbr.rel (%p1484) target = $region40
        $region39: #{_lambda_.7} parent=35 // pred_region
          %s1488 = ssub.s32 1024, 1024
          %1489 = vsyncadd %s1480, %s1488
          %s1490 = smul.addr %s18, 8
          %s1491 = smul.addr %s1490, 128
          %s1492 = scalar_lea.hbm %s4, %s1491
          %s1493 = sshll.u32 %s1483, 4
          %s1494 = int_to_ptr.vmem [resolvable:$true] %s1493
          %1499 = dma.vmem_to_hbm [thread:$0]  %s1494, 1024, %s1492, %s1480, 128, 128, 8
        $region40: #{_lambda_.7} parent=35 // pred_fallthru
          _
      $region36: #{_lambda_.7} parent=5 // pred_fallthru
        _
      %p1500 = scmp.le.s32.totalorder 2, %s13
      // Predicated region
      $region41: #{_lambda_.7} parent=5 // pred_check
        %p1501 = pneg %p1500
      $region42: #{_lambda_.7} parent=5 // pred_check_branch
        %1503 = sbr.rel (%p1501) target = $region44
      $region43: #{_lambda_.7} parent=5 // pred_region
        %s1504 = ssub.s32 %s13, 2
        // Predicated region
        $region45: #{_lambda_.7} parent=43 // pred_check
          %p1505 = pneg %p136
        $region46: #{_lambda_.7} parent=43 // pred_check_branch
          %1507 = sbr.rel (%p1505) target = $region48
        $region47: #{_lambda_.7} parent=43 // pred_region
          %s1508 = sand.u32 %s121, 1
          %s1509 = scalar_lea.sflag [#allocation3], %s1508
          %s1510 = sand.u32 %s121, 1
          %s1511 = smul.addr %s1510, 64
          %s1512 = scalar_lea.vmem [#allocation2], %s1511
          %1513 = dma.done %s1509, 1024
        $region48: #{_lambda_.7} parent=43 // pred_fallthru
          _
      $region44: #{_lambda_.7} parent=5 // pred_fallthru
        _
    $region6: #{_lambda_.7} parent=1 // loop_footer
      %s17 = sadd.s32 1, %s13
    $region7: #{_lambda_.7} parent=1 // loop_footer_branch
      %12 = sbr.rel target = $region3
    $region8: #{_lambda_.7} parent=1 // loop_exit
      _
    %1514 = vsyncpa [#allocation3], 1
    %s1515 = scalar_lea.sflag [#allocation3], 1
    %1516 = vsyncpa %s1515, 1

// kernel: _lambda_.5
$region0: #{_lambda_.5}
  #allocation0 [shape = 'u32[]', space=smem, size = 0x4, offset = 0x4, fixed_abs, tag = 'smem constant byte address 0x4 - core index']
  #allocation1 [shape = 'u32[144,128]{1,0:T(1,128)}', space=vmem, size = 0x12000, scoped, tag = 'internal scratch']
  #allocation2 [shape = 'f32[256,36]{1,0:T(8,128)}', space=vmem, size = 0x20000, scoped, tag = 'scratch operand']
  %s0 = inlined_call_operand.vmem [shape: f32[2,18,18,4], index: 0, kind: input, shape index: {}]
  %s1 = inlined_call_operand.vmem [shape: f32[36,4], index: 1, kind: input, shape index: {}]
  %s2 = inlined_call_operand.vmem [shape: f32[1,4], index: 2, kind: input, shape index: {}]
  %s3 = inlined_call_operand.vmem [shape: f32[2,10,10,4], index: 3, kind: output, shape index: {}]
  %s4 = sld [smem:[#allocation0]]
  $region45: #{_lambda_.5} parent=0
    _
  %s6 = ssub.s32 1, %s4
  %s7 = scalar_select 0, %s6, %s4
  loop: start=0, step=1, limit=4
  $region2: #{_lambda_.5} parent=0 // loop_pre_header
    _
  $region3: #{_lambda_.5} parent=0 // loop_header
    %s9 = sphi 0, %s13
    %p10 = scmp.ge.s32.totalorder %s9, 4
    %s19 = sphi 0, %s21
    %s22 = sphi 0, %s19
    %s23 = sphi 0, %s22
    %s39 = sphi 0, %s23
    %s43 = sphi 0, %s43
    %s45 = sphi 0, %s43
    %s46 = sphi 0, %s45
    %s60 = sphi 0, %s46
    %s64 = sphi 0, %s64
    %s66 = sphi 0, %s64
    %s67 = sphi 0, %s66
    %s81 = sphi 0, %s67
    %s87 = sphi 0, %s89
    %s90 = sphi 0, %s87
    %s91 = sphi 0, %s90
    %s107 = sphi 0, %s91
  $region4: #{_lambda_.5} parent=0 // loop_header_branch
    %12 = sbr.rel (%p10) target = $region8
  $region5: #{_lambda_.5} parent=0 // loop_body
    %s14 = ssub.s32 %s9, 1
    %s15 = ssub.s32 %s9, 2
    %s16 = sadd.s32 %s9, 1
    %s17 = ssub.s32 %s9, %s16
    %p18 = scmp.eq.s32.totalorder %s17, 0
    %s20 = sadd.s32 %s19, 1
    %s21 = scalar_select %p18, %s19, %s20
    %p24 = pneg %p18
    %p25 = scmp.eq.s32.totalorder %s9, 1
    %p26 = por %p24, %p25
    %p27 = scmp.ne.s32.totalorder %s19, %s22
    %p28 = scmp.eq.s32.totalorder %s9, 0
    %p29 = por %p27, %p28
    %p30 = scmp.ne.s32.totalorder %s19, %s22
    %p31 = scmp.eq.s32.totalorder %s14, 1
    %p32 = por %p30, %p31
    %p33 = scmp.ne.s32.totalorder %s22, %s23
    %p34 = scmp.eq.s32.totalorder %s14, 0
    %p35 = por %p33, %p34
    %p36 = scmp.ne.s32.totalorder %s22, %s23
    %p37 = scmp.eq.s32.totalorder %s15, 1
    %p38 = por %p36, %p37
    %p40 = scmp.ne.s32.totalorder %s23, %s39
    %p41 = scmp.eq.s32.totalorder %s15, 0
    %p42 = por %p40, %p41
    %s44 = sadd.s32 %s43, 1
    %p47 = scmp.eq.s32.totalorder %s9, 1
    %p48 = scmp.ne.s32.totalorder %s43, %s45
    %p49 = scmp.eq.s32.totalorder %s9, 0
    %p50 = por %p48, %p49
    %p51 = scmp.ne.s32.totalorder %s43, %s45
    %p52 = scmp.eq.s32.totalorder %s14, 1
    %p53 = por %p51, %p52
    %p54 = scmp.ne.s32.totalorder %s45, %s46
    %p55 = scmp.eq.s32.totalorder %s14, 0
    %p56 = por %p54, %p55
    %p57 = scmp.ne.s32.totalorder %s45, %s46
    %p58 = scmp.eq.s32.totalorder %s15, 1
    %p59 = por %p57, %p58
    %p61 = scmp.ne.s32.totalorder %s46, %s60
    %p62 = scmp.eq.s32.totalorder %s15, 0
    %p63 = por %p61, %p62
    %s65 = sadd.s32 %s64, 1
    %p68 = scmp.eq.s32.totalorder %s9, 1
    %p69 = scmp.ne.s32.totalorder %s64, %s66
    %p70 = scmp.eq.s32.totalorder %s9, 0
    %p71 = por %p69, %p70
    %p72 = scmp.ne.s32.totalorder %s64, %s66
    %p73 = scmp.eq.s32.totalorder %s14, 1
    %p74 = por %p72, %p73
    %p75 = scmp.ne.s32.totalorder %s66, %s67
    %p76 = scmp.eq.s32.totalorder %s14, 0
    %p77 = por %p75, %p76
    %p78 = scmp.ne.s32.totalorder %s66, %s67
    %p79 = scmp.eq.s32.totalorder %s15, 1
    %p80 = por %p78, %p79
    %p82 = scmp.ne.s32.totalorder %s67, %s81
    %p83 = scmp.eq.s32.totalorder %s15, 0
    %p84 = por %p82, %p83
    %s85 = ssub.s32 %s9, %s16
    %p86 = scmp.eq.s32.totalorder %s85, 0
    %s88 = sadd.s32 %s87, 1
    %s89 = scalar_select %p86, %s87, %s88
    %p92 = pneg %p86
    %p93 = scmp.eq.s32.totalorder %s9, 1
    %p94 = por %p92, %p93
    %p95 = scmp.ne.s32.totalorder %s87, %s90
    %p96 = scmp.eq.s32.totalorder %s9, 0
    %p97 = por %p95, %p96
    %p98 = scmp.ne.s32.totalorder %s87, %s90
    %p99 = scmp.eq.s32.totalorder %s14, 1
    %p100 = por %p98, %p99
    %p101 = scmp.ne.s32.totalorder %s90, %s91
    %p102 = scmp.eq.s32.totalorder %s14, 0
    %p103 = por %p101, %p102
    %p104 = scmp.ne.s32.totalorder %s90, %s91
    %p105 = scmp.eq.s32.totalorder %s15, 1
    %p106 = por %p104, %p105
    %p108 = scmp.ne.s32.totalorder %s91, %s107
    %p109 = scmp.eq.s32.totalorder %s15, 0
    %p110 = por %p108, %p109
    %p111 = scmp.le.s32.totalorder 1, %s9
    %p112 = scmp.lt.s32.totalorder %s9, 3
    %p113 = pnand %p111, %p112
    %p114 = pneg %p113
    // Predicated region
    $region9: #{_lambda_.5} parent=5 // pred_check
      _
    $region10: #{_lambda_.5} parent=5 // pred_check_branch
      %116 = sbr.rel (%p113) target = $region12
    $region11: #{_lambda_.5} parent=5 // pred_region
      %s117 = ssub.s32 %s9, 1
      // Predicated region
      $region13: #{_lambda_.5} parent=11 // pred_check
        %p118 = pneg %p56
      $region14: #{_lambda_.5} parent=11 // pred_check_branch
        %120 = sbr.rel (%p118) target = $region16
      $region15: #{_lambda_.5} parent=11 // pred_region
        _
      $region16: #{_lambda_.5} parent=11 // pred_fallthru
        _
      // Predicated region
      $region17: #{_lambda_.5} parent=11 // pred_check
        %p121 = pneg %p77
      $region18: #{_lambda_.5} parent=11 // pred_check_branch
        %123 = sbr.rel (%p121) target = $region20
      $region19: #{_lambda_.5} parent=11 // pred_region
        _
      $region20: #{_lambda_.5} parent=11 // pred_fallthru
        _
    $region12: #{_lambda_.5} parent=5 // pred_fallthru
      _
    %p124 = scmp.lt.s32.totalorder %s9, 2
    // Predicated region
    $region21: #{_lambda_.5} parent=5 // pred_check
      %p125 = pneg %p124
    $region22: #{_lambda_.5} parent=5 // pred_check_branch
      %127 = sbr.rel (%p125) target = $region24
    $region23: #{_lambda_.5} parent=5 // pred_region
      // Predicated region
      $region25: #{_lambda_.5} parent=23 // pred_check
        %p128 = pneg %p29
      $region26: #{_lambda_.5} parent=23 // pred_check_branch
        %130 = sbr.rel (%p128) target = $region28
      $region27: #{_lambda_.5} parent=23 // pred_region
        %p131 = scmp.lt.s32.totalorder %s9, 1
        %s132 = scalar_select %p131, %s9, 1
        %s133 = smul.addr %s132, 54
        %s134 = smul.addr %s133, 8
        %s135 = scalar_lea.vmem %s0, %s134
      $region28: #{_lambda_.5} parent=23 // pred_fallthru
        _
    $region24: #{_lambda_.5} parent=5 // pred_fallthru
      _
    %p136 = scmp.le.s32.totalorder 1, %s9
    %p137 = scmp.lt.s32.totalorder %s9, 3
    %p138 = pnand %p136, %p137
    %p139 = pneg %p138
    // Predicated region
    $region29: #{_lambda_.5} parent=5 // pred_check
      _
    $region30: #{_lambda_.5} parent=5 // pred_check_branch
      %141 = sbr.rel (%p138) target = $region32
    $region31: #{_lambda_.5} parent=5 // pred_region
      %s142 = ssub.s32 %s9, 1
      %p143 = scmp.lt.s32.totalorder %s14, 1
      %s144 = scalar_select %p143, %s14, 1
      %s145 = smul.addr %s144, 54
      %s146 = smul.addr %s145, 8
      %s147 = scalar_lea.vmem %s0, %s146
      %p148 = pneg %p35
      %p149 = pneg %p32
      %p150 = pneg %p56
      %p151 = pneg %p53
      %p152 = pneg %p77
      %p153 = pneg %p74
      %p154 = pneg %p103
      %p155 = pneg %p100
      %p156 = scmp.lt.s32.totalorder %s14, 1
      %s157 = scalar_select %p156, %s14, 1
      %s158 = smul.addr %s157, 20
      %s159 = smul.addr %s158, 8
      %s160 = scalar_lea.vmem %s3, %s159
      %p161 = scmp.lt.s32.totalorder %s14, 1
      %s162 = scalar_select %p161, %s14, 1
      %s163 = smul.addr %s162, 54
      %s164 = smul.addr %s163, 8
      %s165 = scalar_lea.vmem %s0, %s164
      %p166 = scmp.lt.s32.totalorder %s14, 1
      %s167 = scalar_select %p166, %s14, 1
      %s168 = smul.addr %s167, 20
      %s169 = smul.addr %s168, 8
      %s170 = scalar_lea.vmem %s3, %s169
      %v171 = vld [vmem:[%s165] sm:$0xff]
      %v172 = vld [vmem:[%s165 + $0x8] sm:$0xff]
      %v173 = vld [vmem:[%s165 + $0x10] sm:$0x3]
      %v174 = vld [vmem:[%s165 + $0x18] sm:$0xff]
      %v175 = vld [vmem:[%s165 + $0x20] sm:$0xff]
      %v176 = vld [vmem:[%s165 + $0x28] sm:$0x3]
      %v177 = vld [vmem:[%s165 + $0x30] sm:$0xff]
      %v178 = vld [vmem:[%s165 + $0x38] sm:$0xff]
      %v179 = vld [vmem:[%s165 + $0x40] sm:$0x3]
      %v180 = vld [vmem:[%s165 + $0x48] sm:$0xff]
      %v181 = vld [vmem:[%s165 + $0x50] sm:$0xff]
      %v182 = vld [vmem:[%s165 + $0x58] sm:$0x3]
      %v183 = vld [vmem:[%s165 + $0x60] sm:$0xff]
      %v184 = vld [vmem:[%s165 + $0x68] sm:$0xff]
      %v185 = vld [vmem:[%s165 + $0x70] sm:$0x3]
      %v186 = vld [vmem:[%s165 + $0x78] sm:$0xff]
      %v187 = vld [vmem:[%s165 + $0x80] sm:$0xff]
      %v188 = vld [vmem:[%s165 + $0x88] sm:$0x3]
      %v189 = vld [vmem:[%s165 + $0x90] sm:$0xff]
      %v190 = vld [vmem:[%s165 + $0x98] sm:$0xff]
      %v191 = vld [vmem:[%s165 + $0xa0] sm:$0x3]
      %v192 = vld [vmem:[%s165 + $0xa8] sm:$0xff]
      %v193 = vld [vmem:[%s165 + $0xb0] sm:$0xff]
      %v194 = vld [vmem:[%s165 + $0xb8] sm:$0x3]
      %v195 = vld [vmem:[%s165 + $0xc0] sm:$0xff]
      %v196 = vld [vmem:[%s165 + $0xc8] sm:$0xff]
      %v197 = vld [vmem:[%s165 + $0xd0] sm:$0x3]
      %v198 = vld [vmem:[%s165 + $0xd8] sm:$0xff]
      %v199 = vld [vmem:[%s165 + $0xe0] sm:$0xff]
      %v200 = vld [vmem:[%s165 + $0xe8] sm:$0x3]
      %v201 = vld [vmem:[%s165 + $0xf0] sm:$0xff]
      %v202 = vld [vmem:[%s165 + $0xf8] sm:$0xff]
      %v203 = vld [vmem:[%s165 + $0x100] sm:$0x3]
      %v204 = vld [vmem:[%s165 + $0x108] sm:$0xff]
      %v205 = vld [vmem:[%s165 + $0x110] sm:$0xff]
      %v206 = vld [vmem:[%s165 + $0x118] sm:$0x3]
      %v207 = vld [vmem:[%s165 + $0x120] sm:$0xff]
      %v208 = vld [vmem:[%s165 + $0x128] sm:$0xff]
      %v209 = vld [vmem:[%s165 + $0x130] sm:$0x3]
      %v210 = vld [vmem:[%s165 + $0x138] sm:$0xff]
      %v211 = vld [vmem:[%s165 + $0x140] sm:$0xff]
      %v212 = vld [vmem:[%s165 + $0x148] sm:$0x3]
      %v213 = vld [vmem:[%s165 + $0x150] sm:$0xff]
      %v214 = vld [vmem:[%s165 + $0x158] sm:$0xff]
      %v215 = vld [vmem:[%s165 + $0x160] sm:$0x3]
      %v216 = vld [vmem:[%s165 + $0x168] sm:$0xff]
      %v217 = vld [vmem:[%s165 + $0x170] sm:$0xff]
      %v218 = vld [vmem:[%s165 + $0x178] sm:$0x3]
      %v219 = vld [vmem:[%s165 + $0x180] sm:$0xff]
      %v220 = vld [vmem:[%s165 + $0x188] sm:$0xff]
      %v221 = vld [vmem:[%s165 + $0x190] sm:$0x3]
      %v222 = vld [vmem:[%s165 + $0x198] sm:$0xff]
      %v223 = vld [vmem:[%s165 + $0x1a0] sm:$0xff]
      %v224 = vld [vmem:[%s165 + $0x1a8] sm:$0x3]
      %vm225 = vcmask 31744
      %226 = vst.msk [vmem:[#allocation2] sm:$0xff] %vm225, %v171
      %227 = vst.msk [vmem:[#allocation2 + $0x8] sm:$0xff] %vm225, %v172
      %228 = vst.msk [vmem:[#allocation2 + $0x10] sm:$0xff] %vm225, %v174
      %229 = vst.msk [vmem:[#allocation2 + $0x18] sm:$0xff] %vm225, %v175
      %230 = vst.msk [vmem:[#allocation2 + $0x20] sm:$0xff] %vm225, %v177
      %231 = vst.msk [vmem:[#allocation2 + $0x28] sm:$0xff] %vm225, %v178
      %232 = vst.msk [vmem:[#allocation2 + $0x30] sm:$0xff] %vm225, %v180
      %233 = vst.msk [vmem:[#allocation2 + $0x38] sm:$0xff] %vm225, %v181
      %234 = vst.msk [vmem:[#allocation2 + $0x40] sm:$0xff] %vm225, %v183
      %235 = vst.msk [vmem:[#allocation2 + $0x48] sm:$0xff] %vm225, %v184
      %236 = vst.msk [vmem:[#allocation2 + $0x50] sm:$0xff] %vm225, %v186
      %237 = vst.msk [vmem:[#allocation2 + $0x58] sm:$0xff] %vm225, %v187
      %238 = vst.msk [vmem:[#allocation2 + $0x60] sm:$0xff] %vm225, %v189
      %239 = vst.msk [vmem:[#allocation2 + $0x68] sm:$0xff] %vm225, %v190
      %240 = vst.msk [vmem:[#allocation2 + $0x70] sm:$0xff] %vm225, %v192
      %241 = vst.msk [vmem:[#allocation2 + $0x78] sm:$0xff] %vm225, %v193
      %242 = vst.msk [vmem:[#allocation2 + $0x80] sm:$0xff] %vm225, %v195
      %243 = vst.msk [vmem:[#allocation2 + $0x88] sm:$0xff] %vm225, %v196
      %244 = vst.msk [vmem:[#allocation2 + $0x90] sm:$0xff] %vm225, %v198
      %245 = vst.msk [vmem:[#allocation2 + $0x98] sm:$0xff] %vm225, %v199
      %246 = vst.msk [vmem:[#allocation2 + $0xa0] sm:$0xff] %vm225, %v201
      %247 = vst.msk [vmem:[#allocation2 + $0xa8] sm:$0xff] %vm225, %v202
      %248 = vst.msk [vmem:[#allocation2 + $0xb0] sm:$0xff] %vm225, %v204
      %249 = vst.msk [vmem:[#allocation2 + $0xb8] sm:$0xff] %vm225, %v205
      %250 = vst.msk [vmem:[#allocation2 + $0xc0] sm:$0xff] %vm225, %v207
      %251 = vst.msk [vmem:[#allocation2 + $0xc8] sm:$0xff] %vm225, %v208
      %252 = vst.msk [vmem:[#allocation2 + $0xd0] sm:$0xff] %vm225, %v210
      %253 = vst.msk [vmem:[#allocation2 + $0xd8] sm:$0xff] %vm225, %v211
      %254 = vst.msk [vmem:[#allocation2 + $0xe0] sm:$0xff] %vm225, %v213
      %255 = vst.msk [vmem:[#allocation2 + $0xe8] sm:$0xff] %vm225, %v214
      %256 = vst.msk [vmem:[#allocation2 + $0xf0] sm:$0xff] %vm225, %v216
      %257 = vst.msk [vmem:[#allocation2 + $0xf8] sm:$0xff] %vm225, %v217
      %vm306 = vcmask 1046528
      %v307 = vrot.slane %v171, 1
      %v308 = vrot.slane %v172, 1
      %v309 = vsel %vm306, %v307, %v308
      %v310 = vrot.slane %v173, 1
      %v311 = vsel %vm306, %v308, %v310
      %v312 = vrot.slane %v174, 1
      %v313 = vrot.slane %v175, 1
      %v314 = vsel %vm306, %v312, %v313
      %v315 = vrot.slane %v176, 1
      %v316 = vsel %vm306, %v313, %v315
      %v317 = vrot.slane %v177, 1
      %v318 = vrot.slane %v178, 1
      %v319 = vsel %vm306, %v317, %v318
      %v320 = vrot.slane %v179, 1
      %v321 = vsel %vm306, %v318, %v320
      %v322 = vrot.slane %v180, 1
      %v323 = vrot.slane %v181, 1
      %v324 = vsel %vm306, %v322, %v323
      %v325 = vrot.slane %v182, 1
      %v326 = vsel %vm306, %v323, %v325
      %v327 = vrot.slane %v183, 1
      %v328 = vrot.slane %v184, 1
      %v329 = vsel %vm306, %v327, %v328
      %v330 = vrot.slane %v185, 1
      %v331 = vsel %vm306, %v328, %v330
      %v332 = vrot.slane %v186, 1
      %v333 = vrot.slane %v187, 1
      %v334 = vsel %vm306, %v332, %v333
      %v335 = vrot.slane %v188, 1
      %v336 = vsel %vm306, %v333, %v335
      %v337 = vrot.slane %v189, 1
      %v338 = vrot.slane %v190, 1
      %v339 = vsel %vm306, %v337, %v338
      %v340 = vrot.slane %v191, 1
      %v341 = vsel %vm306, %v338, %v340
      %v342 = vrot.slane %v192, 1
      %v343 = vrot.slane %v193, 1
      %v344 = vsel %vm306, %v342, %v343
      %v345 = vrot.slane %v194, 1
      %v346 = vsel %vm306, %v343, %v345
      %v347 = vrot.slane %v195, 1
      %v348 = vrot.slane %v196, 1
      %v349 = vsel %vm306, %v347, %v348
      %v350 = vrot.slane %v197, 1
      %v351 = vsel %vm306, %v348, %v350
      %v352 = vrot.slane %v198, 1
      %v353 = vrot.slane %v199, 1
      %v354 = vsel %vm306, %v352, %v353
      %v355 = vrot.slane %v200, 1
      %v356 = vsel %vm306, %v353, %v355
      %v357 = vrot.slane %v201, 1
      %v358 = vrot.slane %v202, 1
      %v359 = vsel %vm306, %v357, %v358
      %v360 = vrot.slane %v203, 1
      %v361 = vsel %vm306, %v358, %v360
      %v362 = vrot.slane %v204, 1
      %v363 = vrot.slane %v205, 1
      %v364 = vsel %vm306, %v362, %v363
      %v365 = vrot.slane %v206, 1
      %v366 = vsel %vm306, %v363, %v365
      %v367 = vrot.slane %v207, 1
      %v368 = vrot.slane %v208, 1
      %v369 = vsel %vm306, %v367, %v368
      %v370 = vrot.slane %v209, 1
      %v371 = vsel %vm306, %v368, %v370
      %v372 = vrot.slane %v210, 1
      %v373 = vrot.slane %v211, 1
      %v374 = vsel %vm306, %v372, %v373
      %v375 = vrot.slane %v212, 1
      %v376 = vsel %vm306, %v373, %v375
      %v377 = vrot.slane %v213, 1
      %v378 = vrot.slane %v214, 1
      %v379 = vsel %vm306, %v377, %v378
      %v380 = vrot.slane %v215, 1
      %v381 = vsel %vm306, %v378, %v380
      %v382 = vrot.slane %v216, 1
      %v383 = vrot.slane %v217, 1
      %v384 = vsel %vm306, %v382, %v383
      %v385 = vrot.slane %v218, 1
      %v386 = vsel %vm306, %v383, %v385
      %387 = vrot.lane.b32.xlu0 %v309, 4
      %v388 = vpop.permute.xlu0 %387
      %389 = vrot.lane.b32.xlu0 %v311, 4
      %v390 = vpop.permute.xlu0 %389
      %391 = vrot.lane.b32.xlu0 %v314, 4
      %v392 = vpop.permute.xlu0 %391
      %393 = vrot.lane.b32.xlu0 %v316, 4
      %v394 = vpop.permute.xlu0 %393
      %395 = vrot.lane.b32.xlu0 %v319, 4
      %v396 = vpop.permute.xlu0 %395
      %397 = vrot.lane.b32.xlu0 %v321, 4
      %v398 = vpop.permute.xlu0 %397
      %399 = vrot.lane.b32.xlu0 %v324, 4
      %v400 = vpop.permute.xlu0 %399
      %401 = vrot.lane.b32.xlu0 %v326, 4
      %v402 = vpop.permute.xlu0 %401
      %403 = vrot.lane.b32.xlu0 %v329, 4
      %v404 = vpop.permute.xlu0 %403
      %405 = vrot.lane.b32.xlu0 %v331, 4
      %v406 = vpop.permute.xlu0 %405
      %407 = vrot.lane.b32.xlu0 %v334, 4
      %v408 = vpop.permute.xlu0 %407
      %409 = vrot.lane.b32.xlu0 %v336, 4
      %v410 = vpop.permute.xlu0 %409
      %411 = vrot.lane.b32.xlu0 %v339, 4
      %v412 = vpop.permute.xlu0 %411
      %413 = vrot.lane.b32.xlu0 %v341, 4
      %v414 = vpop.permute.xlu0 %413
      %415 = vrot.lane.b32.xlu0 %v344, 4
      %v416 = vpop.permute.xlu0 %415
      %417 = vrot.lane.b32.xlu0 %v346, 4
      %v418 = vpop.permute.xlu0 %417
      %419 = vrot.lane.b32.xlu0 %v349, 4
      %v420 = vpop.permute.xlu0 %419
      %421 = vrot.lane.b32.xlu0 %v351, 4
      %v422 = vpop.permute.xlu0 %421
      %423 = vrot.lane.b32.xlu0 %v354, 4
      %v424 = vpop.permute.xlu0 %423
      %425 = vrot.lane.b32.xlu0 %v356, 4
      %v426 = vpop.permute.xlu0 %425
      %427 = vrot.lane.b32.xlu0 %v359, 4
      %v428 = vpop.permute.xlu0 %427
      %429 = vrot.lane.b32.xlu0 %v361, 4
      %v430 = vpop.permute.xlu0 %429
      %431 = vrot.lane.b32.xlu0 %v364, 4
      %v432 = vpop.permute.xlu0 %431
      %433 = vrot.lane.b32.xlu0 %v366, 4
      %v434 = vpop.permute.xlu0 %433
      %435 = vrot.lane.b32.xlu0 %v369, 4
      %v436 = vpop.permute.xlu0 %435
      %437 = vrot.lane.b32.xlu0 %v371, 4
      %v438 = vpop.permute.xlu0 %437
      %439 = vrot.lane.b32.xlu0 %v374, 4
      %v440 = vpop.permute.xlu0 %439
      %441 = vrot.lane.b32.xlu0 %v376, 4
      %v442 = vpop.permute.xlu0 %441
      %443 = vrot.lane.b32.xlu0 %v379, 4
      %v444 = vpop.permute.xlu0 %443
      %445 = vrot.lane.b32.xlu0 %v381, 4
      %v446 = vpop.permute.xlu0 %445
      %447 = vrot.lane.b32.xlu0 %v384, 4
      %v448 = vpop.permute.xlu0 %447
      %449 = vrot.lane.b32.xlu0 %v386, 4
      %v450 = vpop.permute.xlu0 %449
      %vm483 = vcmask 64544
      %484 = vst.msk [vmem:[#allocation2] sm:$0xff] %vm483, %v388
      %485 = vst.msk [vmem:[#allocation2 + $0x8] sm:$0xff] %vm483, %v390
      %486 = vst.msk [vmem:[#allocation2 + $0x10] sm:$0xff] %vm483, %v392
      %487 = vst.msk [vmem:[#allocation2 + $0x18] sm:$0xff] %vm483, %v394
      %488 = vst.msk [vmem:[#allocation2 + $0x20] sm:$0xff] %vm483, %v396
      %489 = vst.msk [vmem:[#allocation2 + $0x28] sm:$0xff] %vm483, %v398
      %490 = vst.msk [vmem:[#allocation2 + $0x30] sm:$0xff] %vm483, %v400
      %491 = vst.msk [vmem:[#allocation2 + $0x38] sm:$0xff] %vm483, %v402
      %492 = vst.msk [vmem:[#allocation2 + $0x40] sm:$0xff] %vm483, %v404
      %493 = vst.msk [vmem:[#allocation2 + $0x48] sm:$0xff] %vm483, %v406
      %494 = vst.msk [vmem:[#allocation2 + $0x50] sm:$0xff] %vm483, %v408
      %495 = vst.msk [vmem:[#allocation2 + $0x58] sm:$0xff] %vm483, %v410
      %496 = vst.msk [vmem:[#allocation2 + $0x60] sm:$0xff] %vm483, %v412
      %497 = vst.msk [vmem:[#allocation2 + $0x68] sm:$0xff] %vm483, %v414
      %498 = vst.msk [vmem:[#allocation2 + $0x70] sm:$0xff] %vm483, %v416
      %499 = vst.msk [vmem:[#allocation2 + $0x78] sm:$0xff] %vm483, %v418
      %500 = vst.msk [vmem:[#allocation2 + $0x80] sm:$0xff] %vm483, %v420
      %501 = vst.msk [vmem:[#allocation2 + $0x88] sm:$0xff] %vm483, %v422
      %502 = vst.msk [vmem:[#allocation2 + $0x90] sm:$0xff] %vm483, %v424
      %503 = vst.msk [vmem:[#allocation2 + $0x98] sm:$0xff] %vm483, %v426
      %504 = vst.msk [vmem:[#allocation2 + $0xa0] sm:$0xff] %vm483, %v428
      %505 = vst.msk [vmem:[#allocation2 + $0xa8] sm:$0xff] %vm483, %v430
      %506 = vst.msk [vmem:[#allocation2 + $0xb0] sm:$0xff] %vm483, %v432
      %507 = vst.msk [vmem:[#allocation2 + $0xb8] sm:$0xff] %vm483, %v434
      %508 = vst.msk [vmem:[#allocation2 + $0xc0] sm:$0xff] %vm483, %v436
      %509 = vst.msk [vmem:[#allocation2 + $0xc8] sm:$0xff] %vm483, %v438
      %510 = vst.msk [vmem:[#allocation2 + $0xd0] sm:$0xff] %vm483, %v440
      %511 = vst.msk [vmem:[#allocation2 + $0xd8] sm:$0xff] %vm483, %v442
      %512 = vst.msk [vmem:[#allocation2 + $0xe0] sm:$0xff] %vm483, %v444
      %513 = vst.msk [vmem:[#allocation2 + $0xe8] sm:$0xff] %vm483, %v446
      %514 = vst.msk [vmem:[#allocation2 + $0xf0] sm:$0xff] %vm483, %v448
      %515 = vst.msk [vmem:[#allocation2 + $0xf8] sm:$0xff] %vm483, %v450
      %vm516 = vcmask 1045504
      %v517 = vrot.slane %v171, 2
      %v518 = vrot.slane %v172, 2
      %v519 = vsel %vm516, %v517, %v518
      %v520 = vrot.slane %v173, 2
      %v521 = vsel %vm516, %v518, %v520
      %v522 = vrot.slane %v174, 2
      %v523 = vrot.slane %v175, 2
      %v524 = vsel %vm516, %v522, %v523
      %v525 = vrot.slane %v176, 2
      %v526 = vsel %vm516, %v523, %v525
      %v527 = vrot.slane %v177, 2
      %v528 = vrot.slane %v178, 2
      %v529 = vsel %vm516, %v527, %v528
      %v530 = vrot.slane %v179, 2
      %v531 = vsel %vm516, %v528, %v530
      %v532 = vrot.slane %v180, 2
      %v533 = vrot.slane %v181, 2
      %v534 = vsel %vm516, %v532, %v533
      %v535 = vrot.slane %v182, 2
      %v536 = vsel %vm516, %v533, %v535
      %v537 = vrot.slane %v183, 2
      %v538 = vrot.slane %v184, 2
      %v539 = vsel %vm516, %v537, %v538
      %v540 = vrot.slane %v185, 2
      %v541 = vsel %vm516, %v538, %v540
      %v542 = vrot.slane %v186, 2
      %v543 = vrot.slane %v187, 2
      %v544 = vsel %vm516, %v542, %v543
      %v545 = vrot.slane %v188, 2
      %v546 = vsel %vm516, %v543, %v545
      %v547 = vrot.slane %v189, 2
      %v548 = vrot.slane %v190, 2
      %v549 = vsel %vm516, %v547, %v548
      %v550 = vrot.slane %v191, 2
      %v551 = vsel %vm516, %v548, %v550
      %v552 = vrot.slane %v192, 2
      %v553 = vrot.slane %v193, 2
      %v554 = vsel %vm516, %v552, %v553
      %v555 = vrot.slane %v194, 2
      %v556 = vsel %vm516, %v553, %v555
      %v557 = vrot.slane %v195, 2
      %v558 = vrot.slane %v196, 2
      %v559 = vsel %vm516, %v557, %v558
      %v560 = vrot.slane %v197, 2
      %v561 = vsel %vm516, %v558, %v560
      %v562 = vrot.slane %v198, 2
      %v563 = vrot.slane %v199, 2
      %v564 = vsel %vm516, %v562, %v563
      %v565 = vrot.slane %v200, 2
      %v566 = vsel %vm516, %v563, %v565
      %v567 = vrot.slane %v201, 2
      %v568 = vrot.slane %v202, 2
      %v569 = vsel %vm516, %v567, %v568
      %v570 = vrot.slane %v203, 2
      %v571 = vsel %vm516, %v568, %v570
      %v572 = vrot.slane %v204, 2
      %v573 = vrot.slane %v205, 2
      %v574 = vsel %vm516, %v572, %v573
      %v575 = vrot.slane %v206, 2
      %v576 = vsel %vm516, %v573, %v575
      %v577 = vrot.slane %v207, 2
      %v578 = vrot.slane %v208, 2
      %v579 = vsel %vm516, %v577, %v578
      %v580 = vrot.slane %v209, 2
      %v581 = vsel %vm516, %v578, %v580
      %v582 = vrot.slane %v210, 2
      %v583 = vrot.slane %v211, 2
      %v584 = vsel %vm516, %v582, %v583
      %v585 = vrot.slane %v212, 2
      %v586 = vsel %vm516, %v583, %v585
      %v587 = vrot.slane %v213, 2
      %v588 = vrot.slane %v214, 2
      %v589 = vsel %vm516, %v587, %v588
      %v590 = vrot.slane %v215, 2
      %v591 = vsel %vm516, %v588, %v590
      %v592 = vrot.slane %v216, 2
      %v593 = vrot.slane %v217, 2
      %v594 = vsel %vm516, %v592, %v593
      %v595 = vrot.slane %v218, 2
      %v596 = vsel %vm516, %v593, %v595
      %597 = vrot.lane.b32.xlu0 %v519, 8
      %v598 = vpop.permute.xlu0 %597
      %599 = vrot.lane.b32.xlu0 %v521, 8
      %v600 = vpop.permute.xlu0 %599
      %601 = vrot.lane.b32.xlu0 %v524, 8
      %v602 = vpop.permute.xlu0 %601
      %603 = vrot.lane.b32.xlu0 %v526, 8
      %v604 = vpop.permute.xlu0 %603
      %605 = vrot.lane.b32.xlu0 %v529, 8
      %v606 = vpop.permute.xlu0 %605
      %607 = vrot.lane.b32.xlu0 %v531, 8
      %v608 = vpop.permute.xlu0 %607
      %609 = vrot.lane.b32.xlu0 %v534, 8
      %v610 = vpop.permute.xlu0 %609
      %611 = vrot.lane.b32.xlu0 %v536, 8
      %v612 = vpop.permute.xlu0 %611
      %613 = vrot.lane.b32.xlu0 %v539, 8
      %v614 = vpop.permute.xlu0 %613
      %615 = vrot.lane.b32.xlu0 %v541, 8
      %v616 = vpop.permute.xlu0 %615
      %617 = vrot.lane.b32.xlu0 %v544, 8
      %v618 = vpop.permute.xlu0 %617
      %619 = vrot.lane.b32.xlu0 %v546, 8
      %v620 = vpop.permute.xlu0 %619
      %621 = vrot.lane.b32.xlu0 %v549, 8
      %v622 = vpop.permute.xlu0 %621
      %623 = vrot.lane.b32.xlu0 %v551, 8
      %v624 = vpop.permute.xlu0 %623
      %625 = vrot.lane.b32.xlu0 %v554, 8
      %v626 = vpop.permute.xlu0 %625
      %627 = vrot.lane.b32.xlu0 %v556, 8
      %v628 = vpop.permute.xlu0 %627
      %629 = vrot.lane.b32.xlu0 %v559, 8
      %v630 = vpop.permute.xlu0 %629
      %631 = vrot.lane.b32.xlu0 %v561, 8
      %v632 = vpop.permute.xlu0 %631
      %633 = vrot.lane.b32.xlu0 %v564, 8
      %v634 = vpop.permute.xlu0 %633
      %635 = vrot.lane.b32.xlu0 %v566, 8
      %v636 = vpop.permute.xlu0 %635
      %637 = vrot.lane.b32.xlu0 %v569, 8
      %v638 = vpop.permute.xlu0 %637
      %639 = vrot.lane.b32.xlu0 %v571, 8
      %v640 = vpop.permute.xlu0 %639
      %641 = vrot.lane.b32.xlu0 %v574, 8
      %v642 = vpop.permute.xlu0 %641
      %643 = vrot.lane.b32.xlu0 %v576, 8
      %v644 = vpop.permute.xlu0 %643
      %645 = vrot.lane.b32.xlu0 %v579, 8
      %v646 = vpop.permute.xlu0 %645
      %647 = vrot.lane.b32.xlu0 %v581, 8
      %v648 = vpop.permute.xlu0 %647
      %649 = vrot.lane.b32.xlu0 %v584, 8
      %v650 = vpop.permute.xlu0 %649
      %651 = vrot.lane.b32.xlu0 %v586, 8
      %v652 = vpop.permute.xlu0 %651
      %653 = vrot.lane.b32.xlu0 %v589, 8
      %v654 = vpop.permute.xlu0 %653
      %655 = vrot.lane.b32.xlu0 %v591, 8
      %v656 = vpop.permute.xlu0 %655
      %657 = vrot.lane.b32.xlu0 %v594, 8
      %v658 = vpop.permute.xlu0 %657
      %659 = vrot.lane.b32.xlu0 %v596, 8
      %v660 = vpop.permute.xlu0 %659
      %vm693 = vcmask 97344
      %694 = vst.msk [vmem:[#allocation2] sm:$0xff] %vm693, %v598
      %695 = vst.msk [vmem:[#allocation2 + $0x8] sm:$0xff] %vm693, %v600
      %696 = vst.msk [vmem:[#allocation2 + $0x10] sm:$0xff] %vm693, %v602
      %697 = vst.msk [vmem:[#allocation2 + $0x18] sm:$0xff] %vm693, %v604
      %698 = vst.msk [vmem:[#allocation2 + $0x20] sm:$0xff] %vm693, %v606
      %699 = vst.msk [vmem:[#allocation2 + $0x28] sm:$0xff] %vm693, %v608
      %700 = vst.msk [vmem:[#allocation2 + $0x30] sm:$0xff] %vm693, %v610
      %701 = vst.msk [vmem:[#allocation2 + $0x38] sm:$0xff] %vm693, %v612
      %702 = vst.msk [vmem:[#allocation2 + $0x40] sm:$0xff] %vm693, %v614
      %703 = vst.msk [vmem:[#allocation2 + $0x48] sm:$0xff] %vm693, %v616
      %704 = vst.msk [vmem:[#allocation2 + $0x50] sm:$0xff] %vm693, %v618
      %705 = vst.msk [vmem:[#allocation2 + $0x58] sm:$0xff] %vm693, %v620
      %706 = vst.msk [vmem:[#allocation2 + $0x60] sm:$0xff] %vm693, %v622
      %707 = vst.msk [vmem:[#allocation2 + $0x68] sm:$0xff] %vm693, %v624
      %708 = vst.msk [vmem:[#allocation2 + $0x70] sm:$0xff] %vm693, %v626
      %709 = vst.msk [vmem:[#allocation2 + $0x78] sm:$0xff] %vm693, %v628
      %710 = vst.msk [vmem:[#allocation2 + $0x80] sm:$0xff] %vm693, %v630
      %711 = vst.msk [vmem:[#allocation2 + $0x88] sm:$0xff] %vm693, %v632
      %712 = vst.msk [vmem:[#allocation2 + $0x90] sm:$0xff] %vm693, %v634
      %713 = vst.msk [vmem:[#allocation2 + $0x98] sm:$0xff] %vm693, %v636
      %714 = vst.msk [vmem:[#allocation2 + $0xa0] sm:$0xff] %vm693, %v638
      %715 = vst.msk [vmem:[#allocation2 + $0xa8] sm:$0xff] %vm693, %v640
      %716 = vst.msk [vmem:[#allocation2 + $0xb0] sm:$0xff] %vm693, %v642
      %717 = vst.msk [vmem:[#allocation2 + $0xb8] sm:$0xff] %vm693, %v644
      %718 = vst.msk [vmem:[#allocation2 + $0xc0] sm:$0xff] %vm693, %v646
      %719 = vst.msk [vmem:[#allocation2 + $0xc8] sm:$0xff] %vm693, %v648
      %720 = vst.msk [vmem:[#allocation2 + $0xd0] sm:$0xff] %vm693, %v650
      %721 = vst.msk [vmem:[#allocation2 + $0xd8] sm:$0xff] %vm693, %v652
      %722 = vst.msk [vmem:[#allocation2 + $0xe0] sm:$0xff] %vm693, %v654
      %723 = vst.msk [vmem:[#allocation2 + $0xe8] sm:$0xff] %vm693, %v656
      %724 = vst.msk [vmem:[#allocation2 + $0xf0] sm:$0xff] %vm693, %v658
      %725 = vst.msk [vmem:[#allocation2 + $0xf8] sm:$0xff] %vm693, %v660
      %728 = vrot.lane.b32.xlu0 %v174, 12
      %v729 = vpop.permute.xlu0 %728
      %730 = vrot.lane.b32.xlu0 %v175, 12
      %v731 = vpop.permute.xlu0 %730
      %732 = vrot.lane.b32.xlu0 %v177, 12
      %v733 = vpop.permute.xlu0 %732
      %734 = vrot.lane.b32.xlu0 %v178, 12
      %v735 = vpop.permute.xlu0 %734
      %736 = vrot.lane.b32.xlu0 %v180, 12
      %v737 = vpop.permute.xlu0 %736
      %738 = vrot.lane.b32.xlu0 %v181, 12
      %v739 = vpop.permute.xlu0 %738
      %740 = vrot.lane.b32.xlu0 %v183, 12
      %v741 = vpop.permute.xlu0 %740
      %742 = vrot.lane.b32.xlu0 %v184, 12
      %v743 = vpop.permute.xlu0 %742
      %744 = vrot.lane.b32.xlu0 %v186, 12
      %v745 = vpop.permute.xlu0 %744
      %746 = vrot.lane.b32.xlu0 %v187, 12
      %v747 = vpop.permute.xlu0 %746
      %748 = vrot.lane.b32.xlu0 %v189, 12
      %v749 = vpop.permute.xlu0 %748
      %750 = vrot.lane.b32.xlu0 %v190, 12
      %v751 = vpop.permute.xlu0 %750
      %752 = vrot.lane.b32.xlu0 %v192, 12
      %v753 = vpop.permute.xlu0 %752
      %754 = vrot.lane.b32.xlu0 %v193, 12
      %v755 = vpop.permute.xlu0 %754
      %756 = vrot.lane.b32.xlu0 %v195, 12
      %v757 = vpop.permute.xlu0 %756
      %758 = vrot.lane.b32.xlu0 %v196, 12
      %v759 = vpop.permute.xlu0 %758
      %760 = vrot.lane.b32.xlu0 %v198, 12
      %v761 = vpop.permute.xlu0 %760
      %762 = vrot.lane.b32.xlu0 %v199, 12
      %v763 = vpop.permute.xlu0 %762
      %764 = vrot.lane.b32.xlu0 %v201, 12
      %v765 = vpop.permute.xlu0 %764
      %766 = vrot.lane.b32.xlu0 %v202, 12
      %v767 = vpop.permute.xlu0 %766
      %768 = vrot.lane.b32.xlu0 %v204, 12
      %v769 = vpop.permute.xlu0 %768
      %770 = vrot.lane.b32.xlu0 %v205, 12
      %v771 = vpop.permute.xlu0 %770
      %772 = vrot.lane.b32.xlu0 %v207, 12
      %v773 = vpop.permute.xlu0 %772
      %774 = vrot.lane.b32.xlu0 %v208, 12
      %v775 = vpop.permute.xlu0 %774
      %776 = vrot.lane.b32.xlu0 %v210, 12
      %v777 = vpop.permute.xlu0 %776
      %778 = vrot.lane.b32.xlu0 %v211, 12
      %v779 = vpop.permute.xlu0 %778
      %780 = vrot.lane.b32.xlu0 %v213, 12
      %v781 = vpop.permute.xlu0 %780
      %782 = vrot.lane.b32.xlu0 %v214, 12
      %v783 = vpop.permute.xlu0 %782
      %784 = vrot.lane.b32.xlu0 %v216, 12
      %v785 = vpop.permute.xlu0 %784
      %786 = vrot.lane.b32.xlu0 %v217, 12
      %v787 = vpop.permute.xlu0 %786
      %788 = vrot.lane.b32.xlu0 %v219, 12
      %v789 = vpop.permute.xlu0 %788
      %790 = vrot.lane.b32.xlu0 %v220, 12
      %v791 = vpop.permute.xlu0 %790
      %vm824 = vcmask 130144
      %825 = vst.msk [vmem:[#allocation2] sm:$0xff] %vm824, %v729
      %826 = vst.msk [vmem:[#allocation2 + $0x8] sm:$0xff] %vm824, %v731
      %827 = vst.msk [vmem:[#allocation2 + $0x10] sm:$0xff] %vm824, %v733
      %828 = vst.msk [vmem:[#allocation2 + $0x18] sm:$0xff] %vm824, %v735
      %829 = vst.msk [vmem:[#allocation2 + $0x20] sm:$0xff] %vm824, %v737
      %830 = vst.msk [vmem:[#allocation2 + $0x28] sm:$0xff] %vm824, %v739
      %831 = vst.msk [vmem:[#allocation2 + $0x30] sm:$0xff] %vm824, %v741
      %832 = vst.msk [vmem:[#allocation2 + $0x38] sm:$0xff] %vm824, %v743
      %833 = vst.msk [vmem:[#allocation2 + $0x40] sm:$0xff] %vm824, %v745
      %834 = vst.msk [vmem:[#allocation2 + $0x48] sm:$0xff] %vm824, %v747
      %835 = vst.msk [vmem:[#allocation2 + $0x50] sm:$0xff] %vm824, %v749
      %836 = vst.msk [vmem:[#allocation2 + $0x58] sm:$0xff] %vm824, %v751
      %837 = vst.msk [vmem:[#allocation2 + $0x60] sm:$0xff] %vm824, %v753
      %838 = vst.msk [vmem:[#allocation2 + $0x68] sm:$0xff] %vm824, %v755
      %839 = vst.msk [vmem:[#allocation2 + $0x70] sm:$0xff] %vm824, %v757
      %840 = vst.msk [vmem:[#allocation2 + $0x78] sm:$0xff] %vm824, %v759
      %841 = vst.msk [vmem:[#allocation2 + $0x80] sm:$0xff] %vm824, %v761
      %842 = vst.msk [vmem:[#allocation2 + $0x88] sm:$0xff] %vm824, %v763
      %843 = vst.msk [vmem:[#allocation2 + $0x90] sm:$0xff] %vm824, %v765
      %844 = vst.msk [vmem:[#allocation2 + $0x98] sm:$0xff] %vm824, %v767
      %845 = vst.msk [vmem:[#allocation2 + $0xa0] sm:$0xff] %vm824, %v769
      %846 = vst.msk [vmem:[#allocation2 + $0xa8] sm:$0xff] %vm824, %v771
      %847 = vst.msk [vmem:[#allocation2 + $0xb0] sm:$0xff] %vm824, %v773
      %848 = vst.msk [vmem:[#allocation2 + $0xb8] sm:$0xff] %vm824, %v775
      %849 = vst.msk [vmem:[#allocation2 + $0xc0] sm:$0xff] %vm824, %v777
      %850 = vst.msk [vmem:[#allocation2 + $0xc8] sm:$0xff] %vm824, %v779
      %851 = vst.msk [vmem:[#allocation2 + $0xd0] sm:$0xff] %vm824, %v781
      %852 = vst.msk [vmem:[#allocation2 + $0xd8] sm:$0xff] %vm824, %v783
      %853 = vst.msk [vmem:[#allocation2 + $0xe0] sm:$0xff] %vm824, %v785
      %854 = vst.msk [vmem:[#allocation2 + $0xe8] sm:$0xff] %vm824, %v787
      %855 = vst.msk [vmem:[#allocation2 + $0xf0] sm:$0xff] %vm824, %v789
      %856 = vst.msk [vmem:[#allocation2 + $0xf8] sm:$0xff] %vm824, %v791
      %v858 = vrot.slane %v219, 1
      %v859 = vrot.slane %v220, 1
      %v860 = vsel %vm306, %v858, %v859
      %v861 = vrot.slane %v221, 1
      %v862 = vsel %vm306, %v859, %v861
      %863 = vrot.lane.b32.xlu0 %v314, 16
      %v864 = vpop.permute.xlu0 %863
      %865 = vrot.lane.b32.xlu0 %v316, 16
      %v866 = vpop.permute.xlu0 %865
      %867 = vrot.lane.b32.xlu0 %v319, 16
      %v868 = vpop.permute.xlu0 %867
      %869 = vrot.lane.b32.xlu0 %v321, 16
      %v870 = vpop.permute.xlu0 %869
      %871 = vrot.lane.b32.xlu0 %v324, 16
      %v872 = vpop.permute.xlu0 %871
      %873 = vrot.lane.b32.xlu0 %v326, 16
      %v874 = vpop.permute.xlu0 %873
      %875 = vrot.lane.b32.xlu0 %v329, 16
      %v876 = vpop.permute.xlu0 %875
      %877 = vrot.lane.b32.xlu0 %v331, 16
      %v878 = vpop.permute.xlu0 %877
      %879 = vrot.lane.b32.xlu0 %v334, 16
      %v880 = vpop.permute.xlu0 %879
      %881 = vrot.lane.b32.xlu0 %v336, 16
      %v882 = vpop.permute.xlu0 %881
      %883 = vrot.lane.b32.xlu0 %v339, 16
      %v884 = vpop.permute.xlu0 %883
      %885 = vrot.lane.b32.xlu0 %v341, 16
      %v886 = vpop.permute.xlu0 %885
      %887 = vrot.lane.b32.xlu0 %v344, 16
      %v888 = vpop.permute.xlu0 %887
      %889 = vrot.lane.b32.xlu0 %v346, 16
      %v890 = vpop.permute.xlu0 %889
      %891 = vrot.lane.b32.xlu0 %v349, 16
      %v892 = vpop.permute.xlu0 %891
      %893 = vrot.lane.b32.xlu0 %v351, 16
      %v894 = vpop.permute.xlu0 %893
      %895 = vrot.lane.b32.xlu0 %v354, 16
      %v896 = vpop.permute.xlu0 %895
      %897 = vrot.lane.b32.xlu0 %v356, 16
      %v898 = vpop.permute.xlu0 %897
      %899 = vrot.lane.b32.xlu0 %v359, 16
      %v900 = vpop.permute.xlu0 %899
      %901 = vrot.lane.b32.xlu0 %v361, 16
      %v902 = vpop.permute.xlu0 %901
      %903 = vrot.lane.b32.xlu0 %v364, 16
      %v904 = vpop.permute.xlu0 %903
      %905 = vrot.lane.b32.xlu0 %v366, 16
      %v906 = vpop.permute.xlu0 %905
      %907 = vrot.lane.b32.xlu0 %v369, 16
      %v908 = vpop.permute.xlu0 %907
      %909 = vrot.lane.b32.xlu0 %v371, 16
      %v910 = vpop.permute.xlu0 %909
      %911 = vrot.lane.b32.xlu0 %v374, 16
      %v912 = vpop.permute.xlu0 %911
      %913 = vrot.lane.b32.xlu0 %v376, 16
      %v914 = vpop.permute.xlu0 %913
      %915 = vrot.lane.b32.xlu0 %v379, 16
      %v916 = vpop.permute.xlu0 %915
      %917 = vrot.lane.b32.xlu0 %v381, 16
      %v918 = vpop.permute.xlu0 %917
      %919 = vrot.lane.b32.xlu0 %v384, 16
      %v920 = vpop.permute.xlu0 %919
      %921 = vrot.lane.b32.xlu0 %v386, 16
      %v922 = vpop.permute.xlu0 %921
      %923 = vrot.lane.b32.xlu0 %v860, 16
      %v924 = vpop.permute.xlu0 %923
      %925 = vrot.lane.b32.xlu0 %v862, 16
      %v926 = vpop.permute.xlu0 %925
      %vm959 = vcmask 162944
      %960 = vst.msk [vmem:[#allocation2] sm:$0xff] %vm959, %v864
      %961 = vst.msk [vmem:[#allocation2 + $0x8] sm:$0xff] %vm959, %v866
      %962 = vst.msk [vmem:[#allocation2 + $0x10] sm:$0xff] %vm959, %v868
      %963 = vst.msk [vmem:[#allocation2 + $0x18] sm:$0xff] %vm959, %v870
      %964 = vst.msk [vmem:[#allocation2 + $0x20] sm:$0xff] %vm959, %v872
      %965 = vst.msk [vmem:[#allocation2 + $0x28] sm:$0xff] %vm959, %v874
      %966 = vst.msk [vmem:[#allocation2 + $0x30] sm:$0xff] %vm959, %v876
      %967 = vst.msk [vmem:[#allocation2 + $0x38] sm:$0xff] %vm959, %v878
      %968 = vst.msk [vmem:[#allocation2 + $0x40] sm:$0xff] %vm959, %v880
      %969 = vst.msk [vmem:[#allocation2 + $0x48] sm:$0xff] %vm959, %v882
      %970 = vst.msk [vmem:[#allocation2 + $0x50] sm:$0xff] %vm959, %v884
      %971 = vst.msk [vmem:[#allocation2 + $0x58] sm:$0xff] %vm959, %v886
      %972 = vst.msk [vmem:[#allocation2 + $0x60] sm:$0xff] %vm959, %v888
      %973 = vst.msk [vmem:[#allocation2 + $0x68] sm:$0xff] %vm959, %v890
      %974 = vst.msk [vmem:[#allocation2 + $0x70] sm:$0xff] %vm959, %v892
      %975 = vst.msk [vmem:[#allocation2 + $0x78] sm:$0xff] %vm959, %v894
      %976 = vst.msk [vmem:[#allocation2 + $0x80] sm:$0xff] %vm959, %v896
      %977 = vst.msk [vmem:[#allocation2 + $0x88] sm:$0xff] %vm959, %v898
      %978 = vst.msk [vmem:[#allocation2 + $0x90] sm:$0xff] %vm959, %v900
      %979 = vst.msk [vmem:[#allocation2 + $0x98] sm:$0xff] %vm959, %v902
      %980 = vst.msk [vmem:[#allocation2 + $0xa0] sm:$0xff] %vm959, %v904
      %981 = vst.msk [vmem:[#allocation2 + $0xa8] sm:$0xff] %vm959, %v906
      %982 = vst.msk [vmem:[#allocation2 + $0xb0] sm:$0xff] %vm959, %v908
      %983 = vst.msk [vmem:[#allocation2 + $0xb8] sm:$0xff] %vm959, %v910
      %984 = vst.msk [vmem:[#allocation2 + $0xc0] sm:$0xff] %vm959, %v912
      %985 = vst.msk [vmem:[#allocation2 + $0xc8] sm:$0xff] %vm959, %v914
      %986 = vst.msk [vmem:[#allocation2 + $0xd0] sm:$0xff] %vm959, %v916
      %987 = vst.msk [vmem:[#allocation2 + $0xd8] sm:$0xff] %vm959, %v918
      %988 = vst.msk [vmem:[#allocation2 + $0xe0] sm:$0xff] %vm959, %v920
      %989 = vst.msk [vmem:[#allocation2 + $0xe8] sm:$0xff] %vm959, %v922
      %990 = vst.msk [vmem:[#allocation2 + $0xf0] sm:$0xff] %vm959, %v924
      %991 = vst.msk [vmem:[#allocation2 + $0xf8] sm:$0xff] %vm959, %v926
      %v992 = vrot.slane %v219, 2
      %v993 = vrot.slane %v220, 2
      %v994 = vsel %vm516, %v992, %v993
      %v995 = vrot.slane %v221, 2
      %v996 = vsel %vm516, %v993, %v995
      %997 = vrot.lane.b32.xlu0 %v524, 20
      %v998 = vpop.permute.xlu0 %997
      %999 = vrot.lane.b32.xlu0 %v526, 20
      %v1000 = vpop.permute.xlu0 %999
      %1001 = vrot.lane.b32.xlu0 %v529, 20
      %v1002 = vpop.permute.xlu0 %1001
      %1003 = vrot.lane.b32.xlu0 %v531, 20
      %v1004 = vpop.permute.xlu0 %1003
      %1005 = vrot.lane.b32.xlu0 %v534, 20
      %v1006 = vpop.permute.xlu0 %1005
      %1007 = vrot.lane.b32.xlu0 %v536, 20
      %v1008 = vpop.permute.xlu0 %1007
      %1009 = vrot.lane.b32.xlu0 %v539, 20
      %v1010 = vpop.permute.xlu0 %1009
      %1011 = vrot.lane.b32.xlu0 %v541, 20
      %v1012 = vpop.permute.xlu0 %1011
      %1013 = vrot.lane.b32.xlu0 %v544, 20
      %v1014 = vpop.permute.xlu0 %1013
      %1015 = vrot.lane.b32.xlu0 %v546, 20
      %v1016 = vpop.permute.xlu0 %1015
      %1017 = vrot.lane.b32.xlu0 %v549, 20
      %v1018 = vpop.permute.xlu0 %1017
      %1019 = vrot.lane.b32.xlu0 %v551, 20
      %v1020 = vpop.permute.xlu0 %1019
      %1021 = vrot.lane.b32.xlu0 %v554, 20
      %v1022 = vpop.permute.xlu0 %1021
      %1023 = vrot.lane.b32.xlu0 %v556, 20
      %v1024 = vpop.permute.xlu0 %1023
      %1025 = vrot.lane.b32.xlu0 %v559, 20
      %v1026 = vpop.permute.xlu0 %1025
      %1027 = vrot.lane.b32.xlu0 %v561, 20
      %v1028 = vpop.permute.xlu0 %1027
      %1029 = vrot.lane.b32.xlu0 %v564, 20
      %v1030 = vpop.permute.xlu0 %1029
      %1031 = vrot.lane.b32.xlu0 %v566, 20
      %v1032 = vpop.permute.xlu0 %1031
      %1033 = vrot.lane.b32.xlu0 %v569, 20
      %v1034 = vpop.permute.xlu0 %1033
      %1035 = vrot.lane.b32.xlu0 %v571, 20
      %v1036 = vpop.permute.xlu0 %1035
      %1037 = vrot.lane.b32.xlu0 %v574, 20
      %v1038 = vpop.permute.xlu0 %1037
      %1039 = vrot.lane.b32.xlu0 %v576, 20
      %v1040 = vpop.permute.xlu0 %1039
      %1041 = vrot.lane.b32.xlu0 %v579, 20
      %v1042 = vpop.permute.xlu0 %1041
      %1043 = vrot.lane.b32.xlu0 %v581, 20
      %v1044 = vpop.permute.xlu0 %1043
      %1045 = vrot.lane.b32.xlu0 %v584, 20
      %v1046 = vpop.permute.xlu0 %1045
      %1047 = vrot.lane.b32.xlu0 %v586, 20
      %v1048 = vpop.permute.xlu0 %1047
      %1049 = vrot.lane.b32.xlu0 %v589, 20
      %v1050 = vpop.permute.xlu0 %1049
      %1051 = vrot.lane.b32.xlu0 %v591, 20
      %v1052 = vpop.permute.xlu0 %1051
      %1053 = vrot.lane.b32.xlu0 %v594, 20
      %v1054 = vpop.permute.xlu0 %1053
      %1055 = vrot.lane.b32.xlu0 %v596, 20
      %v1056 = vpop.permute.xlu0 %1055
      %1057 = vrot.lane.b32.xlu0 %v994, 20
      %v1058 = vpop.permute.xlu0 %1057
      %1059 = vrot.lane.b32.xlu0 %v996, 20
      %v1060 = vpop.permute.xlu0 %1059
      %vm1093 = vcmask 195744
      %1094 = vst.msk [vmem:[#allocation2] sm:$0xff] %vm1093, %v998
      %1095 = vst.msk [vmem:[#allocation2 + $0x8] sm:$0xff] %vm1093, %v1000
      %1096 = vst.msk [vmem:[#allocation2 + $0x10] sm:$0xff] %vm1093, %v1002
      %1097 = vst.msk [vmem:[#allocation2 + $0x18] sm:$0xff] %vm1093, %v1004
      %1098 = vst.msk [vmem:[#allocation2 + $0x20] sm:$0xff] %vm1093, %v1006
      %1099 = vst.msk [vmem:[#allocation2 + $0x28] sm:$0xff] %vm1093, %v1008
      %1100 = vst.msk [vmem:[#allocation2 + $0x30] sm:$0xff] %vm1093, %v1010
      %1101 = vst.msk [vmem:[#allocation2 + $0x38] sm:$0xff] %vm1093, %v1012
      %1102 = vst.msk [vmem:[#allocation2 + $0x40] sm:$0xff] %vm1093, %v1014
      %1103 = vst.msk [vmem:[#allocation2 + $0x48] sm:$0xff] %vm1093, %v1016
      %1104 = vst.msk [vmem:[#allocation2 + $0x50] sm:$0xff] %vm1093, %v1018
      %1105 = vst.msk [vmem:[#allocation2 + $0x58] sm:$0xff] %vm1093, %v1020
      %1106 = vst.msk [vmem:[#allocation2 + $0x60] sm:$0xff] %vm1093, %v1022
      %1107 = vst.msk [vmem:[#allocation2 + $0x68] sm:$0xff] %vm1093, %v1024
      %1108 = vst.msk [vmem:[#allocation2 + $0x70] sm:$0xff] %vm1093, %v1026
      %1109 = vst.msk [vmem:[#allocation2 + $0x78] sm:$0xff] %vm1093, %v1028
      %1110 = vst.msk [vmem:[#allocation2 + $0x80] sm:$0xff] %vm1093, %v1030
      %1111 = vst.msk [vmem:[#allocation2 + $0x88] sm:$0xff] %vm1093, %v1032
      %1112 = vst.msk [vmem:[#allocation2 + $0x90] sm:$0xff] %vm1093, %v1034
      %1113 = vst.msk [vmem:[#allocation2 + $0x98] sm:$0xff] %vm1093, %v1036
      %1114 = vst.msk [vmem:[#allocation2 + $0xa0] sm:$0xff] %vm1093, %v1038
      %1115 = vst.msk [vmem:[#allocation2 + $0xa8] sm:$0xff] %vm1093, %v1040
      %1116 = vst.msk [vmem:[#allocation2 + $0xb0] sm:$0xff] %vm1093, %v1042
      %1117 = vst.msk [vmem:[#allocation2 + $0xb8] sm:$0xff] %vm1093, %v1044
      %1118 = vst.msk [vmem:[#allocation2 + $0xc0] sm:$0xff] %vm1093, %v1046
      %1119 = vst.msk [vmem:[#allocation2 + $0xc8] sm:$0xff] %vm1093, %v1048
      %1120 = vst.msk [vmem:[#allocation2 + $0xd0] sm:$0xff] %vm1093, %v1050
      %1121 = vst.msk [vmem:[#allocation2 + $0xd8] sm:$0xff] %vm1093, %v1052
      %1122 = vst.msk [vmem:[#allocation2 + $0xe0] sm:$0xff] %vm1093, %v1054
      %1123 = vst.msk [vmem:[#allocation2 + $0xe8] sm:$0xff] %vm1093, %v1056
      %1124 = vst.msk [vmem:[#allocation2 + $0xf0] sm:$0xff] %vm1093, %v1058
      %1125 = vst.msk [vmem:[#allocation2 + $0xf8] sm:$0xff] %vm1093, %v1060
      %1128 = vrot.lane.b32.xlu0 %v177, 24
      %v1129 = vpop.permute.xlu0 %1128
      %1130 = vrot.lane.b32.xlu0 %v178, 24
      %v1131 = vpop.permute.xlu0 %1130
      %1132 = vrot.lane.b32.xlu0 %v180, 24
      %v1133 = vpop.permute.xlu0 %1132
      %1134 = vrot.lane.b32.xlu0 %v181, 24
      %v1135 = vpop.permute.xlu0 %1134
      %1136 = vrot.lane.b32.xlu0 %v183, 24
      %v1137 = vpop.permute.xlu0 %1136
      %1138 = vrot.lane.b32.xlu0 %v184, 24
      %v1139 = vpop.permute.xlu0 %1138
      %1140 = vrot.lane.b32.xlu0 %v186, 24
      %v1141 = vpop.permute.xlu0 %1140
      %1142 = vrot.lane.b32.xlu0 %v187, 24
      %v1143 = vpop.permute.xlu0 %1142
      %1144 = vrot.lane.b32.xlu0 %v189, 24
      %v1145 = vpop.permute.xlu0 %1144
      %1146 = vrot.lane.b32.xlu0 %v190, 24
      %v1147 = vpop.permute.xlu0 %1146
      %1148 = vrot.lane.b32.xlu0 %v192, 24
      %v1149 = vpop.permute.xlu0 %1148
      %1150 = vrot.lane.b32.xlu0 %v193, 24
      %v1151 = vpop.permute.xlu0 %1150
      %1152 = vrot.lane.b32.xlu0 %v195, 24
      %v1153 = vpop.permute.xlu0 %1152
      %1154 = vrot.lane.b32.xlu0 %v196, 24
      %v1155 = vpop.permute.xlu0 %1154
      %1156 = vrot.lane.b32.xlu0 %v198, 24
      %v1157 = vpop.permute.xlu0 %1156
      %1158 = vrot.lane.b32.xlu0 %v199, 24
      %v1159 = vpop.permute.xlu0 %1158
      %1160 = vrot.lane.b32.xlu0 %v201, 24
      %v1161 = vpop.permute.xlu0 %1160
      %1162 = vrot.lane.b32.xlu0 %v202, 24
      %v1163 = vpop.permute.xlu0 %1162
      %1164 = vrot.lane.b32.xlu0 %v204, 24
      %v1165 = vpop.permute.xlu0 %1164
      %1166 = vrot.lane.b32.xlu0 %v205, 24
      %v1167 = vpop.permute.xlu0 %1166
      %1168 = vrot.lane.b32.xlu0 %v207, 24
      %v1169 = vpop.permute.xlu0 %1168
      %1170 = vrot.lane.b32.xlu0 %v208, 24
      %v1171 = vpop.permute.xlu0 %1170
      %1172 = vrot.lane.b32.xlu0 %v210, 24
      %v1173 = vpop.permute.xlu0 %1172
      %1174 = vrot.lane.b32.xlu0 %v211, 24
      %v1175 = vpop.permute.xlu0 %1174
      %1176 = vrot.lane.b32.xlu0 %v213, 24
      %v1177 = vpop.permute.xlu0 %1176
      %1178 = vrot.lane.b32.xlu0 %v214, 24
      %v1179 = vpop.permute.xlu0 %1178
      %1180 = vrot.lane.b32.xlu0 %v216, 24
      %v1181 = vpop.permute.xlu0 %1180
      %1182 = vrot.lane.b32.xlu0 %v217, 24
      %v1183 = vpop.permute.xlu0 %1182
      %1184 = vrot.lane.b32.xlu0 %v219, 24
      %v1185 = vpop.permute.xlu0 %1184
      %1186 = vrot.lane.b32.xlu0 %v220, 24
      %v1187 = vpop.permute.xlu0 %1186
      %1188 = vrot.lane.b32.xlu0 %v222, 24
      %v1189 = vpop.permute.xlu0 %1188
      %1190 = vrot.lane.b32.xlu0 %v223, 24
      %v1191 = vpop.permute.xlu0 %1190
      %vm1224 = vcmask 228544
      %1225 = vst.msk [vmem:[#allocation2] sm:$0xff] %vm1224, %v1129
      %1226 = vst.msk [vmem:[#allocation2 + $0x8] sm:$0xff] %vm1224, %v1131
      %1227 = vst.msk [vmem:[#allocation2 + $0x10] sm:$0xff] %vm1224, %v1133
      %1228 = vst.msk [vmem:[#allocation2 + $0x18] sm:$0xff] %vm1224, %v1135
      %1229 = vst.msk [vmem:[#allocation2 + $0x20] sm:$0xff] %vm1224, %v1137
      %1230 = vst.msk [vmem:[#allocation2 + $0x28] sm:$0xff] %vm1224, %v1139
      %1231 = vst.msk [vmem:[#allocation2 + $0x30] sm:$0xff] %vm1224, %v1141
      %1232 = vst.msk [vmem:[#allocation2 + $0x38] sm:$0xff] %vm1224, %v1143
      %1233 = vst.msk [vmem:[#allocation2 + $0x40] sm:$0xff] %vm1224, %v1145
      %1234 = vst.msk [vmem:[#allocation2 + $0x48] sm:$0xff] %vm1224, %v1147
      %1235 = vst.msk [vmem:[#allocation2 + $0x50] sm:$0xff] %vm1224, %v1149
      %1236 = vst.msk [vmem:[#allocation2 + $0x58] sm:$0xff] %vm1224, %v1151
      %1237 = vst.msk [vmem:[#allocation2 + $0x60] sm:$0xff] %vm1224, %v1153
      %1238 = vst.msk [vmem:[#allocation2 + $0x68] sm:$0xff] %vm1224, %v1155
      %1239 = vst.msk [vmem:[#allocation2 + $0x70] sm:$0xff] %vm1224, %v1157
      %1240 = vst.msk [vmem:[#allocation2 + $0x78] sm:$0xff] %vm1224, %v1159
      %1241 = vst.msk [vmem:[#allocation2 + $0x80] sm:$0xff] %vm1224, %v1161
      %1242 = vst.msk [vmem:[#allocation2 + $0x88] sm:$0xff] %vm1224, %v1163
      %1243 = vst.msk [vmem:[#allocation2 + $0x90] sm:$0xff] %vm1224, %v1165
      %1244 = vst.msk [vmem:[#allocation2 + $0x98] sm:$0xff] %vm1224, %v1167
      %1245 = vst.msk [vmem:[#allocation2 + $0xa0] sm:$0xff] %vm1224, %v1169
      %1246 = vst.msk [vmem:[#allocation2 + $0xa8] sm:$0xff] %vm1224, %v1171
      %1247 = vst.msk [vmem:[#allocation2 + $0xb0] sm:$0xff] %vm1224, %v1173
      %1248 = vst.msk [vmem:[#allocation2 + $0xb8] sm:$0xff] %vm1224, %v1175
      %1249 = vst.msk [vmem:[#allocation2 + $0xc0] sm:$0xff] %vm1224, %v1177
      %1250 = vst.msk [vmem:[#allocation2 + $0xc8] sm:$0xff] %vm1224, %v1179
      %1251 = vst.msk [vmem:[#allocation2 + $0xd0] sm:$0xff] %vm1224, %v1181
      %1252 = vst.msk [vmem:[#allocation2 + $0xd8] sm:$0xff] %vm1224, %v1183
      %1253 = vst.msk [vmem:[#allocation2 + $0xe0] sm:$0xff] %vm1224, %v1185
      %1254 = vst.msk [vmem:[#allocation2 + $0xe8] sm:$0xff] %vm1224, %v1187
      %1255 = vst.msk [vmem:[#allocation2 + $0xf0] sm:$0xff] %vm1224, %v1189
      %1256 = vst.msk [vmem:[#allocation2 + $0xf8] sm:$0xff] %vm1224, %v1191
      %v1258 = vrot.slane %v222, 1
      %v1259 = vrot.slane %v223, 1
      %v1260 = vsel %vm306, %v1258, %v1259
      %v1261 = vrot.slane %v224, 1
      %v1262 = vsel %vm306, %v1259, %v1261
      %1263 = vrot.lane.b32.xlu0 %v319, 28
      %v1264 = vpop.permute.xlu0 %1263
      %1265 = vrot.lane.b32.xlu0 %v321, 28
      %v1266 = vpop.permute.xlu0 %1265
      %1267 = vrot.lane.b32.xlu0 %v324, 28
      %v1268 = vpop.permute.xlu0 %1267
      %1269 = vrot.lane.b32.xlu0 %v326, 28
      %v1270 = vpop.permute.xlu0 %1269
      %1271 = vrot.lane.b32.xlu0 %v329, 28
      %v1272 = vpop.permute.xlu0 %1271
      %1273 = vrot.lane.b32.xlu0 %v331, 28
      %v1274 = vpop.permute.xlu0 %1273
      %1275 = vrot.lane.b32.xlu0 %v334, 28
      %v1276 = vpop.permute.xlu0 %1275
      %1277 = vrot.lane.b32.xlu0 %v336, 28
      %v1278 = vpop.permute.xlu0 %1277
      %1279 = vrot.lane.b32.xlu0 %v339, 28
      %v1280 = vpop.permute.xlu0 %1279
      %1281 = vrot.lane.b32.xlu0 %v341, 28
      %v1282 = vpop.permute.xlu0 %1281
      %1283 = vrot.lane.b32.xlu0 %v344, 28
      %v1284 = vpop.permute.xlu0 %1283
      %1285 = vrot.lane.b32.xlu0 %v346, 28
      %v1286 = vpop.permute.xlu0 %1285
      %1287 = vrot.lane.b32.xlu0 %v349, 28
      %v1288 = vpop.permute.xlu0 %1287
      %1289 = vrot.lane.b32.xlu0 %v351, 28
      %v1290 = vpop.permute.xlu0 %1289
      %1291 = vrot.lane.b32.xlu0 %v354, 28
      %v1292 = vpop.permute.xlu0 %1291
      %1293 = vrot.lane.b32.xlu0 %v356, 28
      %v1294 = vpop.permute.xlu0 %1293
      %1295 = vrot.lane.b32.xlu0 %v359, 28
      %v1296 = vpop.permute.xlu0 %1295
      %1297 = vrot.lane.b32.xlu0 %v361, 28
      %v1298 = vpop.permute.xlu0 %1297
      %1299 = vrot.lane.b32.xlu0 %v364, 28
      %v1300 = vpop.permute.xlu0 %1299
      %1301 = vrot.lane.b32.xlu0 %v366, 28
      %v1302 = vpop.permute.xlu0 %1301
      %1303 = vrot.lane.b32.xlu0 %v369, 28
      %v1304 = vpop.permute.xlu0 %1303
      %1305 = vrot.lane.b32.xlu0 %v371, 28
      %v1306 = vpop.permute.xlu0 %1305
      %1307 = vrot.lane.b32.xlu0 %v374, 28
      %v1308 = vpop.permute.xlu0 %1307
      %1309 = vrot.lane.b32.xlu0 %v376, 28
      %v1310 = vpop.permute.xlu0 %1309
      %1311 = vrot.lane.b32.xlu0 %v379, 28
      %v1312 = vpop.permute.xlu0 %1311
      %1313 = vrot.lane.b32.xlu0 %v381, 28
      %v1314 = vpop.permute.xlu0 %1313
      %1315 = vrot.lane.b32.xlu0 %v384, 28
      %v1316 = vpop.permute.xlu0 %1315
      %1317 = vrot.lane.b32.xlu0 %v386, 28
      %v1318 = vpop.permute.xlu0 %1317
      %1319 = vrot.lane.b32.xlu0 %v860, 28
      %v1320 = vpop.permute.xlu0 %1319
      %1321 = vrot.lane.b32.xlu0 %v862, 28
      %v1322 = vpop.permute.xlu0 %1321
      %1323 = vrot.lane.b32.xlu0 %v1260, 28
      %v1324 = vpop.permute.xlu0 %1323
      %1325 = vrot.lane.b32.xlu0 %v1262, 28
      %v1326 = vpop.permute.xlu0 %1325
      %vm1359 = vcmask 261344
      %1360 = vst.msk [vmem:[#allocation2] sm:$0xff] %vm1359, %v1264
      %1361 = vst.msk [vmem:[#allocation2 + $0x8] sm:$0xff] %vm1359, %v1266
      %1362 = vst.msk [vmem:[#allocation2 + $0x10] sm:$0xff] %vm1359, %v1268
      %1363 = vst.msk [vmem:[#allocation2 + $0x18] sm:$0xff] %vm1359, %v1270
      %1364 = vst.msk [vmem:[#allocation2 + $0x20] sm:$0xff] %vm1359, %v1272
      %1365 = vst.msk [vmem:[#allocation2 + $0x28] sm:$0xff] %vm1359, %v1274
      %1366 = vst.msk [vmem:[#allocation2 + $0x30] sm:$0xff] %vm1359, %v1276
      %1367 = vst.msk [vmem:[#allocation2 + $0x38] sm:$0xff] %vm1359, %v1278
      %1368 = vst.msk [vmem:[#allocation2 + $0x40] sm:$0xff] %vm1359, %v1280
      %1369 = vst.msk [vmem:[#allocation2 + $0x48] sm:$0xff] %vm1359, %v1282
      %1370 = vst.msk [vmem:[#allocation2 + $0x50] sm:$0xff] %vm1359, %v1284
      %1371 = vst.msk [vmem:[#allocation2 + $0x58] sm:$0xff] %vm1359, %v1286
      %1372 = vst.msk [vmem:[#allocation2 + $0x60] sm:$0xff] %vm1359, %v1288
      %1373 = vst.msk [vmem:[#allocation2 + $0x68] sm:$0xff] %vm1359, %v1290
      %1374 = vst.msk [vmem:[#allocation2 + $0x70] sm:$0xff] %vm1359, %v1292
      %1375 = vst.msk [vmem:[#allocation2 + $0x78] sm:$0xff] %vm1359, %v1294
      %1376 = vst.msk [vmem:[#allocation2 + $0x80] sm:$0xff] %vm1359, %v1296
      %1377 = vst.msk [vmem:[#allocation2 + $0x88] sm:$0xff] %vm1359, %v1298
      %1378 = vst.msk [vmem:[#allocation2 + $0x90] sm:$0xff] %vm1359, %v1300
      %1379 = vst.msk [vmem:[#allocation2 + $0x98] sm:$0xff] %vm1359, %v1302
      %1380 = vst.msk [vmem:[#allocation2 + $0xa0] sm:$0xff] %vm1359, %v1304
      %1381 = vst.msk [vmem:[#allocation2 + $0xa8] sm:$0xff] %vm1359, %v1306
      %1382 = vst.msk [vmem:[#allocation2 + $0xb0] sm:$0xff] %vm1359, %v1308
      %1383 = vst.msk [vmem:[#allocation2 + $0xb8] sm:$0xff] %vm1359, %v1310
      %1384 = vst.msk [vmem:[#allocation2 + $0xc0] sm:$0xff] %vm1359, %v1312
      %1385 = vst.msk [vmem:[#allocation2 + $0xc8] sm:$0xff] %vm1359, %v1314
      %1386 = vst.msk [vmem:[#allocation2 + $0xd0] sm:$0xff] %vm1359, %v1316
      %1387 = vst.msk [vmem:[#allocation2 + $0xd8] sm:$0xff] %vm1359, %v1318
      %1388 = vst.msk [vmem:[#allocation2 + $0xe0] sm:$0xff] %vm1359, %v1320
      %1389 = vst.msk [vmem:[#allocation2 + $0xe8] sm:$0xff] %vm1359, %v1322
      %1390 = vst.msk [vmem:[#allocation2 + $0xf0] sm:$0xff] %vm1359, %v1324
      %1391 = vst.msk [vmem:[#allocation2 + $0xf8] sm:$0xff] %vm1359, %v1326
      %v1392 = vrot.slane %v222, 2
      %v1393 = vrot.slane %v223, 2
      %v1394 = vsel %vm516, %v1392, %v1393
      %v1395 = vrot.slane %v224, 2
      %v1396 = vsel %vm516, %v1393, %v1395
      %1397 = vrot.lane.b32.xlu0 %v529, 32
      %v1398 = vpop.permute.xlu0 %1397
      %1399 = vrot.lane.b32.xlu0 %v531, 32
      %v1400 = vpop.permute.xlu0 %1399
      %1401 = vrot.lane.b32.xlu0 %v534, 32
      %v1402 = vpop.permute.xlu0 %1401
      %1403 = vrot.lane.b32.xlu0 %v536, 32
      %v1404 = vpop.permute.xlu0 %1403
      %1405 = vrot.lane.b32.xlu0 %v539, 32
      %v1406 = vpop.permute.xlu0 %1405
      %1407 = vrot.lane.b32.xlu0 %v541, 32
      %v1408 = vpop.permute.xlu0 %1407
      %1409 = vrot.lane.b32.xlu0 %v544, 32
      %v1410 = vpop.permute.xlu0 %1409
      %1411 = vrot.lane.b32.xlu0 %v546, 32
      %v1412 = vpop.permute.xlu0 %1411
      %1413 = vrot.lane.b32.xlu0 %v549, 32
      %v1414 = vpop.permute.xlu0 %1413
      %1415 = vrot.lane.b32.xlu0 %v551, 32
      %v1416 = vpop.permute.xlu0 %1415
      %1417 = vrot.lane.b32.xlu0 %v554, 32
      %v1418 = vpop.permute.xlu0 %1417
      %1419 = vrot.lane.b32.xlu0 %v556, 32
      %v1420 = vpop.permute.xlu0 %1419
      %1421 = vrot.lane.b32.xlu0 %v559, 32
      %v1422 = vpop.permute.xlu0 %1421
      %1423 = vrot.lane.b32.xlu0 %v561, 32
      %v1424 = vpop.permute.xlu0 %1423
      %1425 = vrot.lane.b32.xlu0 %v564, 32
      %v1426 = vpop.permute.xlu0 %1425
      %1427 = vrot.lane.b32.xlu0 %v566, 32
      %v1428 = vpop.permute.xlu0 %1427
      %1429 = vrot.lane.b32.xlu0 %v569, 32
      %v1430 = vpop.permute.xlu0 %1429
      %1431 = vrot.lane.b32.xlu0 %v571, 32
      %v1432 = vpop.permute.xlu0 %1431
      %1433 = vrot.lane.b32.xlu0 %v574, 32
      %v1434 = vpop.permute.xlu0 %1433
      %1435 = vrot.lane.b32.xlu0 %v576, 32
      %v1436 = vpop.permute.xlu0 %1435
      %1437 = vrot.lane.b32.xlu0 %v579, 32
      %v1438 = vpop.permute.xlu0 %1437
      %1439 = vrot.lane.b32.xlu0 %v581, 32
      %v1440 = vpop.permute.xlu0 %1439
      %1441 = vrot.lane.b32.xlu0 %v584, 32
      %v1442 = vpop.permute.xlu0 %1441
      %1443 = vrot.lane.b32.xlu0 %v586, 32
      %v1444 = vpop.permute.xlu0 %1443
      %1445 = vrot.lane.b32.xlu0 %v589, 32
      %v1446 = vpop.permute.xlu0 %1445
      %1447 = vrot.lane.b32.xlu0 %v591, 32
      %v1448 = vpop.permute.xlu0 %1447
      %1449 = vrot.lane.b32.xlu0 %v594, 32
      %v1450 = vpop.permute.xlu0 %1449
      %1451 = vrot.lane.b32.xlu0 %v596, 32
      %v1452 = vpop.permute.xlu0 %1451
      %1453 = vrot.lane.b32.xlu0 %v994, 32
      %v1454 = vpop.permute.xlu0 %1453
      %1455 = vrot.lane.b32.xlu0 %v996, 32
      %v1456 = vpop.permute.xlu0 %1455
      %1457 = vrot.lane.b32.xlu0 %v1394, 32
      %v1458 = vpop.permute.xlu0 %1457
      %1459 = vrot.lane.b32.xlu0 %v1396, 32
      %v1460 = vpop.permute.xlu0 %1459
      %vm1493 = vcmask 294144
      %1494 = vst.msk [vmem:[#allocation2] sm:$0xff] %vm1493, %v1398
      %1495 = vst.msk [vmem:[#allocation2 + $0x8] sm:$0xff] %vm1493, %v1400
      %1496 = vst.msk [vmem:[#allocation2 + $0x10] sm:$0xff] %vm1493, %v1402
      %1497 = vst.msk [vmem:[#allocation2 + $0x18] sm:$0xff] %vm1493, %v1404
      %1498 = vst.msk [vmem:[#allocation2 + $0x20] sm:$0xff] %vm1493, %v1406
      %1499 = vst.msk [vmem:[#allocation2 + $0x28] sm:$0xff] %vm1493, %v1408
      %1500 = vst.msk [vmem:[#allocation2 + $0x30] sm:$0xff] %vm1493, %v1410
      %1501 = vst.msk [vmem:[#allocation2 + $0x38] sm:$0xff] %vm1493, %v1412
      %1502 = vst.msk [vmem:[#allocation2 + $0x40] sm:$0xff] %vm1493, %v1414
      %1503 = vst.msk [vmem:[#allocation2 + $0x48] sm:$0xff] %vm1493, %v1416
      %1504 = vst.msk [vmem:[#allocation2 + $0x50] sm:$0xff] %vm1493, %v1418
      %1505 = vst.msk [vmem:[#allocation2 + $0x58] sm:$0xff] %vm1493, %v1420
      %1506 = vst.msk [vmem:[#allocation2 + $0x60] sm:$0xff] %vm1493, %v1422
      %1507 = vst.msk [vmem:[#allocation2 + $0x68] sm:$0xff] %vm1493, %v1424
      %1508 = vst.msk [vmem:[#allocation2 + $0x70] sm:$0xff] %vm1493, %v1426
      %1509 = vst.msk [vmem:[#allocation2 + $0x78] sm:$0xff] %vm1493, %v1428
      %1510 = vst.msk [vmem:[#allocation2 + $0x80] sm:$0xff] %vm1493, %v1430
      %1511 = vst.msk [vmem:[#allocation2 + $0x88] sm:$0xff] %vm1493, %v1432
      %1512 = vst.msk [vmem:[#allocation2 + $0x90] sm:$0xff] %vm1493, %v1434
      %1513 = vst.msk [vmem:[#allocation2 + $0x98] sm:$0xff] %vm1493, %v1436
      %1514 = vst.msk [vmem:[#allocation2 + $0xa0] sm:$0xff] %vm1493, %v1438
      %1515 = vst.msk [vmem:[#allocation2 + $0xa8] sm:$0xff] %vm1493, %v1440
      %1516 = vst.msk [vmem:[#allocation2 + $0xb0] sm:$0xff] %vm1493, %v1442
      %1517 = vst.msk [vmem:[#allocation2 + $0xb8] sm:$0xff] %vm1493, %v1444
      %1518 = vst.msk [vmem:[#allocation2 + $0xc0] sm:$0xff] %vm1493, %v1446
      %1519 = vst.msk [vmem:[#allocation2 + $0xc8] sm:$0xff] %vm1493, %v1448
      %1520 = vst.msk [vmem:[#allocation2 + $0xd0] sm:$0xff] %vm1493, %v1450
      %1521 = vst.msk [vmem:[#allocation2 + $0xd8] sm:$0xff] %vm1493, %v1452
      %1522 = vst.msk [vmem:[#allocation2 + $0xe0] sm:$0xff] %vm1493, %v1454
      %1523 = vst.msk [vmem:[#allocation2 + $0xe8] sm:$0xff] %vm1493, %v1456
      %1524 = vst.msk [vmem:[#allocation2 + $0xf0] sm:$0xff] %vm1493, %v1458
      %1525 = vst.msk [vmem:[#allocation2 + $0xf8] sm:$0xff] %vm1493, %v1460
      %v1526 = vld [vmem:[#allocation2] sm:$0xff]
      %v1527 = vld [vmem:[#allocation2 + $0x8] sm:$0xff]
      %v1528 = vld [vmem:[#allocation2 + $0x10] sm:$0xff]
      %v1529 = vld [vmem:[#allocation2 + $0x18] sm:$0xff]
      %v1530 = vld [vmem:[#allocation2 + $0x20] sm:$0xff]
      %v1531 = vld [vmem:[#allocation2 + $0x28] sm:$0xff]
      %v1532 = vld [vmem:[#allocation2 + $0x30] sm:$0xff]
      %v1533 = vld [vmem:[#allocation2 + $0x38] sm:$0xff]
      %v1534 = vld [vmem:[#allocation2 + $0x40] sm:$0xff]
      %v1535 = vld [vmem:[#allocation2 + $0x48] sm:$0xff]
      %v1536 = vld [vmem:[#allocation2 + $0x50] sm:$0xff]
      %v1537 = vld [vmem:[#allocation2 + $0x58] sm:$0xff]
      %v1538 = vld [vmem:[#allocation2 + $0x60] sm:$0xff]
      %v1539 = vld [vmem:[#allocation2 + $0x68] sm:$0xff]
      %v1540 = vld [vmem:[#allocation2 + $0x70] sm:$0xff]
      %v1541 = vld [vmem:[#allocation2 + $0x78] sm:$0xff]
      %v1542 = vld [vmem:[#allocation2 + $0x80] sm:$0xff]
      %v1543 = vld [vmem:[#allocation2 + $0x88] sm:$0xff]
      %v1544 = vld [vmem:[#allocation2 + $0x90] sm:$0xff]
      %v1545 = vld [vmem:[#allocation2 + $0x98] sm:$0xff]
      %v1546 = vld [vmem:[#allocation2 + $0xa0] sm:$0xff]
      %v1547 = vld [vmem:[#allocation2 + $0xa8] sm:$0xff]
      %v1548 = vld [vmem:[#allocation2 + $0xb0] sm:$0xff]
      %v1549 = vld [vmem:[#allocation2 + $0xb8] sm:$0xff]
      %v1550 = vld [vmem:[#allocation2 + $0xc0] sm:$0xff]
      %v1551 = vld [vmem:[#allocation2 + $0xc8] sm:$0xff]
      %v1552 = vld [vmem:[#allocation2 + $0xd0] sm:$0xff]
      %v1553 = vld [vmem:[#allocation2 + $0xd8] sm:$0xff]
      %v1554 = vld [vmem:[#allocation2 + $0xe0] sm:$0xff]
      %v1555 = vld [vmem:[#allocation2 + $0xe8] sm:$0xff]
      %v1556 = vld [vmem:[#allocation2 + $0xf0] sm:$0xff]
      %v1557 = vld [vmem:[#allocation2 + $0xf8] sm:$0xff]
      %v1558 = vld [vmem:[%s1] sm:$0xff]
      %v1559 = vld [vmem:[%s1 + $0x8] sm:$0xff]
      %v1560 = vld [vmem:[%s1 + $0x10] sm:$0xff]
      %v1561 = vld [vmem:[%s1 + $0x18] sm:$0xff]
      %v1562 = vld [vmem:[%s1 + $0x20] sm:$0xf]
      %v1563 = vld [vmem:[%s2] sm:$0x1]
      %v1565 = vlaneseq
      %v1566 = vshrl.u32 %v1565, 7
      %v1567 = vsub.s32 0, %v1566
      %v1568 = vrot.slane %v1563, %v1567
      %vm1570 = vcmask 293888
      %v1572 = vsel %vm1570, %v1526, 0
      %v1575 = vsel %vm1570, %v1527, 0
      %v1578 = vsel %vm1570, %v1528, 0
      %v1581 = vsel %vm1570, %v1529, 0
      %v1584 = vsel %vm1570, %v1530, 0
      %v1587 = vsel %vm1570, %v1531, 0
      %v1590 = vsel %vm1570, %v1532, 0
      %v1593 = vsel %vm1570, %v1533, 0
      %v1596 = vsel %vm1570, %v1534, 0
      %v1599 = vsel %vm1570, %v1535, 0
      %v1602 = vsel %vm1570, %v1536, 0
      %v1605 = vsel %vm1570, %v1537, 0
      %v1608 = vsel %vm1570, %v1538, 0
      %v1611 = vsel %vm1570, %v1539, 0
      %v1614 = vsel %vm1570, %v1540, 0
      %v1617 = vsel %vm1570, %v1541, 0
      %v1620 = vsel %vm1570, %v1542, 0
      %v1623 = vsel %vm1570, %v1543, 0
      %v1626 = vsel %vm1570, %v1544, 0
      %v1629 = vsel %vm1570, %v1545, 0
      %v1632 = vsel %vm1570, %v1546, 0
      %v1635 = vsel %vm1570, %v1547, 0
      %v1638 = vsel %vm1570, %v1548, 0
      %v1641 = vsel %vm1570, %v1549, 0
      %v1644 = vsel %vm1570, %v1550, 0
      %v1647 = vsel %vm1570, %v1551, 0
      %v1650 = vsel %vm1570, %v1552, 0
      %v1653 = vsel %vm1570, %v1553, 0
      %v1656 = vsel %vm1570, %v1554, 0
      %v1659 = vsel %vm1570, %v1555, 0
      %v1662 = vsel %vm1570, %v1556, 0
      %v1665 = vsel %vm1570, %v1557, 0
      %vm1667 = vcmask 1043456
      %v1669 = vsel %vm1667, %v1562, 0
      %1671 = vmatprep.subr.mxu0 0.0
      %1672 = vmatpush1.msra.mxu0 0.0
      %1673 = vmatprep.subr.mxu0 0.0
      %1674 = vmatpush1.msra.mxu0 0.0
      %1675 = vmatprep.subr.mxu0 0.0
      %1676 = vmatpush1.msra.mxu0 0.0
      %1677 = vmatprep.subr.mxu0 0.0
      %1678 = vmatpush1.msra.mxu0 0.0
      %1679 = vmatprep.subr.mxu0 0.0
      %1680 = vmatpush1.msra.mxu0 0.0
      %1681 = vmatprep.subr.mxu0 0.0
      %1682 = vmatpush1.msra.mxu0 0.0
      %1683 = vmatprep.subr.mxu0 0.0
      %1684 = vmatpush1.msra.mxu0 0.0
      %1685 = vmatprep.subr.mxu0 0.0
      %1686 = vmatpush1.msra.mxu0 0.0
      %1687 = vmatprep.subr.mxu0 0.0
      %1688 = vmatpush1.msra.mxu0 0.0
      %1689 = vmatprep.subr.mxu0 0.0
      %1690 = vmatpush1.msra.mxu0 0.0
      %1691 = vmatprep.subr.mxu0 0.0
      %1692 = vmatpush1.msra.mxu0 0.0
      %1693 = vmatprep.subr.mxu0 0.0
      %1694 = vmatpush1.msra.mxu0 %v1669
      %1695 = vmatprep.subr.mxu0 0.0
      %1696 = vmatpush1.msra.mxu0 %v1561
      %1697 = vmatprep.subr.mxu0 0.0
      %1698 = vmatpush1.msra.mxu0 %v1560
      %1699 = vmatprep.subr.mxu0 0.0
      %1700 = vmatpush1.msra.mxu0 %v1559
      %1701 = vmatprep.subr.mxu0 0.0
      %1702 = vmatpush1.msra.mxu0 %v1558
      %1703 = vmatprep.subr.mxu0 0.0
      %1704 = vmatpush2.msra.mxu0 0.0
      %1705 = vmatprep.subr.mxu0 0.0
      %1706 = vmatpush2.msra.mxu0 0.0
      %1707 = vmatprep.subr.mxu0 0.0
      %1708 = vmatpush2.msra.mxu0 0.0
      %1709 = vmatprep.subr.mxu0 0.0
      %1710 = vmatpush2.msra.mxu0 0.0
      %1711 = vmatprep.subr.mxu0 0.0
      %1712 = vmatpush2.msra.mxu0 0.0
      %1713 = vmatprep.subr.mxu0 0.0
      %1714 = vmatpush2.msra.mxu0 0.0
      %1715 = vmatprep.subr.mxu0 0.0
      %1716 = vmatpush2.msra.mxu0 0.0
      %1717 = vmatprep.subr.mxu0 0.0
      %1718 = vmatpush2.msra.mxu0 0.0
      %1719 = vmatprep.subr.mxu0 0.0
      %1720 = vmatpush2.msra.mxu0 0.0
      %1721 = vmatprep.subr.mxu0 0.0
      %1722 = vmatpush2.msra.mxu0 0.0
      %1723 = vmatprep.subr.mxu0 0.0
      %1724 = vmatpush2.msra.mxu0 0.0
      %1725 = vmatprep.subr.mxu0 0.0
      %1726 = vmatpush2.msra.mxu0 0.0
      %1727 = vmatprep.subr.mxu0 0.0
      %1728 = vmatpush2.msra.mxu0 0.0
      %1729 = vmatprep.subr.mxu0 0.0
      %1730 = vmatpush2.msra.mxu0 0.0
      %1731 = vmatprep.subr.mxu0 0.0
      %1732 = vmatpush2.msra.mxu0 0.0
      %1733 = vmatprep.subr.mxu0 0.0
      %1734 = vmatpush2.msra.mxu0 0.0
      %1735 = vmatprep.mubr.f32.mxu0 0.0
      %1736 = vmatmul.mubr.f32.gmra.mxu0 %v1572
      %v1737 = vpop.f32.mrf.mxu0
      %v1738 = vadd.f32 %v1568, %v1737
      %v1739 = vpop.f32.mrf.mxu0
      %1740 = vmatprep.mubr.f32.mxu0 0.0
      %1741 = vmatmul.mubr.f32.gmra.mxu0 %v1575
      %v1742 = vpop.f32.mrf.mxu0
      %v1743 = vadd.f32 %v1568, %v1742
      %v1744 = vpop.f32.mrf.mxu0
      %1745 = vmatprep.mubr.f32.mxu0 0.0
      %1746 = vmatmul.mubr.f32.gmra.mxu0 %v1578
      %v1747 = vpop.f32.mrf.mxu0
      %v1748 = vadd.f32 %v1568, %v1747
      %v1749 = vpop.f32.mrf.mxu0
      %1750 = vmatprep.mubr.f32.mxu0 0.0
      %1751 = vmatmul.mubr.f32.gmra.mxu0 %v1581
      %v1752 = vpop.f32.mrf.mxu0
      %v1753 = vadd.f32 %v1568, %v1752
      %v1754 = vpop.f32.mrf.mxu0
      %1755 = vmatprep.mubr.f32.mxu0 0.0
      %1756 = vmatmul.mubr.f32.gmra.mxu0 %v1584
      %v1757 = vpop.f32.mrf.mxu0
      %v1758 = vadd.f32 %v1568, %v1757
      %v1759 = vpop.f32.mrf.mxu0
      %1760 = vmatprep.mubr.f32.mxu0 0.0
      %1761 = vmatmul.mubr.f32.gmra.mxu0 %v1587
      %v1762 = vpop.f32.mrf.mxu0
      %v1763 = vadd.f32 %v1568, %v1762
      %v1764 = vpop.f32.mrf.mxu0
      %1765 = vmatprep.mubr.f32.mxu0 0.0
      %1766 = vmatmul.mubr.f32.gmra.mxu0 %v1590
      %v1767 = vpop.f32.mrf.mxu0
      %v1768 = vadd.f32 %v1568, %v1767
      %v1769 = vpop.f32.mrf.mxu0
      %1770 = vmatprep.mubr.f32.mxu0 0.0
      %1771 = vmatmul.mubr.f32.gmra.mxu0 %v1593
      %v1772 = vpop.f32.mrf.mxu0
      %v1773 = vadd.f32 %v1568, %v1772
      %v1774 = vpop.f32.mrf.mxu0
      %1775 = vmatprep.mubr.f32.mxu0 0.0
      %1776 = vmatmul.mubr.f32.gmra.mxu0 %v1596
      %v1777 = vpop.f32.mrf.mxu0
      %v1778 = vadd.f32 %v1568, %v1777
      %v1779 = vpop.f32.mrf.mxu0
      %1780 = vmatprep.mubr.f32.mxu0 0.0
      %1781 = vmatmul.mubr.f32.gmra.mxu0 %v1599
      %v1782 = vpop.f32.mrf.mxu0
      %v1783 = vadd.f32 %v1568, %v1782
      %v1784 = vpop.f32.mrf.mxu0
      %1785 = vmatprep.mubr.f32.mxu0 0.0
      %1786 = vmatmul.mubr.f32.gmra.mxu0 %v1602
      %v1787 = vpop.f32.mrf.mxu0
      %v1788 = vadd.f32 %v1568, %v1787
      %v1789 = vpop.f32.mrf.mxu0
      %1790 = vmatprep.mubr.f32.mxu0 0.0
      %1791 = vmatmul.mubr.f32.gmra.mxu0 %v1605
      %v1792 = vpop.f32.mrf.mxu0
      %v1793 = vadd.f32 %v1568, %v1792
      %v1794 = vpop.f32.mrf.mxu0
      %1795 = vmatprep.mubr.f32.mxu0 0.0
      %1796 = vmatmul.mubr.f32.gmra.mxu0 %v1608
      %v1797 = vpop.f32.mrf.mxu0
      %v1798 = vadd.f32 %v1568, %v1797
      %v1799 = vpop.f32.mrf.mxu0
      %1800 = vmatprep.mubr.f32.mxu0 0.0
      %1801 = vmatmul.mubr.f32.gmra.mxu0 %v1611
      %v1802 = vpop.f32.mrf.mxu0
      %v1803 = vadd.f32 %v1568, %v1802
      %v1804 = vpop.f32.mrf.mxu0
      %1805 = vmatprep.mubr.f32.mxu0 0.0
      %1806 = vmatmul.mubr.f32.gmra.mxu0 %v1614
      %v1807 = vpop.f32.mrf.mxu0
      %v1808 = vadd.f32 %v1568, %v1807
      %v1809 = vpop.f32.mrf.mxu0
      %1810 = vmatprep.mubr.f32.mxu0 0.0
      %1811 = vmatmul.mubr.f32.gmra.mxu0 %v1617
      %v1812 = vpop.f32.mrf.mxu0
      %v1813 = vadd.f32 %v1568, %v1812
      %v1814 = vpop.f32.mrf.mxu0
      %1815 = vmatprep.mubr.f32.mxu0 0.0
      %1816 = vmatmul.mubr.f32.gmra.mxu0 %v1620
      %v1817 = vpop.f32.mrf.mxu0
      %v1818 = vadd.f32 %v1568, %v1817
      %v1819 = vpop.f32.mrf.mxu0
      %1820 = vmatprep.mubr.f32.mxu0 0.0
      %1821 = vmatmul.mubr.f32.gmra.mxu0 %v1623
      %v1822 = vpop.f32.mrf.mxu0
      %v1823 = vadd.f32 %v1568, %v1822
      %v1824 = vpop.f32.mrf.mxu0
      %1825 = vmatprep.mubr.f32.mxu0 0.0
      %1826 = vmatmul.mubr.f32.gmra.mxu0 %v1626
      %v1827 = vpop.f32.mrf.mxu0
      %v1828 = vadd.f32 %v1568, %v1827
      %v1829 = vpop.f32.mrf.mxu0
      %1830 = vmatprep.mubr.f32.mxu0 0.0
      %1831 = vmatmul.mubr.f32.gmra.mxu0 %v1629
      %v1832 = vpop.f32.mrf.mxu0
      %v1833 = vadd.f32 %v1568, %v1832
      %v1834 = vpop.f32.mrf.mxu0
      %1835 = vmatprep.mubr.f32.mxu0 0.0
      %1836 = vmatmul.mubr.f32.gmra.mxu0 %v1632
      %v1837 = vpop.f32.mrf.mxu0
      %v1838 = vadd.f32 %v1568, %v1837
      %v1839 = vpop.f32.mrf.mxu0
      %1840 = vmatprep.mubr.f32.mxu0 0.0
      %1841 = vmatmul.mubr.f32.gmra.mxu0 %v1635
      %v1842 = vpop.f32.mrf.mxu0
      %v1843 = vadd.f32 %v1568, %v1842
      %v1844 = vpop.f32.mrf.mxu0
      %1845 = vmatprep.mubr.f32.mxu0 0.0
      %1846 = vmatmul.mubr.f32.gmra.mxu0 %v1638
      %v1847 = vpop.f32.mrf.mxu0
      %v1848 = vadd.f32 %v1568, %v1847
      %v1849 = vpop.f32.mrf.mxu0
      %1850 = vmatprep.mubr.f32.mxu0 0.0
      %1851 = vmatmul.mubr.f32.gmra.mxu0 %v1641
      %v1852 = vpop.f32.mrf.mxu0
      %v1853 = vadd.f32 %v1568, %v1852
      %v1854 = vpop.f32.mrf.mxu0
      %1855 = vmatprep.mubr.f32.mxu0 0.0
      %1856 = vmatmul.mubr.f32.gmra.mxu0 %v1644
      %v1857 = vpop.f32.mrf.mxu0
      %v1858 = vadd.f32 %v1568, %v1857
      %v1859 = vpop.f32.mrf.mxu0
      %1860 = vmatprep.mubr.f32.mxu0 0.0
      %1861 = vmatmul.mubr.f32.gmra.mxu0 %v1647
      %v1862 = vpop.f32.mrf.mxu0
      %v1863 = vadd.f32 %v1568, %v1862
      %v1864 = vpop.f32.mrf.mxu0
      %1865 = vmatprep.mubr.f32.mxu0 0.0
      %1866 = vmatmul.mubr.f32.gmra.mxu0 %v1650
      %v1867 = vpop.f32.mrf.mxu0
      %v1868 = vadd.f32 %v1568, %v1867
      %v1869 = vpop.f32.mrf.mxu0
      %1870 = vmatprep.mubr.f32.mxu0 0.0
      %1871 = vmatmul.mubr.f32.gmra.mxu0 %v1653
      %v1872 = vpop.f32.mrf.mxu0
      %v1873 = vadd.f32 %v1568, %v1872
      %v1874 = vpop.f32.mrf.mxu0
      %1875 = vmatprep.mubr.f32.mxu0 0.0
      %1876 = vmatmul.mubr.f32.gmra.mxu0 %v1656
      %v1877 = vpop.f32.mrf.mxu0
      %v1878 = vadd.f32 %v1568, %v1877
      %v1879 = vpop.f32.mrf.mxu0
      %1880 = vmatprep.mubr.f32.mxu0 0.0
      %1881 = vmatmul.mubr.f32.gmra.mxu0 %v1659
      %v1882 = vpop.f32.mrf.mxu0
      %v1883 = vadd.f32 %v1568, %v1882
      %v1884 = vpop.f32.mrf.mxu0
      %1885 = vmatprep.mubr.f32.mxu0 0.0
      %1886 = vmatmul.mubr.f32.gmra.mxu0 %v1662
      %v1887 = vpop.f32.mrf.mxu0
      %v1888 = vadd.f32 %v1568, %v1887
      %v1889 = vpop.f32.mrf.mxu0
      %1890 = vmatprep.mubr.f32.mxu0 0.0
      %1891 = vmatmul.mubr.f32.gmra.mxu0 %v1665
      %v1892 = vpop.f32.mrf.mxu0
      %v1893 = vadd.f32 %v1568, %v1892
      %v1894 = vpop.f32.mrf.mxu0
      %1895 = vdwg.mxu0
      %v1896 = vmax.f32 %v1738, 0.0
      %v1897 = vmax.f32 %v1743, 0.0
      %v1898 = vmax.f32 %v1748, 0.0
      %v1899 = vmax.f32 %v1753, 0.0
      %v1900 = vmax.f32 %v1758, 0.0
      %v1901 = vmax.f32 %v1763, 0.0
      %v1902 = vmax.f32 %v1768, 0.0
      %v1903 = vmax.f32 %v1773, 0.0
      %v1904 = vmax.f32 %v1778, 0.0
      %v1905 = vmax.f32 %v1783, 0.0
      %v1906 = vmax.f32 %v1788, 0.0
      %v1907 = vmax.f32 %v1793, 0.0
      %v1908 = vmax.f32 %v1798, 0.0
      %v1909 = vmax.f32 %v1803, 0.0
      %v1910 = vmax.f32 %v1808, 0.0
      %v1911 = vmax.f32 %v1813, 0.0
      %v1912 = vmax.f32 %v1818, 0.0
      %v1913 = vmax.f32 %v1823, 0.0
      %v1914 = vmax.f32 %v1828, 0.0
      %v1915 = vmax.f32 %v1833, 0.0
      %v1916 = vmax.f32 %v1838, 0.0
      %v1917 = vmax.f32 %v1843, 0.0
      %v1918 = vmax.f32 %v1848, 0.0
      %v1919 = vmax.f32 %v1853, 0.0
      %v1920 = vmax.f32 %v1858, 0.0
      %v1921 = vmax.f32 %v1863, 0.0
      %v1922 = vmax.f32 %v1868, 0.0
      %v1923 = vmax.f32 %v1873, 0.0
      %v1924 = vmax.f32 %v1878, 0.0
      %v1925 = vmax.f32 %v1883, 0.0
      %v1926 = vmax.f32 %v1888, 0.0
      %v1927 = vmax.f32 %v1893, 0.0
      %v1928 = vsel %vm225, %v1896, -inf
      %v1929 = vsel %vm225, %v1898, -inf
      %v1930 = vmax.f32 %v1928, %v1929
      %v1931 = vsel %vm225, %v1897, -inf
      %v1932 = vsel %vm225, %v1899, -inf
      %v1933 = vmax.f32 %v1931, %v1932
      %v1934 = vsel %vm225, %v1900, -inf
      %v1935 = vsel %vm225, %v1902, -inf
      %v1936 = vmax.f32 %v1934, %v1935
      %v1937 = vsel %vm225, %v1901, -inf
      %v1938 = vsel %vm225, %v1903, -inf
      %v1939 = vmax.f32 %v1937, %v1938
      %v1940 = vsel %vm225, %v1904, -inf
      %v1941 = vsel %vm225, %v1906, -inf
      %v1942 = vmax.f32 %v1940, %v1941
      %v1943 = vsel %vm225, %v1905, -inf
      %v1944 = vsel %vm225, %v1907, -inf
      %v1945 = vmax.f32 %v1943, %v1944
      %v1946 = vsel %vm225, %v1908, -inf
      %v1947 = vsel %vm225, %v1910, -inf
      %v1948 = vmax.f32 %v1946, %v1947
      %v1949 = vsel %vm225, %v1909, -inf
      %v1950 = vsel %vm225, %v1911, -inf
      %v1951 = vmax.f32 %v1949, %v1950
      %v1952 = vsel %vm225, %v1912, -inf
      %v1953 = vsel %vm225, %v1914, -inf
      %v1954 = vmax.f32 %v1952, %v1953
      %v1955 = vsel %vm225, %v1913, -inf
      %v1956 = vsel %vm225, %v1915, -inf
      %v1957 = vmax.f32 %v1955, %v1956
      %v1958 = vsel %vm225, %v1916, -inf
      %v1959 = vsel %vm225, %v1918, -inf
      %v1960 = vmax.f32 %v1958, %v1959
      %v1961 = vsel %vm225, %v1917, -inf
      %v1962 = vsel %vm225, %v1919, -inf
      %v1963 = vmax.f32 %v1961, %v1962
      %v1964 = vsel %vm225, %v1920, -inf
      %v1965 = vsel %vm225, %v1922, -inf
      %v1966 = vmax.f32 %v1964, %v1965
      %v1967 = vsel %vm225, %v1921, -inf
      %v1968 = vsel %vm225, %v1923, -inf
      %v1969 = vmax.f32 %v1967, %v1968
      %v1970 = vsel %vm225, %v1924, -inf
      %v1971 = vsel %vm225, %v1926, -inf
      %v1972 = vmax.f32 %v1970, %v1971
      %v1973 = vsel %vm225, %v1925, -inf
      %v1974 = vsel %vm225, %v1927, -inf
      %v1975 = vmax.f32 %v1973, %v1974
      %v1992 = vcombine.high %v1930, %v1930
      %v1994 = vunpack.c.l.s4 1983009808
      %v1995 = vunpack.c.0.s8 %v1994
      %v1996 = vlaneseq
      %v1997 = vshrl.u32 %v1996, 7
      %v1998 = vsub.s32 %v1995, %v1997
      %v1999 = vrot.slane %v1930, %v1998
      %v2001 = vunpack.c.l.s4 1983009808
      %v2002 = vunpack.c.0.s8 %v2001
      %v2003 = vlaneseq
      %v2004 = vshrl.u32 %v2003, 7
      %v2005 = vsub.s32 %v2002, %v2004
      %v2006 = vrot.slane %v1992, %v2005
      %v2007 = vcombine.high %v1999, %v1999
      %v2008 = vcombine.high %v2006, %v2006
      %v2009 = vcombine.high %v1933, %v1933
      %v2011 = vunpack.c.l.s4 1983009808
      %v2012 = vunpack.c.0.s8 %v2011
      %v2013 = vlaneseq
      %v2014 = vshrl.u32 %v2013, 7
      %v2015 = vsub.s32 %v2012, %v2014
      %v2016 = vrot.slane %v1933, %v2015
      %v2018 = vunpack.c.l.s4 1983009808
      %v2019 = vunpack.c.0.s8 %v2018
      %v2020 = vlaneseq
      %v2021 = vshrl.u32 %v2020, 7
      %v2022 = vsub.s32 %v2019, %v2021
      %v2023 = vrot.slane %v2009, %v2022
      %v2024 = vcombine.high %v2016, %v2016
      %v2025 = vcombine.high %v2023, %v2023
      %v2026 = vcombine.high %v1936, %v1936
      %v2028 = vunpack.c.l.s4 1983009808
      %v2029 = vunpack.c.0.s8 %v2028
      %v2030 = vlaneseq
      %v2031 = vshrl.u32 %v2030, 7
      %v2032 = vsub.s32 %v2029, %v2031
      %v2033 = vrot.slane %v1936, %v2032
      %v2035 = vunpack.c.l.s4 1983009808
      %v2036 = vunpack.c.0.s8 %v2035
      %v2037 = vlaneseq
      %v2038 = vshrl.u32 %v2037, 7
      %v2039 = vsub.s32 %v2036, %v2038
      %v2040 = vrot.slane %v2026, %v2039
      %v2041 = vcombine.high %v2033, %v2033
      %v2042 = vcombine.high %v2040, %v2040
      %v2043 = vcombine.high %v1939, %v1939
      %v2045 = vunpack.c.l.s4 1983009808
      %v2046 = vunpack.c.0.s8 %v2045
      %v2047 = vlaneseq
      %v2048 = vshrl.u32 %v2047, 7
      %v2049 = vsub.s32 %v2046, %v2048
      %v2050 = vrot.slane %v1939, %v2049
      %v2052 = vunpack.c.l.s4 1983009808
      %v2053 = vunpack.c.0.s8 %v2052
      %v2054 = vlaneseq
      %v2055 = vshrl.u32 %v2054, 7
      %v2056 = vsub.s32 %v2053, %v2055
      %v2057 = vrot.slane %v2043, %v2056
      %v2058 = vcombine.high %v2050, %v2050
      %v2059 = vcombine.high %v2057, %v2057
      %v2060 = vcombine.high %v1942, %v1942
      %v2062 = vunpack.c.l.s4 1983009808
      %v2063 = vunpack.c.0.s8 %v2062
      %v2064 = vlaneseq
      %v2065 = vshrl.u32 %v2064, 7
      %v2066 = vsub.s32 %v2063, %v2065
      %v2067 = vrot.slane %v1942, %v2066
      %v2069 = vunpack.c.l.s4 1983009808
      %v2070 = vunpack.c.0.s8 %v2069
      %v2071 = vlaneseq
      %v2072 = vshrl.u32 %v2071, 7
      %v2073 = vsub.s32 %v2070, %v2072
      %v2074 = vrot.slane %v2060, %v2073
      %v2075 = vcombine.high %v2067, %v2067
      %v2076 = vcombine.high %v2074, %v2074
      %v2077 = vcombine.high %v1945, %v1945
      %v2079 = vunpack.c.l.s4 1983009808
      %v2080 = vunpack.c.0.s8 %v2079
      %v2081 = vlaneseq
      %v2082 = vshrl.u32 %v2081, 7
      %v2083 = vsub.s32 %v2080, %v2082
      %v2084 = vrot.slane %v1945, %v2083
      %v2086 = vunpack.c.l.s4 1983009808
      %v2087 = vunpack.c.0.s8 %v2086
      %v2088 = vlaneseq
      %v2089 = vshrl.u32 %v2088, 7
      %v2090 = vsub.s32 %v2087, %v2089
      %v2091 = vrot.slane %v2077, %v2090
      %v2092 = vcombine.high %v2084, %v2084
      %v2093 = vcombine.high %v2091, %v2091
      %v2094 = vcombine.high %v1948, %v1948
      %v2096 = vunpack.c.l.s4 1983009808
      %v2097 = vunpack.c.0.s8 %v2096
      %v2098 = vlaneseq
      %v2099 = vshrl.u32 %v2098, 7
      %v2100 = vsub.s32 %v2097, %v2099
      %v2101 = vrot.slane %v1948, %v2100
      %v2103 = vunpack.c.l.s4 1983009808
      %v2104 = vunpack.c.0.s8 %v2103
      %v2105 = vlaneseq
      %v2106 = vshrl.u32 %v2105, 7
      %v2107 = vsub.s32 %v2104, %v2106
      %v2108 = vrot.slane %v2094, %v2107
      %v2109 = vcombine.high %v2101, %v2101
      %v2110 = vcombine.high %v2108, %v2108
      %v2111 = vcombine.high %v1951, %v1951
      %v2113 = vunpack.c.l.s4 1983009808
      %v2114 = vunpack.c.0.s8 %v2113
      %v2115 = vlaneseq
      %v2116 = vshrl.u32 %v2115, 7
      %v2117 = vsub.s32 %v2114, %v2116
      %v2118 = vrot.slane %v1951, %v2117
      %v2120 = vunpack.c.l.s4 1983009808
      %v2121 = vunpack.c.0.s8 %v2120
      %v2122 = vlaneseq
      %v2123 = vshrl.u32 %v2122, 7
      %v2124 = vsub.s32 %v2121, %v2123
      %v2125 = vrot.slane %v2111, %v2124
      %v2126 = vcombine.high %v2118, %v2118
      %v2127 = vcombine.high %v2125, %v2125
      %v2128 = vcombine.high %v1954, %v1954
      %v2130 = vunpack.c.l.s4 1983009808
      %v2131 = vunpack.c.0.s8 %v2130
      %v2132 = vlaneseq
      %v2133 = vshrl.u32 %v2132, 7
      %v2134 = vsub.s32 %v2131, %v2133
      %v2135 = vrot.slane %v1954, %v2134
      %v2137 = vunpack.c.l.s4 1983009808
      %v2138 = vunpack.c.0.s8 %v2137
      %v2139 = vlaneseq
      %v2140 = vshrl.u32 %v2139, 7
      %v2141 = vsub.s32 %v2138, %v2140
      %v2142 = vrot.slane %v2128, %v2141
      %v2143 = vcombine.high %v2135, %v2135
      %v2144 = vcombine.high %v2142, %v2142
      %v2145 = vcombine.high %v1957, %v1957
      %v2147 = vunpack.c.l.s4 1983009808
      %v2148 = vunpack.c.0.s8 %v2147
      %v2149 = vlaneseq
      %v2150 = vshrl.u32 %v2149, 7
      %v2151 = vsub.s32 %v2148, %v2150
      %v2152 = vrot.slane %v1957, %v2151
      %v2154 = vunpack.c.l.s4 1983009808
      %v2155 = vunpack.c.0.s8 %v2154
      %v2156 = vlaneseq
      %v2157 = vshrl.u32 %v2156, 7
      %v2158 = vsub.s32 %v2155, %v2157
      %v2159 = vrot.slane %v2145, %v2158
      %v2160 = vcombine.high %v2152, %v2152
      %v2161 = vcombine.high %v2159, %v2159
      %v2162 = vcombine.high %v1960, %v1960
      %v2164 = vunpack.c.l.s4 1983009808
      %v2165 = vunpack.c.0.s8 %v2164
      %v2166 = vlaneseq
      %v2167 = vshrl.u32 %v2166, 7
      %v2168 = vsub.s32 %v2165, %v2167
      %v2169 = vrot.slane %v1960, %v2168
      %v2171 = vunpack.c.l.s4 1983009808
      %v2172 = vunpack.c.0.s8 %v2171
      %v2173 = vlaneseq
      %v2174 = vshrl.u32 %v2173, 7
      %v2175 = vsub.s32 %v2172, %v2174
      %v2176 = vrot.slane %v2162, %v2175
      %v2177 = vcombine.high %v2169, %v2169
      %v2178 = vcombine.high %v2176, %v2176
      %v2179 = vcombine.high %v1963, %v1963
      %v2181 = vunpack.c.l.s4 1983009808
      %v2182 = vunpack.c.0.s8 %v2181
      %v2183 = vlaneseq
      %v2184 = vshrl.u32 %v2183, 7
      %v2185 = vsub.s32 %v2182, %v2184
      %v2186 = vrot.slane %v1963, %v2185
      %v2188 = vunpack.c.l.s4 1983009808
      %v2189 = vunpack.c.0.s8 %v2188
      %v2190 = vlaneseq
      %v2191 = vshrl.u32 %v2190, 7
      %v2192 = vsub.s32 %v2189, %v2191
      %v2193 = vrot.slane %v2179, %v2192
      %v2194 = vcombine.high %v2186, %v2186
      %v2195 = vcombine.high %v2193, %v2193
      %v2196 = vcombine.high %v1966, %v1966
      %v2198 = vunpack.c.l.s4 1983009808
      %v2199 = vunpack.c.0.s8 %v2198
      %v2200 = vlaneseq
      %v2201 = vshrl.u32 %v2200, 7
      %v2202 = vsub.s32 %v2199, %v2201
      %v2203 = vrot.slane %v1966, %v2202
      %v2205 = vunpack.c.l.s4 1983009808
      %v2206 = vunpack.c.0.s8 %v2205
      %v2207 = vlaneseq
      %v2208 = vshrl.u32 %v2207, 7
      %v2209 = vsub.s32 %v2206, %v2208
      %v2210 = vrot.slane %v2196, %v2209
      %v2211 = vcombine.high %v2203, %v2203
      %v2212 = vcombine.high %v2210, %v2210
      %v2213 = vcombine.high %v1969, %v1969
      %v2215 = vunpack.c.l.s4 1983009808
      %v2216 = vunpack.c.0.s8 %v2215
      %v2217 = vlaneseq
      %v2218 = vshrl.u32 %v2217, 7
      %v2219 = vsub.s32 %v2216, %v2218
      %v2220 = vrot.slane %v1969, %v2219
      %v2222 = vunpack.c.l.s4 1983009808
      %v2223 = vunpack.c.0.s8 %v2222
      %v2224 = vlaneseq
      %v2225 = vshrl.u32 %v2224, 7
      %v2226 = vsub.s32 %v2223, %v2225
      %v2227 = vrot.slane %v2213, %v2226
      %v2228 = vcombine.high %v2220, %v2220
      %v2229 = vcombine.high %v2227, %v2227
      %v2230 = vcombine.high %v1972, %v1972
      %v2232 = vunpack.c.l.s4 1983009808
      %v2233 = vunpack.c.0.s8 %v2232
      %v2234 = vlaneseq
      %v2235 = vshrl.u32 %v2234, 7
      %v2236 = vsub.s32 %v2233, %v2235
      %v2237 = vrot.slane %v1972, %v2236
      %v2239 = vunpack.c.l.s4 1983009808
      %v2240 = vunpack.c.0.s8 %v2239
      %v2241 = vlaneseq
      %v2242 = vshrl.u32 %v2241, 7
      %v2243 = vsub.s32 %v2240, %v2242
      %v2244 = vrot.slane %v2230, %v2243
      %v2245 = vcombine.high %v2237, %v2237
      %v2246 = vcombine.high %v2244, %v2244
      %v2247 = vcombine.high %v1975, %v1975
      %v2249 = vunpack.c.l.s4 1983009808
      %v2250 = vunpack.c.0.s8 %v2249
      %v2251 = vlaneseq
      %v2252 = vshrl.u32 %v2251, 7
      %v2253 = vsub.s32 %v2250, %v2252
      %v2254 = vrot.slane %v1975, %v2253
      %v2256 = vunpack.c.l.s4 1983009808
      %v2257 = vunpack.c.0.s8 %v2256
      %v2258 = vlaneseq
      %v2259 = vshrl.u32 %v2258, 7
      %v2260 = vsub.s32 %v2257, %v2259
      %v2261 = vrot.slane %v2247, %v2260
      %v2262 = vcombine.high %v2254, %v2254
      %v2263 = vcombine.high %v2261, %v2261
      %vm2328 = vcmask 25600
      %v2329 = vsel %vm2328, %v1999, -inf
      %v2330 = vrot.slane %v2329, 4
      %v2331 = vmax.f32 %v2329, %v2330
      %v2332 = vrot.slane %v2331, 2
      %v2333 = vmax.f32 %v2331, %v2332
      %v2334 = vrot.slane %v2333, 1
      %v2335 = vmax.f32 %v2333, %v2334
      %v2336 = vsel %vm2328, %v2007, -inf
      %v2337 = vrot.slane %v2336, 4
      %v2338 = vmax.f32 %v2336, %v2337
      %v2339 = vrot.slane %v2338, 2
      %v2340 = vmax.f32 %v2338, %v2339
      %v2341 = vrot.slane %v2340, 1
      %v2342 = vmax.f32 %v2340, %v2341
      %v2343 = vsel %vm2328, %v2006, -inf
      %v2344 = vrot.slane %v2343, 4
      %v2345 = vmax.f32 %v2343, %v2344
      %v2346 = vrot.slane %v2345, 2
      %v2347 = vmax.f32 %v2345, %v2346
      %v2348 = vrot.slane %v2347, 1
      %v2349 = vmax.f32 %v2347, %v2348
      %v2350 = vsel %vm2328, %v2008, -inf
      %v2351 = vrot.slane %v2350, 4
      %v2352 = vmax.f32 %v2350, %v2351
      %v2353 = vrot.slane %v2352, 2
      %v2354 = vmax.f32 %v2352, %v2353
      %v2355 = vrot.slane %v2354, 1
      %v2356 = vmax.f32 %v2354, %v2355
      %v2357 = vsel %vm2328, %v2016, -inf
      %v2358 = vrot.slane %v2357, 4
      %v2359 = vmax.f32 %v2357, %v2358
      %v2360 = vrot.slane %v2359, 2
      %v2361 = vmax.f32 %v2359, %v2360
      %v2362 = vrot.slane %v2361, 1
      %v2363 = vmax.f32 %v2361, %v2362
      %v2364 = vsel %vm2328, %v2024, -inf
      %v2365 = vrot.slane %v2364, 4
      %v2366 = vmax.f32 %v2364, %v2365
      %v2367 = vrot.slane %v2366, 2
      %v2368 = vmax.f32 %v2366, %v2367
      %v2369 = vrot.slane %v2368, 1
      %v2370 = vmax.f32 %v2368, %v2369
      %v2371 = vsel %vm2328, %v2023, -inf
      %v2372 = vrot.slane %v2371, 4
      %v2373 = vmax.f32 %v2371, %v2372
      %v2374 = vrot.slane %v2373, 2
      %v2375 = vmax.f32 %v2373, %v2374
      %v2376 = vrot.slane %v2375, 1
      %v2377 = vmax.f32 %v2375, %v2376
      %v2378 = vsel %vm2328, %v2025, -inf
      %v2379 = vrot.slane %v2378, 4
      %v2380 = vmax.f32 %v2378, %v2379
      %v2381 = vrot.slane %v2380, 2
      %v2382 = vmax.f32 %v2380, %v2381
      %v2383 = vrot.slane %v2382, 1
      %v2384 = vmax.f32 %v2382, %v2383
      %v2385 = vsel %vm2328, %v2033, -inf
      %v2386 = vrot.slane %v2385, 4
      %v2387 = vmax.f32 %v2385, %v2386
      %v2388 = vrot.slane %v2387, 2
      %v2389 = vmax.f32 %v2387, %v2388
      %v2390 = vrot.slane %v2389, 1
      %v2391 = vmax.f32 %v2389, %v2390
      %v2392 = vsel %vm2328, %v2041, -inf
      %v2393 = vrot.slane %v2392, 4
      %v2394 = vmax.f32 %v2392, %v2393
      %v2395 = vrot.slane %v2394, 2
      %v2396 = vmax.f32 %v2394, %v2395
      %v2397 = vrot.slane %v2396, 1
      %v2398 = vmax.f32 %v2396, %v2397
      %v2399 = vsel %vm2328, %v2040, -inf
      %v2400 = vrot.slane %v2399, 4
      %v2401 = vmax.f32 %v2399, %v2400
      %v2402 = vrot.slane %v2401, 2
      %v2403 = vmax.f32 %v2401, %v2402
      %v2404 = vrot.slane %v2403, 1
      %v2405 = vmax.f32 %v2403, %v2404
      %v2406 = vsel %vm2328, %v2042, -inf
      %v2407 = vrot.slane %v2406, 4
      %v2408 = vmax.f32 %v2406, %v2407
      %v2409 = vrot.slane %v2408, 2
      %v2410 = vmax.f32 %v2408, %v2409
      %v2411 = vrot.slane %v2410, 1
      %v2412 = vmax.f32 %v2410, %v2411
      %v2413 = vsel %vm2328, %v2050, -inf
      %v2414 = vrot.slane %v2413, 4
      %v2415 = vmax.f32 %v2413, %v2414
      %v2416 = vrot.slane %v2415, 2
      %v2417 = vmax.f32 %v2415, %v2416
      %v2418 = vrot.slane %v2417, 1
      %v2419 = vmax.f32 %v2417, %v2418
      %v2420 = vsel %vm2328, %v2058, -inf
      %v2421 = vrot.slane %v2420, 4
      %v2422 = vmax.f32 %v2420, %v2421
      %v2423 = vrot.slane %v2422, 2
      %v2424 = vmax.f32 %v2422, %v2423
      %v2425 = vrot.slane %v2424, 1
      %v2426 = vmax.f32 %v2424, %v2425
      %v2427 = vsel %vm2328, %v2057, -inf
      %v2428 = vrot.slane %v2427, 4
      %v2429 = vmax.f32 %v2427, %v2428
      %v2430 = vrot.slane %v2429, 2
      %v2431 = vmax.f32 %v2429, %v2430
      %v2432 = vrot.slane %v2431, 1
      %v2433 = vmax.f32 %v2431, %v2432
      %v2434 = vsel %vm2328, %v2059, -inf
      %v2435 = vrot.slane %v2434, 4
      %v2436 = vmax.f32 %v2434, %v2435
      %v2437 = vrot.slane %v2436, 2
      %v2438 = vmax.f32 %v2436, %v2437
      %v2439 = vrot.slane %v2438, 1
      %v2440 = vmax.f32 %v2438, %v2439
      %v2441 = vsel %vm2328, %v2067, -inf
      %v2442 = vrot.slane %v2441, 4
      %v2443 = vmax.f32 %v2441, %v2442
      %v2444 = vrot.slane %v2443, 2
      %v2445 = vmax.f32 %v2443, %v2444
      %v2446 = vrot.slane %v2445, 1
      %v2447 = vmax.f32 %v2445, %v2446
      %v2448 = vsel %vm2328, %v2075, -inf
      %v2449 = vrot.slane %v2448, 4
      %v2450 = vmax.f32 %v2448, %v2449
      %v2451 = vrot.slane %v2450, 2
      %v2452 = vmax.f32 %v2450, %v2451
      %v2453 = vrot.slane %v2452, 1
      %v2454 = vmax.f32 %v2452, %v2453
      %v2455 = vsel %vm2328, %v2074, -inf
      %v2456 = vrot.slane %v2455, 4
      %v2457 = vmax.f32 %v2455, %v2456
      %v2458 = vrot.slane %v2457, 2
      %v2459 = vmax.f32 %v2457, %v2458
      %v2460 = vrot.slane %v2459, 1
      %v2461 = vmax.f32 %v2459, %v2460
      %v2462 = vsel %vm2328, %v2076, -inf
      %v2463 = vrot.slane %v2462, 4
      %v2464 = vmax.f32 %v2462, %v2463
      %v2465 = vrot.slane %v2464, 2
      %v2466 = vmax.f32 %v2464, %v2465
      %v2467 = vrot.slane %v2466, 1
      %v2468 = vmax.f32 %v2466, %v2467
      %v2469 = vsel %vm2328, %v2084, -inf
      %v2470 = vrot.slane %v2469, 4
      %v2471 = vmax.f32 %v2469, %v2470
      %v2472 = vrot.slane %v2471, 2
      %v2473 = vmax.f32 %v2471, %v2472
      %v2474 = vrot.slane %v2473, 1
      %v2475 = vmax.f32 %v2473, %v2474
      %v2476 = vsel %vm2328, %v2092, -inf
      %v2477 = vrot.slane %v2476, 4
      %v2478 = vmax.f32 %v2476, %v2477
      %v2479 = vrot.slane %v2478, 2
      %v2480 = vmax.f32 %v2478, %v2479
      %v2481 = vrot.slane %v2480, 1
      %v2482 = vmax.f32 %v2480, %v2481
      %v2483 = vsel %vm2328, %v2091, -inf
      %v2484 = vrot.slane %v2483, 4
      %v2485 = vmax.f32 %v2483, %v2484
      %v2486 = vrot.slane %v2485, 2
      %v2487 = vmax.f32 %v2485, %v2486
      %v2488 = vrot.slane %v2487, 1
      %v2489 = vmax.f32 %v2487, %v2488
      %v2490 = vsel %vm2328, %v2093, -inf
      %v2491 = vrot.slane %v2490, 4
      %v2492 = vmax.f32 %v2490, %v2491
      %v2493 = vrot.slane %v2492, 2
      %v2494 = vmax.f32 %v2492, %v2493
      %v2495 = vrot.slane %v2494, 1
      %v2496 = vmax.f32 %v2494, %v2495
      %v2497 = vsel %vm2328, %v2101, -inf
      %v2498 = vrot.slane %v2497, 4
      %v2499 = vmax.f32 %v2497, %v2498
      %v2500 = vrot.slane %v2499, 2
      %v2501 = vmax.f32 %v2499, %v2500
      %v2502 = vrot.slane %v2501, 1
      %v2503 = vmax.f32 %v2501, %v2502
      %v2504 = vsel %vm2328, %v2109, -inf
      %v2505 = vrot.slane %v2504, 4
      %v2506 = vmax.f32 %v2504, %v2505
      %v2507 = vrot.slane %v2506, 2
      %v2508 = vmax.f32 %v2506, %v2507
      %v2509 = vrot.slane %v2508, 1
      %v2510 = vmax.f32 %v2508, %v2509
      %v2511 = vsel %vm2328, %v2108, -inf
      %v2512 = vrot.slane %v2511, 4
      %v2513 = vmax.f32 %v2511, %v2512
      %v2514 = vrot.slane %v2513, 2
      %v2515 = vmax.f32 %v2513, %v2514
      %v2516 = vrot.slane %v2515, 1
      %v2517 = vmax.f32 %v2515, %v2516
      %v2518 = vsel %vm2328, %v2110, -inf
      %v2519 = vrot.slane %v2518, 4
      %v2520 = vmax.f32 %v2518, %v2519
      %v2521 = vrot.slane %v2520, 2
      %v2522 = vmax.f32 %v2520, %v2521
      %v2523 = vrot.slane %v2522, 1
      %v2524 = vmax.f32 %v2522, %v2523
      %v2525 = vsel %vm2328, %v2118, -inf
      %v2526 = vrot.slane %v2525, 4
      %v2527 = vmax.f32 %v2525, %v2526
      %v2528 = vrot.slane %v2527, 2
      %v2529 = vmax.f32 %v2527, %v2528
      %v2530 = vrot.slane %v2529, 1
      %v2531 = vmax.f32 %v2529, %v2530
      %v2532 = vsel %vm2328, %v2126, -inf
      %v2533 = vrot.slane %v2532, 4
      %v2534 = vmax.f32 %v2532, %v2533
      %v2535 = vrot.slane %v2534, 2
      %v2536 = vmax.f32 %v2534, %v2535
      %v2537 = vrot.slane %v2536, 1
      %v2538 = vmax.f32 %v2536, %v2537
      %v2539 = vsel %vm2328, %v2125, -inf
      %v2540 = vrot.slane %v2539, 4
      %v2541 = vmax.f32 %v2539, %v2540
      %v2542 = vrot.slane %v2541, 2
      %v2543 = vmax.f32 %v2541, %v2542
      %v2544 = vrot.slane %v2543, 1
      %v2545 = vmax.f32 %v2543, %v2544
      %v2546 = vsel %vm2328, %v2127, -inf
      %v2547 = vrot.slane %v2546, 4
      %v2548 = vmax.f32 %v2546, %v2547
      %v2549 = vrot.slane %v2548, 2
      %v2550 = vmax.f32 %v2548, %v2549
      %v2551 = vrot.slane %v2550, 1
      %v2552 = vmax.f32 %v2550, %v2551
      %v2553 = vsel %vm2328, %v2135, -inf
      %v2554 = vrot.slane %v2553, 4
      %v2555 = vmax.f32 %v2553, %v2554
      %v2556 = vrot.slane %v2555, 2
      %v2557 = vmax.f32 %v2555, %v2556
      %v2558 = vrot.slane %v2557, 1
      %v2559 = vmax.f32 %v2557, %v2558
      %v2560 = vsel %vm2328, %v2143, -inf
      %v2561 = vrot.slane %v2560, 4
      %v2562 = vmax.f32 %v2560, %v2561
      %v2563 = vrot.slane %v2562, 2
      %v2564 = vmax.f32 %v2562, %v2563
      %v2565 = vrot.slane %v2564, 1
      %v2566 = vmax.f32 %v2564, %v2565
      %v2567 = vsel %vm2328, %v2142, -inf
      %v2568 = vrot.slane %v2567, 4
      %v2569 = vmax.f32 %v2567, %v2568
      %v2570 = vrot.slane %v2569, 2
      %v2571 = vmax.f32 %v2569, %v2570
      %v2572 = vrot.slane %v2571, 1
      %v2573 = vmax.f32 %v2571, %v2572
      %v2574 = vsel %vm2328, %v2144, -inf
      %v2575 = vrot.slane %v2574, 4
      %v2576 = vmax.f32 %v2574, %v2575
      %v2577 = vrot.slane %v2576, 2
      %v2578 = vmax.f32 %v2576, %v2577
      %v2579 = vrot.slane %v2578, 1
      %v2580 = vmax.f32 %v2578, %v2579
      %v2581 = vsel %vm2328, %v2152, -inf
      %v2582 = vrot.slane %v2581, 4
      %v2583 = vmax.f32 %v2581, %v2582
      %v2584 = vrot.slane %v2583, 2
      %v2585 = vmax.f32 %v2583, %v2584
      %v2586 = vrot.slane %v2585, 1
      %v2587 = vmax.f32 %v2585, %v2586
      %v2588 = vsel %vm2328, %v2160, -inf
      %v2589 = vrot.slane %v2588, 4
      %v2590 = vmax.f32 %v2588, %v2589
      %v2591 = vrot.slane %v2590, 2
      %v2592 = vmax.f32 %v2590, %v2591
      %v2593 = vrot.slane %v2592, 1
      %v2594 = vmax.f32 %v2592, %v2593
      %v2595 = vsel %vm2328, %v2159, -inf
      %v2596 = vrot.slane %v2595, 4
      %v2597 = vmax.f32 %v2595, %v2596
      %v2598 = vrot.slane %v2597, 2
      %v2599 = vmax.f32 %v2597, %v2598
      %v2600 = vrot.slane %v2599, 1
      %v2601 = vmax.f32 %v2599, %v2600
      %v2602 = vsel %vm2328, %v2161, -inf
      %v2603 = vrot.slane %v2602, 4
      %v2604 = vmax.f32 %v2602, %v2603
      %v2605 = vrot.slane %v2604, 2
      %v2606 = vmax.f32 %v2604, %v2605
      %v2607 = vrot.slane %v2606, 1
      %v2608 = vmax.f32 %v2606, %v2607
      %v2609 = vsel %vm2328, %v2169, -inf
      %v2610 = vrot.slane %v2609, 4
      %v2611 = vmax.f32 %v2609, %v2610
      %v2612 = vrot.slane %v2611, 2
      %v2613 = vmax.f32 %v2611, %v2612
      %v2614 = vrot.slane %v2613, 1
      %v2615 = vmax.f32 %v2613, %v2614
      %v2616 = vsel %vm2328, %v2177, -inf
      %v2617 = vrot.slane %v2616, 4
      %v2618 = vmax.f32 %v2616, %v2617
      %v2619 = vrot.slane %v2618, 2
      %v2620 = vmax.f32 %v2618, %v2619
      %v2621 = vrot.slane %v2620, 1
      %v2622 = vmax.f32 %v2620, %v2621
      %v2623 = vsel %vm2328, %v2176, -inf
      %v2624 = vrot.slane %v2623, 4
      %v2625 = vmax.f32 %v2623, %v2624
      %v2626 = vrot.slane %v2625, 2
      %v2627 = vmax.f32 %v2625, %v2626
      %v2628 = vrot.slane %v2627, 1
      %v2629 = vmax.f32 %v2627, %v2628
      %v2630 = vsel %vm2328, %v2178, -inf
      %v2631 = vrot.slane %v2630, 4
      %v2632 = vmax.f32 %v2630, %v2631
      %v2633 = vrot.slane %v2632, 2
      %v2634 = vmax.f32 %v2632, %v2633
      %v2635 = vrot.slane %v2634, 1
      %v2636 = vmax.f32 %v2634, %v2635
      %v2637 = vsel %vm2328, %v2186, -inf
      %v2638 = vrot.slane %v2637, 4
      %v2639 = vmax.f32 %v2637, %v2638
      %v2640 = vrot.slane %v2639, 2
      %v2641 = vmax.f32 %v2639, %v2640
      %v2642 = vrot.slane %v2641, 1
      %v2643 = vmax.f32 %v2641, %v2642
      %v2644 = vsel %vm2328, %v2194, -inf
      %v2645 = vrot.slane %v2644, 4
      %v2646 = vmax.f32 %v2644, %v2645
      %v2647 = vrot.slane %v2646, 2
      %v2648 = vmax.f32 %v2646, %v2647
      %v2649 = vrot.slane %v2648, 1
      %v2650 = vmax.f32 %v2648, %v2649
      %v2651 = vsel %vm2328, %v2193, -inf
      %v2652 = vrot.slane %v2651, 4
      %v2653 = vmax.f32 %v2651, %v2652
      %v2654 = vrot.slane %v2653, 2
      %v2655 = vmax.f32 %v2653, %v2654
      %v2656 = vrot.slane %v2655, 1
      %v2657 = vmax.f32 %v2655, %v2656
      %v2658 = vsel %vm2328, %v2195, -inf
      %v2659 = vrot.slane %v2658, 4
      %v2660 = vmax.f32 %v2658, %v2659
      %v2661 = vrot.slane %v2660, 2
      %v2662 = vmax.f32 %v2660, %v2661
      %v2663 = vrot.slane %v2662, 1
      %v2664 = vmax.f32 %v2662, %v2663
      %v2665 = vsel %vm2328, %v2203, -inf
      %v2666 = vrot.slane %v2665, 4
      %v2667 = vmax.f32 %v2665, %v2666
      %v2668 = vrot.slane %v2667, 2
      %v2669 = vmax.f32 %v2667, %v2668
      %v2670 = vrot.slane %v2669, 1
      %v2671 = vmax.f32 %v2669, %v2670
      %v2672 = vsel %vm2328, %v2211, -inf
      %v2673 = vrot.slane %v2672, 4
      %v2674 = vmax.f32 %v2672, %v2673
      %v2675 = vrot.slane %v2674, 2
      %v2676 = vmax.f32 %v2674, %v2675
      %v2677 = vrot.slane %v2676, 1
      %v2678 = vmax.f32 %v2676, %v2677
      %v2679 = vsel %vm2328, %v2210, -inf
      %v2680 = vrot.slane %v2679, 4
      %v2681 = vmax.f32 %v2679, %v2680
      %v2682 = vrot.slane %v2681, 2
      %v2683 = vmax.f32 %v2681, %v2682
      %v2684 = vrot.slane %v2683, 1
      %v2685 = vmax.f32 %v2683, %v2684
      %v2686 = vsel %vm2328, %v2212, -inf
      %v2687 = vrot.slane %v2686, 4
      %v2688 = vmax.f32 %v2686, %v2687
      %v2689 = vrot.slane %v2688, 2
      %v2690 = vmax.f32 %v2688, %v2689
      %v2691 = vrot.slane %v2690, 1
      %v2692 = vmax.f32 %v2690, %v2691
      %v2693 = vsel %vm2328, %v2220, -inf
      %v2694 = vrot.slane %v2693, 4
      %v2695 = vmax.f32 %v2693, %v2694
      %v2696 = vrot.slane %v2695, 2
      %v2697 = vmax.f32 %v2695, %v2696
      %v2698 = vrot.slane %v2697, 1
      %v2699 = vmax.f32 %v2697, %v2698
      %v2700 = vsel %vm2328, %v2228, -inf
      %v2701 = vrot.slane %v2700, 4
      %v2702 = vmax.f32 %v2700, %v2701
      %v2703 = vrot.slane %v2702, 2
      %v2704 = vmax.f32 %v2702, %v2703
      %v2705 = vrot.slane %v2704, 1
      %v2706 = vmax.f32 %v2704, %v2705
      %v2707 = vsel %vm2328, %v2227, -inf
      %v2708 = vrot.slane %v2707, 4
      %v2709 = vmax.f32 %v2707, %v2708
      %v2710 = vrot.slane %v2709, 2
      %v2711 = vmax.f32 %v2709, %v2710
      %v2712 = vrot.slane %v2711, 1
      %v2713 = vmax.f32 %v2711, %v2712
      %v2714 = vsel %vm2328, %v2229, -inf
      %v2715 = vrot.slane %v2714, 4
      %v2716 = vmax.f32 %v2714, %v2715
      %v2717 = vrot.slane %v2716, 2
      %v2718 = vmax.f32 %v2716, %v2717
      %v2719 = vrot.slane %v2718, 1
      %v2720 = vmax.f32 %v2718, %v2719
      %v2721 = vsel %vm2328, %v2237, -inf
      %v2722 = vrot.slane %v2721, 4
      %v2723 = vmax.f32 %v2721, %v2722
      %v2724 = vrot.slane %v2723, 2
      %v2725 = vmax.f32 %v2723, %v2724
      %v2726 = vrot.slane %v2725, 1
      %v2727 = vmax.f32 %v2725, %v2726
      %v2728 = vsel %vm2328, %v2245, -inf
      %v2729 = vrot.slane %v2728, 4
      %v2730 = vmax.f32 %v2728, %v2729
      %v2731 = vrot.slane %v2730, 2
      %v2732 = vmax.f32 %v2730, %v2731
      %v2733 = vrot.slane %v2732, 1
      %v2734 = vmax.f32 %v2732, %v2733
      %v2735 = vsel %vm2328, %v2244, -inf
      %v2736 = vrot.slane %v2735, 4
      %v2737 = vmax.f32 %v2735, %v2736
      %v2738 = vrot.slane %v2737, 2
      %v2739 = vmax.f32 %v2737, %v2738
      %v2740 = vrot.slane %v2739, 1
      %v2741 = vmax.f32 %v2739, %v2740
      %v2742 = vsel %vm2328, %v2246, -inf
      %v2743 = vrot.slane %v2742, 4
      %v2744 = vmax.f32 %v2742, %v2743
      %v2745 = vrot.slane %v2744, 2
      %v2746 = vmax.f32 %v2744, %v2745
      %v2747 = vrot.slane %v2746, 1
      %v2748 = vmax.f32 %v2746, %v2747
      %v2749 = vsel %vm2328, %v2254, -inf
      %v2750 = vrot.slane %v2749, 4
      %v2751 = vmax.f32 %v2749, %v2750
      %v2752 = vrot.slane %v2751, 2
      %v2753 = vmax.f32 %v2751, %v2752
      %v2754 = vrot.slane %v2753, 1
      %v2755 = vmax.f32 %v2753, %v2754
      %v2756 = vsel %vm2328, %v2262, -inf
      %v2757 = vrot.slane %v2756, 4
      %v2758 = vmax.f32 %v2756, %v2757
      %v2759 = vrot.slane %v2758, 2
      %v2760 = vmax.f32 %v2758, %v2759
      %v2761 = vrot.slane %v2760, 1
      %v2762 = vmax.f32 %v2760, %v2761
      %v2763 = vsel %vm2328, %v2261, -inf
      %v2764 = vrot.slane %v2763, 4
      %v2765 = vmax.f32 %v2763, %v2764
      %v2766 = vrot.slane %v2765, 2
      %v2767 = vmax.f32 %v2765, %v2766
      %v2768 = vrot.slane %v2767, 1
      %v2769 = vmax.f32 %v2767, %v2768
      %v2770 = vsel %vm2328, %v2263, -inf
      %v2771 = vrot.slane %v2770, 4
      %v2772 = vmax.f32 %v2770, %v2771
      %v2773 = vrot.slane %v2772, 2
      %v2774 = vmax.f32 %v2772, %v2773
      %v2775 = vrot.slane %v2774, 1
      %v2776 = vmax.f32 %v2774, %v2775
      %vm2841 = vcmask 1041409
      %v2842 = vsel %vm2841, %v2342, %v2335
      %vm2843 = vcmask 1042434
      %v2844 = vsel %vm2843, %v2349, %v2842
      %vm2845 = vcmask 1043459
      %v2846 = vsel %vm2845, %v2356, %v2844
      %vm2847 = vcmask 1044484
      %v2848 = vsel %vm2847, %v2363, %v2846
      %vm2849 = vcmask 1045509
      %v2850 = vsel %vm2849, %v2370, %v2848
      %vm2851 = vcmask 1046534
      %v2852 = vsel %vm2851, %v2377, %v2850
      %vm2853 = vcmask 1047559
      %v2854 = vsel %vm2853, %v2384, %v2852
      %v2855 = vsel %vm2841, %v2398, %v2391
      %v2856 = vsel %vm2843, %v2405, %v2855
      %v2857 = vsel %vm2845, %v2412, %v2856
      %v2858 = vsel %vm2847, %v2419, %v2857
      %v2859 = vsel %vm2849, %v2426, %v2858
      %v2860 = vsel %vm2851, %v2433, %v2859
      %v2861 = vsel %vm2853, %v2440, %v2860
      %v2862 = vsel %vm2841, %v2454, %v2447
      %v2863 = vsel %vm2843, %v2461, %v2862
      %v2864 = vsel %vm2845, %v2468, %v2863
      %v2865 = vsel %vm2847, %v2475, %v2864
      %v2866 = vsel %vm2849, %v2482, %v2865
      %v2867 = vsel %vm2851, %v2489, %v2866
      %v2868 = vsel %vm2853, %v2496, %v2867
      %v2869 = vsel %vm2841, %v2510, %v2503
      %v2870 = vsel %vm2843, %v2517, %v2869
      %v2871 = vsel %vm2845, %v2524, %v2870
      %v2872 = vsel %vm2847, %v2531, %v2871
      %v2873 = vsel %vm2849, %v2538, %v2872
      %v2874 = vsel %vm2851, %v2545, %v2873
      %v2875 = vsel %vm2853, %v2552, %v2874
      %v2876 = vsel %vm2841, %v2566, %v2559
      %v2877 = vsel %vm2843, %v2573, %v2876
      %v2878 = vsel %vm2845, %v2580, %v2877
      %v2879 = vsel %vm2847, %v2587, %v2878
      %v2880 = vsel %vm2849, %v2594, %v2879
      %v2881 = vsel %vm2851, %v2601, %v2880
      %v2882 = vsel %vm2853, %v2608, %v2881
      %v2883 = vsel %vm2841, %v2622, %v2615
      %v2884 = vsel %vm2843, %v2629, %v2883
      %v2885 = vsel %vm2845, %v2636, %v2884
      %v2886 = vsel %vm2847, %v2643, %v2885
      %v2887 = vsel %vm2849, %v2650, %v2886
      %v2888 = vsel %vm2851, %v2657, %v2887
      %v2889 = vsel %vm2853, %v2664, %v2888
      %v2890 = vsel %vm2841, %v2678, %v2671
      %v2891 = vsel %vm2843, %v2685, %v2890
      %v2892 = vsel %vm2845, %v2692, %v2891
      %v2893 = vsel %vm2847, %v2699, %v2892
      %v2894 = vsel %vm2849, %v2706, %v2893
      %v2895 = vsel %vm2851, %v2713, %v2894
      %v2896 = vsel %vm2853, %v2720, %v2895
      %v2897 = vsel %vm2841, %v2734, %v2727
      %v2898 = vsel %vm2843, %v2741, %v2897
      %v2899 = vsel %vm2845, %v2748, %v2898
      %v2900 = vsel %vm2847, %v2755, %v2899
      %v2901 = vsel %vm2849, %v2762, %v2900
      %v2902 = vsel %vm2851, %v2769, %v2901
      %v2903 = vsel %vm2853, %v2776, %v2902
      %s2912 = scalar_lea.vmem %s170, 16
      %2913 = vst.msk [vmem:[%s2912 + $0x1] sm:$0xff] %vm225, %v2854
      %2914 = vst.msk [vmem:[%s2912 + $0x11] sm:$0xff] %vm225, %v2861
      %2915 = vst.msk [vmem:[%s2912 + $0x21] sm:$0xff] %vm225, %v2868
      %2916 = vst.msk [vmem:[%s2912 + $0x31] sm:$0xff] %vm225, %v2875
      %2917 = vst.msk [vmem:[%s2912 + $0x41] sm:$0xff] %vm225, %v2882
      %2918 = vst.msk [vmem:[%s2912 + $0x51] sm:$0xff] %vm225, %v2889
      %2919 = vst.msk [vmem:[%s2912 + $0x61] sm:$0xff] %vm225, %v2896
      %2920 = vst.msk [vmem:[%s2912 + $0x71] sm:$0xff] %vm225, %v2903
      %2921 = vst.msk [vmem:[%s170 + $0x1] sm:$0xff] %vm225, %v2861
      %s2922 = scalar_lea.vmem %s170, 144
      %2923 = vst.msk [vmem:[%s2922 + $0x1] sm:$0xff] %vm225, %v2896
      %v2924 = vld [vmem:[%s170 + $0x2] sm:$0x1]
      %v2925 = vld [vmem:[%s170 + $0x12] sm:$0x1]
      %v2926 = vld [vmem:[%s170 + $0x22] sm:$0x1]
      %v2927 = vld [vmem:[%s170 + $0x32] sm:$0x1]
      %v2928 = vld [vmem:[%s170 + $0x42] sm:$0x1]
      %v2929 = vld [vmem:[%s170 + $0x52] sm:$0x1]
      %v2930 = vld [vmem:[%s170 + $0x62] sm:$0x1]
      %v2931 = vld [vmem:[%s170 + $0x72] sm:$0x1]
      %v2932 = vld [vmem:[%s170 + $0x82] sm:$0x1]
      %v2933 = vld [vmem:[%s170 + $0x92] sm:$0x1]
      %vm2934 = vcmask 24576
      %2935 = vst.msk [vmem:[%s170] sm:$0x1] %vm2934, %v2924
      %2936 = vst.msk [vmem:[%s170 + $0x10] sm:$0x1] %vm2934, %v2925
      %2937 = vst.msk [vmem:[%s170 + $0x20] sm:$0x1] %vm2934, %v2926
      %2938 = vst.msk [vmem:[%s170 + $0x30] sm:$0x1] %vm2934, %v2927
      %2939 = vst.msk [vmem:[%s170 + $0x40] sm:$0x1] %vm2934, %v2928
      %2940 = vst.msk [vmem:[%s170 + $0x50] sm:$0x1] %vm2934, %v2929
      %2941 = vst.msk [vmem:[%s170 + $0x60] sm:$0x1] %vm2934, %v2930
      %2942 = vst.msk [vmem:[%s170 + $0x70] sm:$0x1] %vm2934, %v2931
      %2943 = vst.msk [vmem:[%s170 + $0x80] sm:$0x1] %vm2934, %v2932
      %2944 = vst.msk [vmem:[%s170 + $0x90] sm:$0x1] %vm2934, %v2933
      %v2945 = vld [vmem:[%s170 + $0x7] sm:$0x1]
      %v2946 = vld [vmem:[%s170 + $0x17] sm:$0x1]
      %v2947 = vld [vmem:[%s170 + $0x27] sm:$0x1]
      %v2948 = vld [vmem:[%s170 + $0x37] sm:$0x1]
      %v2949 = vld [vmem:[%s170 + $0x47] sm:$0x1]
      %v2950 = vld [vmem:[%s170 + $0x57] sm:$0x1]
      %v2951 = vld [vmem:[%s170 + $0x67] sm:$0x1]
      %v2952 = vld [vmem:[%s170 + $0x77] sm:$0x1]
      %v2953 = vld [vmem:[%s170 + $0x87] sm:$0x1]
      %v2954 = vld [vmem:[%s170 + $0x97] sm:$0x1]
      %2955 = vst.msk [vmem:[%s170 + $0x9] sm:$0x1] %vm2934, %v2945
      %2956 = vst.msk [vmem:[%s170 + $0x19] sm:$0x1] %vm2934, %v2946
      %2957 = vst.msk [vmem:[%s170 + $0x29] sm:$0x1] %vm2934, %v2947
      %2958 = vst.msk [vmem:[%s170 + $0x39] sm:$0x1] %vm2934, %v2948
      %2959 = vst.msk [vmem:[%s170 + $0x49] sm:$0x1] %vm2934, %v2949
      %2960 = vst.msk [vmem:[%s170 + $0x59] sm:$0x1] %vm2934, %v2950
      %2961 = vst.msk [vmem:[%s170 + $0x69] sm:$0x1] %vm2934, %v2951
      %2962 = vst.msk [vmem:[%s170 + $0x79] sm:$0x1] %vm2934, %v2952
      %2963 = vst.msk [vmem:[%s170 + $0x89] sm:$0x1] %vm2934, %v2953
      %2964 = vst.msk [vmem:[%s170 + $0x99] sm:$0x1] %vm2934, %v2954
      %p2965 = scmp.lt.s32.totalorder %s14, 1
      %s2966 = scalar_select %p2965, %s14, 1
      %s2967 = smul.addr %s2966, 20
      %s2968 = smul.addr %s2967, 8
      %s2969 = scalar_lea.vmem %s3, %s2968
      // Predicated region
      $region33: #{_lambda_.5} parent=31 // pred_check
        %p2970 = pneg %p100
      $region34: #{_lambda_.5} parent=31 // pred_check_branch
        %2972 = sbr.rel (%p2970) target = $region36
      $region35: #{_lambda_.5} parent=31 // pred_region
        _
      $region36: #{_lambda_.5} parent=31 // pred_fallthru
        _
    $region32: #{_lambda_.5} parent=5 // pred_fallthru
      _
    %p2973 = scmp.le.s32.totalorder 2, %s9
    // Predicated region
    $region37: #{_lambda_.5} parent=5 // pred_check
      %p2974 = pneg %p2973
    $region38: #{_lambda_.5} parent=5 // pred_check_branch
      %2976 = sbr.rel (%p2974) target = $region40
    $region39: #{_lambda_.5} parent=5 // pred_region
      %s2977 = ssub.s32 %s9, 2
      // Predicated region
      $region41: #{_lambda_.5} parent=39 // pred_check
        %p2978 = pneg %p106
      $region42: #{_lambda_.5} parent=39 // pred_check_branch
        %2980 = sbr.rel (%p2978) target = $region44
      $region43: #{_lambda_.5} parent=39 // pred_region
        %p2981 = scmp.lt.s32.totalorder %s15, 1
        %s2982 = scalar_select %p2981, %s15, 1
        %s2983 = smul.addr %s2982, 20
        %s2984 = smul.addr %s2983, 8
        %s2985 = scalar_lea.vmem %s3, %s2984
      $region44: #{_lambda_.5} parent=39 // pred_fallthru
        _
    $region40: #{_lambda_.5} parent=5 // pred_fallthru
      _
  $region6: #{_lambda_.5} parent=0 // loop_footer
    %s13 = sadd.s32 1, %s9
  $region7: #{_lambda_.5} parent=0 // loop_footer_branch
    %8 = sbr.rel target = $region3
  $region8: #{_lambda_.5} parent=0 // loop_exit
    _

</llo_original>
